<compile_context>
chip_gen: v7x
topology: tpu7x:2x2x1
jax: 0.10.0
libtpu: 0.0.40
codegen_flags: <defaults>
</compile_context>

<pallas_src>
import functools

import jax
import jax.numpy as jnp
from jax.experimental import pallas as pl
from jax.experimental.pallas import tpu as pltpu

_COORD_IDX = {"xy": (0, 1), "xz": (0, 2), "yz": (1, 2)}


def _round_up(x, m):
    return ((x + m - 1) // m) * m


def _vmem_capacity_bytes():
    try:
        info = pltpu.get_tpu_info()
        cap = getattr(info, "vmem_capacity_bytes", None)
        if cap:
            return int(cap)
    except Exception:
        pass
    return 64 * 1024 * 1024   # conservative (v7x-sized) fallback


def _vmem_bytes(P, C, H, W, tile_n, plane_bufs, plane_elem_bytes):
    """Rough per-kernel VMEM footprint model (bytes)."""
    f32 = 4
    w_pad = max(_round_up(W, 128), 128)                    # lane padding of the plane tile
    coords = 2 * P * 8 * tile_n * f32                      # double-buffered coord blocks
    outbuf = 2 * P * C * tile_n * f32                      # double-buffered output blocks
    planes = plane_bufs * P * C * H * w_pad * plane_elem_bytes
    stage1 = 3 * C * H * tile_n * f32                      # matmul result + weighted temp
    weights = 6 * (H + W) * tile_n * f32                   # iotas, wx, wy, fx/fy temps
    results = P * C * tile_n * f32
    return coords + outbuf + planes + stage1 + weights + results


def _sampler_kernel(coord_ref, plane_ref, out_ref, *, H, W, C, P, TILE_N, padding):
    # coord_ref: (1, P, 2, TILE_N)  row 0 = width coord (x), row 1 = height coord (y)
    # plane_ref: (1, P, C*H, W)     all planes of one batch, rows ordered (c, h), cols = w
    # out_ref:   (1, P*C, TILE_N)
    w_iota = jax.lax.broadcasted_iota(jnp.int32, (W, TILE_N), 0)
    h_iota = jax.lax.broadcasted_iota(jnp.int32, (H, TILE_N), 0)

    def normalize(u):
        # normalize_coordinate: map to (0, 1), clamp outliers like the torch reference.
        u = u / (1.0 + padding + 1e-5) + 0.5
        u = jnp.where(u >= 1.0, 1.0 - 1e-5, u)
        u = jnp.where(u < 0.0, 0.0, u)
        return u

    for pi in range(P):                                    # static unroll (P == 3)
        coords = coord_ref[0, pi]                          # (2, TILE_N) f32
        # grid_sample(align_corners=True): pixel coord = xy * (size - 1); border clamp.
        ix = jnp.clip(normalize(coords[0:1, :]) * (W - 1), 0.0, float(W - 1))
        iy = jnp.clip(normalize(coords[1:2, :]) * (H - 1), 0.0, float(H - 1))

        x0 = jnp.floor(ix)
        y0 = jnp.floor(iy)
        fx = ix - x0                                       # (1, TILE_N)
        fy = iy - y0
        x0i = x0.astype(jnp.int32)
        y0i = y0.astype(jnp.int32)
        x1i = jnp.minimum(x0i + 1, W - 1)                  # padding_mode='border'
        y1i = jnp.minimum(y0i + 1, H - 1)

        # Separable 1-D interpolation weights (no div/mod, no dense (H*W, N) matrix).
        wx = (jnp.where(w_iota == x0i, 1.0 - fx, 0.0)
              + jnp.where(w_iota == x1i, fx, 0.0))         # (W, TILE_N)
        wy = (jnp.where(h_iota == y0i, 1.0 - fy, 0.0)
              + jnp.where(h_iota == y1i, fy, 0.0))         # (H, TILE_N)

        plane = plane_ref[0, pi]                           # (C*H, W)
        # Stage 1 (MXU): contract over W; streamed dim = C*H keeps the array busy.
        a = jnp.dot(plane, wx.astype(plane.dtype),
                    preferred_element_type=jnp.float32)    # (C*H, TILE_N) f32
        # Stage 2 (VPU): weight by wy and reduce over H.
        res = jnp.sum(a.reshape(C, H, TILE_N) * wy[None, :, :], axis=1)   # (C, TILE_N)
        out_ref[0, pi * C:(pi + 1) * C, :] = res.astype(out_ref.dtype)


def bilinear_sampler(p, c_plane, *, plane_type=("xy", "xz", "yz"), padding=0.0,
                     concat_feat=True, tile_n=512, use_bf16_planes=False):
    """p: (B, N, 3) float; c_plane: dict plane -> (B, C, H, W).  Returns (B, N, 3*C)."""
    p = p.astype(jnp.float32)
    B, N, _ = p.shape
    P = len(plane_type)

    shapes = {c_plane[pt].shape for pt in plane_type}
    assert len(shapes) == 1, f"all planes must share (B, C, H, W), got {shapes}"
    _, C, H, W = c_plane[plane_type[0]].shape

    plane_dtype = jnp.bfloat16 if use_bf16_planes else jnp.float32
    peb = jnp.dtype(plane_dtype).itemsize

    # --- VMEM budget / tiling (generation-aware: 64 MiB on v7x, 128 MiB on v5e/v6e) ---
    cap = _vmem_capacity_bytes()
    budget = int(cap * 0.75)
    plane_block_bytes = P * C * H * max(_round_up(W, 128), 128) * peb
    plane_bufs = 1 if 2 * plane_block_bytes > budget // 3 else 2

    TILE_N = max(128, _round_up(min(tile_n, _round_up(N, 128)), 128))
    while TILE_N > 128 and _vmem_bytes(P, C, H, W, TILE_N, plane_bufs, peb) > budget:
        TILE_N -= 128
    N_pad = _round_up(N, TILE_N)
    NT = N_pad // TILE_N

    est = _vmem_bytes(P, C, H, W, TILE_N, plane_bufs, peb)
    vmem_limit = int(min(max(32 * 1024 * 1024, int(1.3 * est)), cap - 8 * 1024 * 1024))
    vmem_limit = max(vmem_limit, 16 * 1024 * 1024)

    # --- glue: coords (B, P, 2, N_pad); planes native NCHW -> (B, P, C*H, W) ---
    coords = jnp.stack(
        [jnp.transpose(p[:, :, list(_COORD_IDX[pt])], (0, 2, 1)) for pt in plane_type],
        axis=1,
    )                                                      # (B, P, 2, N)
    coords = jnp.pad(coords, ((0, 0), (0, 0), (0, 0), (0, N_pad - N)))

    planes = jnp.stack(
        [c_plane[pt].astype(plane_dtype).reshape(B, C * H, W) for pt in plane_type],
        axis=1,
    )                                                      # (B, P, C*H, W)

    kernel = functools.partial(_sampler_kernel, H=H, W=W, C=C, P=P,
                               TILE_N=TILE_N, padding=padding)

    plane_idx = lambda b, nt: (b, 0, 0, 0)                 # resident across N tiles
    plane_spec = pl.BlockSpec((1, P, C * H, W), plane_idx)
    if plane_bufs == 1:
        try:  # single-buffer the resident plane block when VMEM is tight (v7x)
            plane_spec = pl.BlockSpec((1, P, C * H, W), plane_idx,
                                      pipeline_mode=pl.Buffered(1))
        except Exception:
            plane_spec = pl.BlockSpec((1, P, C * H, W), plane_idx)

    flops = 2 * P * B * N_pad * C * H * W
    bytes_accessed = coords.size * 4 + planes.size * peb + B * P * C * N_pad * 4

    out = pl.pallas_call(
        kernel,
        out_shape=jax.ShapeDtypeStruct((B, P * C, N_pad), jnp.float32),
        grid_spec=pltpu.PrefetchScalarGridSpec(
            num_scalar_prefetch=0,
            grid=(B, NT),
            in_specs=[
                pl.BlockSpec((1, P, 2, TILE_N), lambda b, nt: (b, 0, 0, nt)),
                plane_spec,
            ],
            out_specs=pl.BlockSpec((1, P * C, TILE_N), lambda b, nt: (b, 0, nt)),
        ),
        compiler_params=pltpu.CompilerParams(
            dimension_semantics=("parallel", "parallel"),
            vmem_limit_bytes=vmem_limit,
        ),
        cost_estimate=pl.CostEstimate(flops=flops, transcendentals=0,
                                      bytes_accessed=bytes_accessed),
    )(coords, planes)                                      # (B, P*C, N_pad)

    out = out[:, :, :N]                                    # drop N padding
    if concat_feat:
        return jnp.transpose(out, (0, 2, 1))               # (B, N, P*C), plane-major chans
    return jnp.transpose(out.reshape(B, P, C, N).sum(axis=1), (0, 2, 1))   # (B, N, C)


# ---------------- pure-JAX reference (gather-based, for a sanity check) ----------------
def _ref_sample_plane(p, c, plane, padding):
    xy = p[:, :, list(_COORD_IDX[plane])]
    xy = xy / (1.0 + padding + 1e-5) + 0.5
    xy = jnp.where(xy >= 1.0, 1.0 - 1e-5, xy)
    xy = jnp.where(xy < 0.0, 0.0, xy)
    B, C, H, W = c.shape
    ix = jnp.clip(xy[..., 0] * (W - 1), 0.0, W - 1.0)
    iy = jnp.clip(xy[..., 1] * (H - 1), 0.0, H - 1.0)
    x0 = jnp.floor(ix).astype(jnp.int32)
    y0 = jnp.floor(iy).astype(jnp.int32)
    x1 = jnp.minimum(x0 + 1, W - 1)
    y1 = jnp.minimum(y0 + 1, H - 1)
    fx = (ix - x0)[:, None, :]
    fy = (iy - y0)[:, None, :]
    gather = jax.vmap(lambda cb, yb, xb: cb[:, yb, xb])
    v00 = gather(c, y0, x0)
    v01 = gather(c, y0, x1)
    v10 = gather(c, y1, x0)
    v11 = gather(c, y1, x1)
    return (v00 * (1 - fx) * (1 - fy) + v01 * fx * (1 - fy)
            + v10 * (1 - fx) * fy + v11 * fx * fy)          # (B, C, N)


def _ref_forward(p, c_plane, plane_type=("xy", "xz", "yz"), padding=0.0):
    feats = [_ref_sample_plane(p, c_plane[pt], pt, padding) for pt in plane_type]
    return jnp.transpose(jnp.concatenate(feats, axis=1), (0, 2, 1))   # (B, N, 3C)


if __name__ == "__main__":
    key = jax.random.PRNGKey(0)

    # --- check 1: small shapes, single N tile ---
    B, N, C, H, W = 2, 8, 32, 16, 16
    k_p, k_xy, k_xz, k_yz, k2 = jax.random.split(key, 5)
    p = jax.random.uniform(k_p, (B, N, 3), minval=-0.55, maxval=0.55, dtype=jnp.float32)
    c_plane = {
        "xy": jax.random.normal(k_xy, (B, C, H, W), dtype=jnp.float32),
        "xz": jax.random.normal(k_xz, (B, C, H, W), dtype=jnp.float32),
        "yz": jax.random.normal(k_yz, (B, C, H, W), dtype=jnp.float32),
    }
    out = jax.block_until_ready(bilinear_sampler(p, c_plane, padding=0.0))
    ref = _ref_forward(p, c_plane, padding=0.0)
    assert out.shape == (B, N, 3 * C), out.shape
    assert jnp.allclose(out, ref, atol=1e-4, rtol=1e-4), float(jnp.abs(out - ref).max())

    # --- check 2: non-multiple N (padding path), multiple N tiles, nonzero padding ---
    B2, N2, C2, H2, W2 = 1, 200, 8, 32, 32
    kb = jax.random.split(k2, 4)
    p2 = jax.random.uniform(kb[0], (B2, N2, 3), minval=-0.6, maxval=0.6, dtype=jnp.float32)
    c_plane2 = {
        "xy": jax.random.normal(kb[1], (B2, C2, H2, W2), dtype=jnp.float32),
        "xz": jax.random.normal(kb[2], (B2, C2, H2, W2), dtype=jnp.float32),
        "yz": jax.random.normal(kb[3], (B2, C2, H2, W2), dtype=jnp.float32),
    }
    out2 = jax.block_until_ready(bilinear_sampler(p2, c_plane2, padding=0.1, tile_n=128))
    ref2 = _ref_forward(p2, c_plane2, padding=0.1)
    assert out2.shape == (B2, N2, 3 * C2), out2.shape
    assert jnp.allclose(out2, ref2, atol=1e-4, rtol=1e-4), float(jnp.abs(out2 - ref2).max())

    print("KERNEL_OK")
</pallas_src>

<mosaic_0001>
module attributes {stable_mosaic.version = 11 : i64} {
  func.func @_sampler_kernel(%arg0: i32, %arg1: i32, %arg2: memref<1x3x2x128xf32, #tpu.memory_space<vmem>>, %arg3: memref<1x3x512x16xf32, #tpu.memory_space<vmem>>, %arg4: memref<1x96x128xf32, #tpu.memory_space<vmem>>) attributes {dimension_semantics = [#tpu.dimension_semantics<parallel>, #tpu.dimension_semantics<parallel>], iteration_bounds = array<i64: 2, 1>, scalar_prefetch = 0 : i64, scratch_operands = 0 : i64, tpu.core_type = #tpu.core_type<tc>, window_params = [{transform_indices = @transform_0, window_bounds = array<i64: 1, 3, 2, 128>}, {transform_indices = @transform_1, window_bounds = array<i64: 1, 3, 512, 16>}, {transform_indices = @transform_2, window_bounds = array<i64: 1, 96, 128>}]} {
    %0 = tpu.iota {dimensions = array<i32: 0>} : vector<16x128xi32>
    %1 = tpu.iota {dimensions = array<i32: 0>} : vector<16x128xi32>
    %c0 = arith.constant 0 : index
    %c0_0 = arith.constant 0 : index
    %c0_1 = arith.constant 0 : index
    %c0_2 = arith.constant 0 : index
    %2 = vector.load %arg2[%c0, %c0_0, %c0_1, %c0_2] : memref<1x3x2x128xf32, #tpu.memory_space<vmem>>, vector<1x1x2x128xf32>
    %3 = vector.shape_cast %2 : vector<1x1x2x128xf32> to vector<2x128xf32>
    %4 = vector.extract_strided_slice %3 {offsets = [0, 0], sizes = [1, 128], strides = [1, 1]} : vector<2x128xf32> to vector<1x128xf32>
    %cst = arith.constant 1.000010e+00 : f32
    %5 = vector.broadcast %cst : f32 to vector<1x128xf32>
    %6 = arith.divf %4, %5 : vector<1x128xf32>
    %cst_3 = arith.constant 5.000000e-01 : f32
    %7 = vector.broadcast %cst_3 : f32 to vector<1x128xf32>
    %8 = arith.addf %6, %7 : vector<1x128xf32>
    %cst_4 = arith.constant 1.000000e+00 : f32
    %9 = vector.broadcast %cst_4 : f32 to vector<1x128xf32>
    %10 = arith.cmpf oge, %8, %9 : vector<1x128xf32>
    %cst_5 = arith.constant 0.999989986 : f32
    %11 = vector.broadcast %cst_5 : f32 to vector<1x128xf32>
    %12 = arith.select %10, %11, %8 : vector<1x128xi1>, vector<1x128xf32>
    %cst_6 = arith.constant 0.000000e+00 : f32
    %13 = vector.broadcast %cst_6 : f32 to vector<1x128xf32>
    %14 = arith.cmpf olt, %12, %13 : vector<1x128xf32>
    %cst_7 = arith.constant 0.000000e+00 : f32
    %15 = vector.broadcast %cst_7 : f32 to vector<1x128xf32>
    %16 = arith.select %14, %15, %12 : vector<1x128xi1>, vector<1x128xf32>
    %cst_8 = arith.constant 1.500000e+01 : f32
    %17 = vector.broadcast %cst_8 : f32 to vector<1x128xf32>
    %18 = arith.mulf %16, %17 : vector<1x128xf32>
    %cst_9 = arith.constant 0.000000e+00 : f32
    %cst_10 = arith.constant 1.500000e+01 : f32
    %19 = vector.broadcast %cst_9 : f32 to vector<1x128xf32>
    %20 = arith.maximumf %19, %18 : vector<1x128xf32>
    %21 = vector.broadcast %cst_10 : f32 to vector<1x128xf32>
    %22 = arith.minimumf %21, %20 : vector<1x128xf32>
    %23 = vector.extract_strided_slice %3 {offsets = [1, 0], sizes = [1, 128], strides = [1, 1]} : vector<2x128xf32> to vector<1x128xf32>
    %cst_11 = arith.constant 1.000010e+00 : f32
    %24 = vector.broadcast %cst_11 : f32 to vector<1x128xf32>
    %25 = arith.divf %23, %24 : vector<1x128xf32>
    %cst_12 = arith.constant 5.000000e-01 : f32
    %26 = vector.broadcast %cst_12 : f32 to vector<1x128xf32>
    %27 = arith.addf %25, %26 : vector<1x128xf32>
    %cst_13 = arith.constant 1.000000e+00 : f32
    %28 = vector.broadcast %cst_13 : f32 to vector<1x128xf32>
    %29 = arith.cmpf oge, %27, %28 : vector<1x128xf32>
    %cst_14 = arith.constant 0.999989986 : f32
    %30 = vector.broadcast %cst_14 : f32 to vector<1x128xf32>
    %31 = arith.select %29, %30, %27 : vector<1x128xi1>, vector<1x128xf32>
    %cst_15 = arith.constant 0.000000e+00 : f32
    %32 = vector.broadcast %cst_15 : f32 to vector<1x128xf32>
    %33 = arith.cmpf olt, %31, %32 : vector<1x128xf32>
    %cst_16 = arith.constant 0.000000e+00 : f32
    %34 = vector.broadcast %cst_16 : f32 to vector<1x128xf32>
    %35 = arith.select %33, %34, %31 : vector<1x128xi1>, vector<1x128xf32>
    %cst_17 = arith.constant 1.500000e+01 : f32
    %36 = vector.broadcast %cst_17 : f32 to vector<1x128xf32>
    %37 = arith.mulf %35, %36 : vector<1x128xf32>
    %cst_18 = arith.constant 0.000000e+00 : f32
    %cst_19 = arith.constant 1.500000e+01 : f32
    %38 = vector.broadcast %cst_18 : f32 to vector<1x128xf32>
    %39 = arith.maximumf %38, %37 : vector<1x128xf32>
    %40 = vector.broadcast %cst_19 : f32 to vector<1x128xf32>
    %41 = arith.minimumf %40, %39 : vector<1x128xf32>
    %42 = math.floor %22 : vector<1x128xf32>
    %43 = math.floor %41 : vector<1x128xf32>
    %44 = arith.subf %22, %42 : vector<1x128xf32>
    %45 = arith.subf %41, %43 : vector<1x128xf32>
    %46 = arith.fptosi %42 : vector<1x128xf32> to vector<1x128xi32>
    %47 = arith.fptosi %43 : vector<1x128xf32> to vector<1x128xi32>
    %c1_i32 = arith.constant 1 : i32
    %48 = vector.broadcast %c1_i32 : i32 to vector<1x128xi32>
    %49 = arith.addi %46, %48 : vector<1x128xi32>
    %c15_i32 = arith.constant 15 : i32
    %50 = vector.broadcast %c15_i32 : i32 to vector<1x128xi32>
    %51 = arith.minsi %49, %50 : vector<1x128xi32>
    %c1_i32_20 = arith.constant 1 : i32
    %52 = vector.broadcast %c1_i32_20 : i32 to vector<1x128xi32>
    %53 = arith.addi %47, %52 : vector<1x128xi32>
    %c15_i32_21 = arith.constant 15 : i32
    %54 = vector.broadcast %c15_i32_21 : i32 to vector<1x128xi32>
    %55 = arith.minsi %53, %54 : vector<1x128xi32>
    %56 = vector.broadcast %46 : vector<1x128xi32> to vector<16x128xi32>
    %57 = arith.cmpi eq, %0, %56 : vector<16x128xi32>
    %cst_22 = arith.constant 1.000000e+00 : f32
    %58 = vector.broadcast %cst_22 : f32 to vector<1x128xf32>
    %59 = arith.subf %58, %44 : vector<1x128xf32>
    %cst_23 = arith.constant 0.000000e+00 : f32
    %60 = vector.shape_cast %59 : vector<1x128xf32> to vector<1x128xf32>
    %61 = vector.broadcast %60 : vector<1x128xf32> to vector<16x128xf32>
    %62 = vector.broadcast %cst_23 : f32 to vector<16x128xf32>
    %63 = arith.select %57, %61, %62 : vector<16x128xi1>, vector<16x128xf32>
    %64 = vector.broadcast %51 : vector<1x128xi32> to vector<16x128xi32>
    %65 = arith.cmpi eq, %0, %64 : vector<16x128xi32>
    %cst_24 = arith.constant 0.000000e+00 : f32
    %66 = vector.shape_cast %44 : vector<1x128xf32> to vector<1x128xf32>
    %67 = vector.broadcast %66 : vector<1x128xf32> to vector<16x128xf32>
    %68 = vector.broadcast %cst_24 : f32 to vector<16x128xf32>
    %69 = arith.select %65, %67, %68 : vector<16x128xi1>, vector<16x128xf32>
    %70 = arith.addf %63, %69 : vector<16x128xf32>
    %71 = vector.broadcast %47 : vector<1x128xi32> to vector<16x128xi32>
    %72 = arith.cmpi eq, %1, %71 : vector<16x128xi32>
    %cst_25 = arith.constant 1.000000e+00 : f32
    %73 = vector.broadcast %cst_25 : f32 to vector<1x128xf32>
    %74 = arith.subf %73, %45 : vector<1x128xf32>
    %cst_26 = arith.constant 0.000000e+00 : f32
    %75 = vector.shape_cast %74 : vector<1x128xf32> to vector<1x128xf32>
    %76 = vector.broadcast %75 : vector<1x128xf32> to vector<16x128xf32>
    %77 = vector.broadcast %cst_26 : f32 to vector<16x128xf32>
    %78 = arith.select %72, %76, %77 : vector<16x128xi1>, vector<16x128xf32>
    %79 = vector.broadcast %55 : vector<1x128xi32> to vector<16x128xi32>
    %80 = arith.cmpi eq, %1, %79 : vector<16x128xi32>
    %cst_27 = arith.constant 0.000000e+00 : f32
    %81 = vector.shape_cast %45 : vector<1x128xf32> to vector<1x128xf32>
    %82 = vector.broadcast %81 : vector<1x128xf32> to vector<16x128xf32>
    %83 = vector.broadcast %cst_27 : f32 to vector<16x128xf32>
    %84 = arith.select %80, %82, %83 : vector<16x128xi1>, vector<16x128xf32>
    %85 = arith.addf %78, %84 : vector<16x128xf32>
    %c0_28 = arith.constant 0 : index
    %c0_29 = arith.constant 0 : index
    %c0_30 = arith.constant 0 : index
    %c0_31 = arith.constant 0 : index
    %86 = vector.load %arg3[%c0_28, %c0_29, %c0_30, %c0_31] : memref<1x3x512x16xf32, #tpu.memory_space<vmem>>, vector<1x1x512x16xf32>
    %87 = vector.shape_cast %86 : vector<1x1x512x16xf32> to vector<512x16xf32>
    %cst_32 = arith.constant dense<0.000000e+00> : vector<512x128xf32>
    %88 = tpu.matmul %87, %70, %cst_32 {dimension_numbers = #tpu.dot_dimension_numbers<[1], [0], [0], [1], [0, 0, 1, 1], [], []>} : vector<512x16xf32>, vector<16x128xf32>, vector<512x128xf32> -> vector<512x128xf32>
    %89 = vector.shape_cast %88 : vector<512x128xf32> to vector<32x16x128xf32>
    %90 = vector.shape_cast %85 : vector<16x128xf32> to vector<1x16x128xf32>
    %91 = vector.broadcast %90 : vector<1x16x128xf32> to vector<32x16x128xf32>
    %92 = arith.mulf %89, %91 : vector<32x16x128xf32>
    %cst_33 = arith.constant dense<0.000000e+00> : vector<32x128xf32>
    %93 = vector.multi_reduction <add>, %92, %cst_33 [1] : vector<32x16x128xf32> to vector<32x128xf32>
    %c0_34 = arith.constant 0 : index
    %c0_35 = arith.constant 0 : index
    %c0_36 = arith.constant 0 : index
    %94 = vector.load %arg4[%c0_34, %c0_35, %c0_36] : memref<1x96x128xf32, #tpu.memory_space<vmem>>, vector<1x32x128xf32>
    %95 = vector.shape_cast %94 : vector<1x32x128xf32> to vector<32x128xf32>
    %96 = vector.shape_cast %93 : vector<32x128xf32> to vector<1x32x128xf32>
    tpu.vector_store %arg4[%c0_34, %c0_35, %c0_36], %96 {strides = array<i32>} : memref<1x96x128xf32, #tpu.memory_space<vmem>>, vector<1x32x128xf32>,
    %c0_37 = arith.constant 0 : index
    %c1 = arith.constant 1 : index
    %c0_38 = arith.constant 0 : index
    %c0_39 = arith.constant 0 : index
    %97 = vector.load %arg2[%c0_37, %c1, %c0_38, %c0_39] : memref<1x3x2x128xf32, #tpu.memory_space<vmem>>, vector<1x1x2x128xf32>
    %98 = vector.shape_cast %97 : vector<1x1x2x128xf32> to vector<2x128xf32>
    %99 = vector.extract_strided_slice %98 {offsets = [0, 0], sizes = [1, 128], strides = [1, 1]} : vector<2x128xf32> to vector<1x128xf32>
    %cst_40 = arith.constant 1.000010e+00 : f32
    %100 = vector.broadcast %cst_40 : f32 to vector<1x128xf32>
    %101 = arith.divf %99, %100 : vector<1x128xf32>
    %cst_41 = arith.constant 5.000000e-01 : f32
    %102 = vector.broadcast %cst_41 : f32 to vector<1x128xf32>
    %103 = arith.addf %101, %102 : vector<1x128xf32>
    %cst_42 = arith.constant 1.000000e+00 : f32
    %104 = vector.broadcast %cst_42 : f32 to vector<1x128xf32>
    %105 = arith.cmpf oge, %103, %104 : vector<1x128xf32>
    %cst_43 = arith.constant 0.999989986 : f32
    %106 = vector.broadcast %cst_43 : f32 to vector<1x128xf32>
    %107 = arith.select %105, %106, %103 : vector<1x128xi1>, vector<1x128xf32>
    %cst_44 = arith.constant 0.000000e+00 : f32
    %108 = vector.broadcast %cst_44 : f32 to vector<1x128xf32>
    %109 = arith.cmpf olt, %107, %108 : vector<1x128xf32>
    %cst_45 = arith.constant 0.000000e+00 : f32
    %110 = vector.broadcast %cst_45 : f32 to vector<1x128xf32>
    %111 = arith.select %109, %110, %107 : vector<1x128xi1>, vector<1x128xf32>
    %cst_46 = arith.constant 1.500000e+01 : f32
    %112 = vector.broadcast %cst_46 : f32 to vector<1x128xf32>
    %113 = arith.mulf %111, %112 : vector<1x128xf32>
    %cst_47 = arith.constant 0.000000e+00 : f32
    %cst_48 = arith.constant 1.500000e+01 : f32
    %114 = vector.broadcast %cst_47 : f32 to vector<1x128xf32>
    %115 = arith.maximumf %114, %113 : vector<1x128xf32>
    %116 = vector.broadcast %cst_48 : f32 to vector<1x128xf32>
    %117 = arith.minimumf %116, %115 : vector<1x128xf32>
    %118 = vector.extract_strided_slice %98 {offsets = [1, 0], sizes = [1, 128], strides = [1, 1]} : vector<2x128xf32> to vector<1x128xf32>
    %cst_49 = arith.constant 1.000010e+00 : f32
    %119 = vector.broadcast %cst_49 : f32 to vector<1x128xf32>
    %120 = arith.divf %118, %119 : vector<1x128xf32>
    %cst_50 = arith.constant 5.000000e-01 : f32
    %121 = vector.broadcast %cst_50 : f32 to vector<1x128xf32>
    %122 = arith.addf %120, %121 : vector<1x128xf32>
    %cst_51 = arith.constant 1.000000e+00 : f32
    %123 = vector.broadcast %cst_51 : f32 to vector<1x128xf32>
    %124 = arith.cmpf oge, %122, %123 : vector<1x128xf32>
    %cst_52 = arith.constant 0.999989986 : f32
    %125 = vector.broadcast %cst_52 : f32 to vector<1x128xf32>
    %126 = arith.select %124, %125, %122 : vector<1x128xi1>, vector<1x128xf32>
    %cst_53 = arith.constant 0.000000e+00 : f32
    %127 = vector.broadcast %cst_53 : f32 to vector<1x128xf32>
    %128 = arith.cmpf olt, %126, %127 : vector<1x128xf32>
    %cst_54 = arith.constant 0.000000e+00 : f32
    %129 = vector.broadcast %cst_54 : f32 to vector<1x128xf32>
    %130 = arith.select %128, %129, %126 : vector<1x128xi1>, vector<1x128xf32>
    %cst_55 = arith.constant 1.500000e+01 : f32
    %131 = vector.broadcast %cst_55 : f32 to vector<1x128xf32>
    %132 = arith.mulf %130, %131 : vector<1x128xf32>
    %cst_56 = arith.constant 0.000000e+00 : f32
    %cst_57 = arith.constant 1.500000e+01 : f32
    %133 = vector.broadcast %cst_56 : f32 to vector<1x128xf32>
    %134 = arith.maximumf %133, %132 : vector<1x128xf32>
    %135 = vector.broadcast %cst_57 : f32 to vector<1x128xf32>
    %136 = arith.minimumf %135, %134 : vector<1x128xf32>
    %137 = math.floor %117 : vector<1x128xf32>
    %138 = math.floor %136 : vector<1x128xf32>
    %139 = arith.subf %117, %137 : vector<1x128xf32>
    %140 = arith.subf %136, %138 : vector<1x128xf32>
    %141 = arith.fptosi %137 : vector<1x128xf32> to vector<1x128xi32>
    %142 = arith.fptosi %138 : vector<1x128xf32> to vector<1x128xi32>
    %c1_i32_58 = arith.constant 1 : i32
    %143 = vector.broadcast %c1_i32_58 : i32 to vector<1x128xi32>
    %144 = arith.addi %141, %143 : vector<1x128xi32>
    %c15_i32_59 = arith.constant 15 : i32
    %145 = vector.broadcast %c15_i32_59 : i32 to vector<1x128xi32>
    %146 = arith.minsi %144, %145 : vector<1x128xi32>
    %c1_i32_60 = arith.constant 1 : i32
    %147 = vector.broadcast %c1_i32_60 : i32 to vector<1x128xi32>
    %148 = arith.addi %142, %147 : vector<1x128xi32>
    %c15_i32_61 = arith.constant 15 : i32
    %149 = vector.broadcast %c15_i32_61 : i32 to vector<1x128xi32>
    %150 = arith.minsi %148, %149 : vector<1x128xi32>
    %151 = vector.broadcast %141 : vector<1x128xi32> to vector<16x128xi32>
    %152 = arith.cmpi eq, %0, %151 : vector<16x128xi32>
    %cst_62 = arith.constant 1.000000e+00 : f32
    %153 = vector.broadcast %cst_62 : f32 to vector<1x128xf32>
    %154 = arith.subf %153, %139 : vector<1x128xf32>
    %cst_63 = arith.constant 0.000000e+00 : f32
    %155 = vector.shape_cast %154 : vector<1x128xf32> to vector<1x128xf32>
    %156 = vector.broadcast %155 : vector<1x128xf32> to vector<16x128xf32>
    %157 = vector.broadcast %cst_63 : f32 to vector<16x128xf32>
    %158 = arith.select %152, %156, %157 : vector<16x128xi1>, vector<16x128xf32>
    %159 = vector.broadcast %146 : vector<1x128xi32> to vector<16x128xi32>
    %160 = arith.cmpi eq, %0, %159 : vector<16x128xi32>
    %cst_64 = arith.constant 0.000000e+00 : f32
    %161 = vector.shape_cast %139 : vector<1x128xf32> to vector<1x128xf32>
    %162 = vector.broadcast %161 : vector<1x128xf32> to vector<16x128xf32>
    %163 = vector.broadcast %cst_64 : f32 to vector<16x128xf32>
    %164 = arith.select %160, %162, %163 : vector<16x128xi1>, vector<16x128xf32>
    %165 = arith.addf %158, %164 : vector<16x128xf32>
    %166 = vector.broadcast %142 : vector<1x128xi32> to vector<16x128xi32>
    %167 = arith.cmpi eq, %1, %166 : vector<16x128xi32>
    %cst_65 = arith.constant 1.000000e+00 : f32
    %168 = vector.broadcast %cst_65 : f32 to vector<1x128xf32>
    %169 = arith.subf %168, %140 : vector<1x128xf32>
    %cst_66 = arith.constant 0.000000e+00 : f32
    %170 = vector.shape_cast %169 : vector<1x128xf32> to vector<1x128xf32>
    %171 = vector.broadcast %170 : vector<1x128xf32> to vector<16x128xf32>
    %172 = vector.broadcast %cst_66 : f32 to vector<16x128xf32>
    %173 = arith.select %167, %171, %172 : vector<16x128xi1>, vector<16x128xf32>
    %174 = vector.broadcast %150 : vector<1x128xi32> to vector<16x128xi32>
    %175 = arith.cmpi eq, %1, %174 : vector<16x128xi32>
    %cst_67 = arith.constant 0.000000e+00 : f32
    %176 = vector.shape_cast %140 : vector<1x128xf32> to vector<1x128xf32>
    %177 = vector.broadcast %176 : vector<1x128xf32> to vector<16x128xf32>
    %178 = vector.broadcast %cst_67 : f32 to vector<16x128xf32>
    %179 = arith.select %175, %177, %178 : vector<16x128xi1>, vector<16x128xf32>
    %180 = arith.addf %173, %179 : vector<16x128xf32>
    %c0_68 = arith.constant 0 : index
    %c1_69 = arith.constant 1 : index
    %c0_70 = arith.constant 0 : index
    %c0_71 = arith.constant 0 : index
    %181 = vector.load %arg3[%c0_68, %c1_69, %c0_70, %c0_71] : memref<1x3x512x16xf32, #tpu.memory_space<vmem>>, vector<1x1x512x16xf32>
    %182 = vector.shape_cast %181 : vector<1x1x512x16xf32> to vector<512x16xf32>
    %cst_72 = arith.constant dense<0.000000e+00> : vector<512x128xf32>
    %183 = tpu.matmul %182, %165, %cst_72 {dimension_numbers = #tpu.dot_dimension_numbers<[1], [0], [0], [1], [0, 0, 1, 1], [], []>} : vector<512x16xf32>, vector<16x128xf32>, vector<512x128xf32> -> vector<512x128xf32>
    %184 = vector.shape_cast %183 : vector<512x128xf32> to vector<32x16x128xf32>
    %185 = vector.shape_cast %180 : vector<16x128xf32> to vector<1x16x128xf32>
    %186 = vector.broadcast %185 : vector<1x16x128xf32> to vector<32x16x128xf32>
    %187 = arith.mulf %184, %186 : vector<32x16x128xf32>
    %cst_73 = arith.constant dense<0.000000e+00> : vector<32x128xf32>
    %188 = vector.multi_reduction <add>, %187, %cst_73 [1] : vector<32x16x128xf32> to vector<32x128xf32>
    %c0_74 = arith.constant 0 : index
    %c32 = arith.constant 32 : index
    %c0_75 = arith.constant 0 : index
    %189 = vector.load %arg4[%c0_74, %c32, %c0_75] : memref<1x96x128xf32, #tpu.memory_space<vmem>>, vector<1x32x128xf32>
    %190 = vector.shape_cast %189 : vector<1x32x128xf32> to vector<32x128xf32>
    %191 = vector.shape_cast %188 : vector<32x128xf32> to vector<1x32x128xf32>
    tpu.vector_store %arg4[%c0_74, %c32, %c0_75], %191 {strides = array<i32>} : memref<1x96x128xf32, #tpu.memory_space<vmem>>, vector<1x32x128xf32>,
    %c0_76 = arith.constant 0 : index
    %c2 = arith.constant 2 : index
    %c0_77 = arith.constant 0 : index
    %c0_78 = arith.constant 0 : index
    %192 = vector.load %arg2[%c0_76, %c2, %c0_77, %c0_78] : memref<1x3x2x128xf32, #tpu.memory_space<vmem>>, vector<1x1x2x128xf32>
    %193 = vector.shape_cast %192 : vector<1x1x2x128xf32> to vector<2x128xf32>
    %194 = vector.extract_strided_slice %193 {offsets = [0, 0], sizes = [1, 128], strides = [1, 1]} : vector<2x128xf32> to vector<1x128xf32>
    %cst_79 = arith.constant 1.000010e+00 : f32
    %195 = vector.broadcast %cst_79 : f32 to vector<1x128xf32>
    %196 = arith.divf %194, %195 : vector<1x128xf32>
    %cst_80 = arith.constant 5.000000e-01 : f32
    %197 = vector.broadcast %cst_80 : f32 to vector<1x128xf32>
    %198 = arith.addf %196, %197 : vector<1x128xf32>
    %cst_81 = arith.constant 1.000000e+00 : f32
    %199 = vector.broadcast %cst_81 : f32 to vector<1x128xf32>
    %200 = arith.cmpf oge, %198, %199 : vector<1x128xf32>
    %cst_82 = arith.constant 0.999989986 : f32
    %201 = vector.broadcast %cst_82 : f32 to vector<1x128xf32>
    %202 = arith.select %200, %201, %198 : vector<1x128xi1>, vector<1x128xf32>
    %cst_83 = arith.constant 0.000000e+00 : f32
    %203 = vector.broadcast %cst_83 : f32 to vector<1x128xf32>
    %204 = arith.cmpf olt, %202, %203 : vector<1x128xf32>
    %cst_84 = arith.constant 0.000000e+00 : f32
    %205 = vector.broadcast %cst_84 : f32 to vector<1x128xf32>
    %206 = arith.select %204, %205, %202 : vector<1x128xi1>, vector<1x128xf32>
    %cst_85 = arith.constant 1.500000e+01 : f32
    %207 = vector.broadcast %cst_85 : f32 to vector<1x128xf32>
    %208 = arith.mulf %206, %207 : vector<1x128xf32>
    %cst_86 = arith.constant 0.000000e+00 : f32
    %cst_87 = arith.constant 1.500000e+01 : f32
    %209 = vector.broadcast %cst_86 : f32 to vector<1x128xf32>
    %210 = arith.maximumf %209, %208 : vector<1x128xf32>
    %211 = vector.broadcast %cst_87 : f32 to vector<1x128xf32>
    %212 = arith.minimumf %211, %210 : vector<1x128xf32>
    %213 = vector.extract_strided_slice %193 {offsets = [1, 0], sizes = [1, 128], strides = [1, 1]} : vector<2x128xf32> to vector<1x128xf32>
    %cst_88 = arith.constant 1.000010e+00 : f32
    %214 = vector.broadcast %cst_88 : f32 to vector<1x128xf32>
    %215 = arith.divf %213, %214 : vector<1x128xf32>
    %cst_89 = arith.constant 5.000000e-01 : f32
    %216 = vector.broadcast %cst_89 : f32 to vector<1x128xf32>
    %217 = arith.addf %215, %216 : vector<1x128xf32>
    %cst_90 = arith.constant 1.000000e+00 : f32
    %218 = vector.broadcast %cst_90 : f32 to vector<1x128xf32>
    %219 = arith.cmpf oge, %217, %218 : vector<1x128xf32>
    %cst_91 = arith.constant 0.999989986 : f32
    %220 = vector.broadcast %cst_91 : f32 to vector<1x128xf32>
    %221 = arith.select %219, %220, %217 : vector<1x128xi1>, vector<1x128xf32>
    %cst_92 = arith.constant 0.000000e+00 : f32
    %222 = vector.broadcast %cst_92 : f32 to vector<1x128xf32>
    %223 = arith.cmpf olt, %221, %222 : vector<1x128xf32>
    %cst_93 = arith.constant 0.000000e+00 : f32
    %224 = vector.broadcast %cst_93 : f32 to vector<1x128xf32>
    %225 = arith.select %223, %224, %221 : vector<1x128xi1>, vector<1x128xf32>
    %cst_94 = arith.constant 1.500000e+01 : f32
    %226 = vector.broadcast %cst_94 : f32 to vector<1x128xf32>
    %227 = arith.mulf %225, %226 : vector<1x128xf32>
    %cst_95 = arith.constant 0.000000e+00 : f32
    %cst_96 = arith.constant 1.500000e+01 : f32
    %228 = vector.broadcast %cst_95 : f32 to vector<1x128xf32>
    %229 = arith.maximumf %228, %227 : vector<1x128xf32>
    %230 = vector.broadcast %cst_96 : f32 to vector<1x128xf32>
    %231 = arith.minimumf %230, %229 : vector<1x128xf32>
    %232 = math.floor %212 : vector<1x128xf32>
    %233 = math.floor %231 : vector<1x128xf32>
    %234 = arith.subf %212, %232 : vector<1x128xf32>
    %235 = arith.subf %231, %233 : vector<1x128xf32>
    %236 = arith.fptosi %232 : vector<1x128xf32> to vector<1x128xi32>
    %237 = arith.fptosi %233 : vector<1x128xf32> to vector<1x128xi32>
    %c1_i32_97 = arith.constant 1 : i32
    %238 = vector.broadcast %c1_i32_97 : i32 to vector<1x128xi32>
    %239 = arith.addi %236, %238 : vector<1x128xi32>
    %c15_i32_98 = arith.constant 15 : i32
    %240 = vector.broadcast %c15_i32_98 : i32 to vector<1x128xi32>
    %241 = arith.minsi %239, %240 : vector<1x128xi32>
    %c1_i32_99 = arith.constant 1 : i32
    %242 = vector.broadcast %c1_i32_99 : i32 to vector<1x128xi32>
    %243 = arith.addi %237, %242 : vector<1x128xi32>
    %c15_i32_100 = arith.constant 15 : i32
    %244 = vector.broadcast %c15_i32_100 : i32 to vector<1x128xi32>
    %245 = arith.minsi %243, %244 : vector<1x128xi32>
    %246 = vector.broadcast %236 : vector<1x128xi32> to vector<16x128xi32>
    %247 = arith.cmpi eq, %0, %246 : vector<16x128xi32>
    %cst_101 = arith.constant 1.000000e+00 : f32
    %248 = vector.broadcast %cst_101 : f32 to vector<1x128xf32>
    %249 = arith.subf %248, %234 : vector<1x128xf32>
    %cst_102 = arith.constant 0.000000e+00 : f32
    %250 = vector.shape_cast %249 : vector<1x128xf32> to vector<1x128xf32>
    %251 = vector.broadcast %250 : vector<1x128xf32> to vector<16x128xf32>
    %252 = vector.broadcast %cst_102 : f32 to vector<16x128xf32>
    %253 = arith.select %247, %251, %252 : vector<16x128xi1>, vector<16x128xf32>
    %254 = vector.broadcast %241 : vector<1x128xi32> to vector<16x128xi32>
    %255 = arith.cmpi eq, %0, %254 : vector<16x128xi32>
    %cst_103 = arith.constant 0.000000e+00 : f32
    %256 = vector.shape_cast %234 : vector<1x128xf32> to vector<1x128xf32>
    %257 = vector.broadcast %256 : vector<1x128xf32> to vector<16x128xf32>
    %258 = vector.broadcast %cst_103 : f32 to vector<16x128xf32>
    %259 = arith.select %255, %257, %258 : vector<16x128xi1>, vector<16x128xf32>
    %260 = arith.addf %253, %259 : vector<16x128xf32>
    %261 = vector.broadcast %237 : vector<1x128xi32> to vector<16x128xi32>
    %262 = arith.cmpi eq, %1, %261 : vector<16x128xi32>
    %cst_104 = arith.constant 1.000000e+00 : f32
    %263 = vector.broadcast %cst_104 : f32 to vector<1x128xf32>
    %264 = arith.subf %263, %235 : vector<1x128xf32>
    %cst_105 = arith.constant 0.000000e+00 : f32
    %265 = vector.shape_cast %264 : vector<1x128xf32> to vector<1x128xf32>
    %266 = vector.broadcast %265 : vector<1x128xf32> to vector<16x128xf32>
    %267 = vector.broadcast %cst_105 : f32 to vector<16x128xf32>
    %268 = arith.select %262, %266, %267 : vector<16x128xi1>, vector<16x128xf32>
    %269 = vector.broadcast %245 : vector<1x128xi32> to vector<16x128xi32>
    %270 = arith.cmpi eq, %1, %269 : vector<16x128xi32>
    %cst_106 = arith.constant 0.000000e+00 : f32
    %271 = vector.shape_cast %235 : vector<1x128xf32> to vector<1x128xf32>
    %272 = vector.broadcast %271 : vector<1x128xf32> to vector<16x128xf32>
    %273 = vector.broadcast %cst_106 : f32 to vector<16x128xf32>
    %274 = arith.select %270, %272, %273 : vector<16x128xi1>, vector<16x128xf32>
    %275 = arith.addf %268, %274 : vector<16x128xf32>
    %c0_107 = arith.constant 0 : index
    %c2_108 = arith.constant 2 : index
    %c0_109 = arith.constant 0 : index
    %c0_110 = arith.constant 0 : index
    %276 = vector.load %arg3[%c0_107, %c2_108, %c0_109, %c0_110] : memref<1x3x512x16xf32, #tpu.memory_space<vmem>>, vector<1x1x512x16xf32>
    %277 = vector.shape_cast %276 : vector<1x1x512x16xf32> to vector<512x16xf32>
    %cst_111 = arith.constant dense<0.000000e+00> : vector<512x128xf32>
    %278 = tpu.matmul %277, %260, %cst_111 {dimension_numbers = #tpu.dot_dimension_numbers<[1], [0], [0], [1], [0, 0, 1, 1], [], []>} : vector<512x16xf32>, vector<16x128xf32>, vector<512x128xf32> -> vector<512x128xf32>
    %279 = vector.shape_cast %278 : vector<512x128xf32> to vector<32x16x128xf32>
    %280 = vector.shape_cast %275 : vector<16x128xf32> to vector<1x16x128xf32>
    %281 = vector.broadcast %280 : vector<1x16x128xf32> to vector<32x16x128xf32>
    %282 = arith.mulf %279, %281 : vector<32x16x128xf32>
    %cst_112 = arith.constant dense<0.000000e+00> : vector<32x128xf32>
    %283 = vector.multi_reduction <add>, %282, %cst_112 [1] : vector<32x16x128xf32> to vector<32x128xf32>
    %c0_113 = arith.constant 0 : index
    %c64 = arith.constant 64 : index
    %c0_114 = arith.constant 0 : index
    %284 = vector.load %arg4[%c0_113, %c64, %c0_114] : memref<1x96x128xf32, #tpu.memory_space<vmem>>, vector<1x32x128xf32>
    %285 = vector.shape_cast %284 : vector<1x32x128xf32> to vector<32x128xf32>
    %286 = vector.shape_cast %283 : vector<32x128xf32> to vector<1x32x128xf32>
    tpu.vector_store %arg4[%c0_113, %c64, %c0_114], %286 {strides = array<i32>} : memref<1x96x128xf32, #tpu.memory_space<vmem>>, vector<1x32x128xf32>,
    return
  }
  func.func @transform_0(%arg0: i32, %arg1: i32) -> (i32, i32, i32, i32) {
    %c0_i32 = arith.constant 0 : i32
    %c0_i32_0 = arith.constant 0 : i32
    %c0_i32_1 = arith.constant 0 : i32
    return %arg0, %c0_i32, %c0_i32_0, %arg1 : i32, i32, i32, i32
  }
  func.func @transform_1(%arg0: i32, %arg1: i32) -> (i32, i32, i32, i32) {
    %c0_i32 = arith.constant 0 : i32
    %c0_i32_0 = arith.constant 0 : i32
    %c0_i32_1 = arith.constant 0 : i32
    %c0_i32_2 = arith.constant 0 : i32
    return %arg0, %c0_i32, %c0_i32_0, %c0_i32_1 : i32, i32, i32, i32
  }
  func.func @transform_2(%arg0: i32, %arg1: i32) -> (i32, i32, i32) {
    %c0_i32 = arith.constant 0 : i32
    %c0_i32_0 = arith.constant 0 : i32
    return %arg0, %c0_i32, %arg1 : i32, i32, i32
  }
}

</mosaic_0001>

<llo_original>
// kernel: tpu_custom_call.1
$region0: #{tpu_custom_call.1}
  #allocation0 [shape = 'u32[]', space=smem, size = 0x4, offset = 0x4, fixed_abs, tag = 'smem constant byte address 0x4 - core index']
  #allocation1 [shape = 'u32[144,128]{1,0:T(1,128)}', space=vmem, size = 0x12000, scoped, tag = 'internal scratch']
  %s0 = inlined_call_operand.vmem [shape: f32[2,3,2,128], index: 0, kind: input, shape index: {}]
  %s1 = inlined_call_operand.vmem [shape: f32[2,3,512,16], index: 1, kind: input, shape index: {}]
  %s2 = inlined_call_operand.hbm [shape: f32[2,96,128], index: 2, kind: output, shape index: {}]
  %s3 = sld [smem:[#allocation0]]
  $region41: #{tpu_custom_call.1} parent=0
    _
  %s5 = ssub.s32 1, %s3
  %s6 = scalar_select 0, %s5, %s3
  $region1: #{tpu_custom_call.1} parent=0
    #allocation2 [shape = 'u8[98304]{0}', space=vmem, size = 0x18000, scoped, tag = 'output window, operand 0']
    #allocation3 [shape = 's32[2]{0}', space=sflag, size = 0x8, scoped, tag = 'scoped memory for tpu_custom_call.1']
    %7 = vsyncpa [#allocation3], 0
    %s8 = scalar_lea.sflag [#allocation3], 1
    %9 = vsyncpa %s8, 0
    loop: start=0, step=1, limit=4
    $region2: #{tpu_custom_call.1} parent=1 // loop_pre_header
      _
    $region3: #{tpu_custom_call.1} parent=1 // loop_header
      %s11 = sphi 0, %s15
      %p12 = scmp.ge.s32.totalorder %s11, 4
      %s18 = sphi 0, %s30
      %s19 = sphi 0, %s26
      %s20 = sphi 0, %s18
      %s21 = sphi 0, %s19
      %s22 = sphi 0, %s20
      %s23 = sphi 0, %s21
      %s35 = sphi 0, %s37
      %s38 = sphi 0, %s35
      %s39 = sphi 0, %s38
      %s55 = sphi 0, %s39
      %s61 = sphi 0, %s63
      %s64 = sphi 0, %s61
      %s65 = sphi 0, %s64
      %s81 = sphi 0, %s65
      %s89 = sphi 0, %s91
      %s92 = sphi 0, %s89
      %s93 = sphi 0, %s92
      %s109 = sphi 0, %s93
    $region4: #{tpu_custom_call.1} parent=1 // loop_header_branch
      %14 = sbr.rel (%p12) target = $region8
    $region5: #{tpu_custom_call.1} parent=1 // loop_body
      %s16 = ssub.s32 %s11, 1
      %s17 = ssub.s32 %s11, 2
      %s24 = sadd.s32 1, %s19
      %p25 = scmp.ge.s32.totalorder %s24, 1
      %s26 = scalar_select %p25, 0, %s24
      %s27 = sadd.s32 1, %s18
      %s28 = scalar_select %p25, %s27, %s18
      %p29 = scmp.ge.s32.totalorder %s28, 2
      %s30 = scalar_select %p29, 0, %s28
      %s31 = ssub.s32 %s18, %s30
      %s32 = ssub.s32 %s19, %s26
      %s33 = sor.u32 %s31, %s32
      %p34 = scmp.eq.s32.totalorder %s33, 0
      %s36 = sadd.s32 %s35, 1
      %s37 = scalar_select %p34, %s35, %s36
      %p40 = pneg %p34
      %p41 = scmp.eq.s32.totalorder %s11, 1
      %p42 = por %p40, %p41
      %p43 = scmp.ne.s32.totalorder %s35, %s38
      %p44 = scmp.eq.s32.totalorder %s11, 0
      %p45 = por %p43, %p44
      %p46 = scmp.ne.s32.totalorder %s35, %s38
      %p47 = scmp.eq.s32.totalorder %s16, 1
      %p48 = por %p46, %p47
      %p49 = scmp.ne.s32.totalorder %s38, %s39
      %p50 = scmp.eq.s32.totalorder %s16, 0
      %p51 = por %p49, %p50
      %p52 = scmp.ne.s32.totalorder %s38, %s39
      %p53 = scmp.eq.s32.totalorder %s17, 1
      %p54 = por %p52, %p53
      %p56 = scmp.ne.s32.totalorder %s39, %s55
      %p57 = scmp.eq.s32.totalorder %s17, 0
      %p58 = por %p56, %p57
      %s59 = ssub.s32 %s18, %s30
      %p60 = scmp.eq.s32.totalorder %s59, 0
      %s62 = sadd.s32 %s61, 1
      %s63 = scalar_select %p60, %s61, %s62
      %p66 = pneg %p60
      %p67 = scmp.eq.s32.totalorder %s11, 1
      %p68 = por %p66, %p67
      %p69 = scmp.ne.s32.totalorder %s61, %s64
      %p70 = scmp.eq.s32.totalorder %s11, 0
      %p71 = por %p69, %p70
      %p72 = scmp.ne.s32.totalorder %s61, %s64
      %p73 = scmp.eq.s32.totalorder %s16, 1
      %p74 = por %p72, %p73
      %p75 = scmp.ne.s32.totalorder %s64, %s65
      %p76 = scmp.eq.s32.totalorder %s16, 0
      %p77 = por %p75, %p76
      %p78 = scmp.ne.s32.totalorder %s64, %s65
      %p79 = scmp.eq.s32.totalorder %s17, 1
      %p80 = por %p78, %p79
      %p82 = scmp.ne.s32.totalorder %s65, %s81
      %p83 = scmp.eq.s32.totalorder %s17, 0
      %p84 = por %p82, %p83
      %s85 = ssub.s32 %s18, %s30
      %s86 = ssub.s32 %s19, %s26
      %s87 = sor.u32 %s85, %s86
      %p88 = scmp.eq.s32.totalorder %s87, 0
      %s90 = sadd.s32 %s89, 1
      %s91 = scalar_select %p88, %s89, %s90
      %p94 = pneg %p88
      %p95 = scmp.eq.s32.totalorder %s11, 1
      %p96 = por %p94, %p95
      %p97 = scmp.ne.s32.totalorder %s89, %s92
      %p98 = scmp.eq.s32.totalorder %s11, 0
      %p99 = por %p97, %p98
      %p100 = scmp.ne.s32.totalorder %s89, %s92
      %p101 = scmp.eq.s32.totalorder %s16, 1
      %p102 = por %p100, %p101
      %p103 = scmp.ne.s32.totalorder %s92, %s93
      %p104 = scmp.eq.s32.totalorder %s16, 0
      %p105 = por %p103, %p104
      %p106 = scmp.ne.s32.totalorder %s92, %s93
      %p107 = scmp.eq.s32.totalorder %s17, 1
      %p108 = por %p106, %p107
      %p110 = scmp.ne.s32.totalorder %s93, %s109
      %p111 = scmp.eq.s32.totalorder %s17, 0
      %p112 = por %p110, %p111
      %p113 = scmp.le.s32.totalorder 1, %s11
      %p114 = scmp.lt.s32.totalorder %s11, 3
      %p115 = pnand %p113, %p114
      %p116 = pneg %p115
      // Predicated region
      $region9: #{tpu_custom_call.1} parent=5 // pred_check
        _
      $region10: #{tpu_custom_call.1} parent=5 // pred_check_branch
        %118 = sbr.rel (%p115) target = $region12
      $region11: #{tpu_custom_call.1} parent=5 // pred_region
        %s119 = ssub.s32 %s11, 1
      $region12: #{tpu_custom_call.1} parent=5 // pred_fallthru
        _
      %p120 = scmp.lt.s32.totalorder %s11, 2
      // Predicated region
      $region13: #{tpu_custom_call.1} parent=5 // pred_check
        %p121 = pneg %p120
      $region14: #{tpu_custom_call.1} parent=5 // pred_check_branch
        %123 = sbr.rel (%p121) target = $region16
      $region15: #{tpu_custom_call.1} parent=5 // pred_region
        // Predicated region
        $region17: #{tpu_custom_call.1} parent=15 // pred_check
          %p124 = pneg %p45
        $region18: #{tpu_custom_call.1} parent=15 // pred_check_branch
          %126 = sbr.rel (%p124) target = $region20
        $region19: #{tpu_custom_call.1} parent=15 // pred_region
          %p127 = scmp.lt.s32.totalorder %s18, 1
          %s128 = scalar_select %p127, %s18, 1
          %p129 = scmp.lt.s32.totalorder %s19, 0
          %s130 = scalar_select %p129, %s19, 0
          %s131 = smul.addr %s128, 3
          %s132 = sadd.s32 %s130, %s131
          %s133 = smul.addr %s132, 2
          %s134 = scalar_lea.vmem %s0, %s133
        $region20: #{tpu_custom_call.1} parent=15 // pred_fallthru
          _
        // Predicated region
        $region21: #{tpu_custom_call.1} parent=15 // pred_check
          %p135 = pneg %p71
        $region22: #{tpu_custom_call.1} parent=15 // pred_check_branch
          %137 = sbr.rel (%p135) target = $region24
        $region23: #{tpu_custom_call.1} parent=15 // pred_region
          %p138 = scmp.lt.s32.totalorder %s18, 1
          %s139 = scalar_select %p138, %s18, 1
          %s140 = smul.addr %s139, 192
          %s141 = smul.addr %s140, 8
          %s142 = scalar_lea.vmem %s1, %s141
        $region24: #{tpu_custom_call.1} parent=15 // pred_fallthru
          _
      $region16: #{tpu_custom_call.1} parent=5 // pred_fallthru
        _
      %p143 = scmp.le.s32.totalorder 1, %s11
      %p144 = scmp.lt.s32.totalorder %s11, 3
      %p145 = pnand %p143, %p144
      %p146 = pneg %p145
      // Predicated region
      $region25: #{tpu_custom_call.1} parent=5 // pred_check
        _
      $region26: #{tpu_custom_call.1} parent=5 // pred_check_branch
        %148 = sbr.rel (%p145) target = $region28
      $region27: #{tpu_custom_call.1} parent=5 // pred_region
        %s149 = ssub.s32 %s11, 1
        %p150 = scmp.lt.s32.totalorder %s20, 1
        %s151 = scalar_select %p150, %s20, 1
        %p152 = scmp.lt.s32.totalorder %s21, 0
        %s153 = scalar_select %p152, %s21, 0
        %s154 = smul.addr %s151, 3
        %s155 = sadd.s32 %s153, %s154
        %s156 = smul.addr %s155, 2
        %s157 = scalar_lea.vmem %s0, %s156
        %p158 = pneg %p51
        %p159 = pneg %p48
        %p160 = scmp.lt.s32.totalorder %s20, 1
        %s161 = scalar_select %p160, %s20, 1
        %s162 = smul.addr %s161, 192
        %s163 = smul.addr %s162, 8
        %s164 = scalar_lea.vmem %s1, %s163
        %p165 = pneg %p77
        %p166 = pneg %p74
        %p167 = pneg %p105
        %p168 = pneg %p102
        %s169 = sand.u32 %s92, 1
        %s170 = scalar_lea.sflag [#allocation3], %s169
        %s171 = sand.u32 %s92, 1
        %s172 = smul.addr %s171, 96
        %s173 = scalar_lea.vmem [#allocation2], %s172
        %p174 = scmp.lt.s32.totalorder %s20, 1
        %s175 = scalar_select %p174, %s20, 1
        %p176 = scmp.lt.s32.totalorder %s21, 0
        %s177 = scalar_select %p176, %s21, 0
        %s178 = smul.addr %s175, 3
        %s179 = sadd.s32 %s177, %s178
        %s180 = smul.addr %s179, 2
        %s181 = scalar_lea.vmem %s0, %s180
        %p182 = scmp.lt.s32.totalorder %s20, 1
        %s183 = scalar_select %p182, %s20, 1
        %s184 = smul.addr %s183, 192
        %s185 = smul.addr %s184, 8
        %s186 = scalar_lea.vmem %s1, %s185
        %v187 = vlaneseq
        %v188 = vshrl.u32 %v187, 7
        %v189 = vadd.s32 %v188, 8
        %v190 = vld [vmem:[%s181] sm:$0x3]
        %v191 = vrcp.pop 1.00001
        %v192 = vmul.f32 %v190, %v191
        %v193 = vadd.f32 %v192, 0.5
        %vm194 = vcmp.ge.f32.partialorder %v193, 1.0
        %v195 = vsel %vm194, 0.99999, %v193
        %vm196 = vcmp.lt.f32.partialorder %v195, 0.0
        %v197 = vsel %vm196, 0.0, %v195
        %v198 = vmul.f32 %v197, 15.0
        %v199 = vmax.f32 %v198, 0.0
        %v200 = vmin.f32 %v199, 15.0
        %v201 = vfloor.f32 %v200
        %v202 = vsub.f32 %v200, %v201
        %v203 = vcvt.f32.s32.to.zero.pseudo %v201
        %v204 = vadd.s32 %v203, 1
        %vm205 = vcmp.lt.s32.totalorder %v204, 15
        %v206 = vsel %vm205, %v204, 15
        %v207 = vlaneseq
        %v208 = vshrl.u32 %v207, 7
        %v209 = vsub.s32 0, %v208
        %v210 = vrot.slane %v203, %v209
        %vm211 = vcmp.eq.s32.totalorder %v188, %v210
        %vm212 = vcmp.eq.s32.totalorder %v189, %v210
        %v213 = vsub.f32 1.0, %v202
        %v214 = vlaneseq
        %v215 = vshrl.u32 %v214, 7
        %v216 = vsub.s32 0, %v215
        %v217 = vrot.slane %v213, %v216
        %v218 = vsel %vm211, %v217, 0.0
        %v219 = vsel %vm212, %v217, 0.0
        %v220 = vlaneseq
        %v221 = vshrl.u32 %v220, 7
        %v222 = vsub.s32 0, %v221
        %v223 = vrot.slane %v206, %v222
        %vm224 = vcmp.eq.s32.totalorder %v188, %v223
        %vm225 = vcmp.eq.s32.totalorder %v189, %v223
        %v226 = vlaneseq
        %v227 = vshrl.u32 %v226, 7
        %v228 = vsub.s32 0, %v227
        %v229 = vrot.slane %v202, %v228
        %v230 = vsel %vm224, %v229, 0.0
        %v231 = vsel %vm225, %v229, 0.0
        %v232 = vadd.f32 %v218, %v230
        %v233 = vadd.f32 %v219, %v231
        %v234 = vlaneseq
        %v235 = vshrl.u32 %v234, 7
        %v236 = vsub.s32 1, %v235
        %v237 = vrot.slane %v203, %v236
        %vm238 = vcmp.eq.s32.totalorder %v188, %v237
        %vm239 = vcmp.eq.s32.totalorder %v189, %v237
        %v240 = vlaneseq
        %v241 = vshrl.u32 %v240, 7
        %v242 = vsub.s32 1, %v241
        %v243 = vrot.slane %v213, %v242
        %v244 = vsel %vm238, %v243, 0.0
        %v245 = vsel %vm239, %v243, 0.0
        %v246 = vlaneseq
        %v247 = vshrl.u32 %v246, 7
        %v248 = vsub.s32 1, %v247
        %v249 = vrot.slane %v206, %v248
        %vm250 = vcmp.eq.s32.totalorder %v188, %v249
        %vm251 = vcmp.eq.s32.totalorder %v189, %v249
        %v252 = vlaneseq
        %v253 = vshrl.u32 %v252, 7
        %v254 = vsub.s32 1, %v253
        %v255 = vrot.slane %v202, %v254
        %v256 = vsel %vm250, %v255, 0.0
        %v257 = vsel %vm251, %v255, 0.0
        %v258 = vadd.f32 %v244, %v256
        %v259 = vadd.f32 %v245, %v257
        %v260 = vld [vmem:[%s186] sm:$0xff]
        %v261 = vld [vmem:[%s186 + $0x8] sm:$0xff]
        %v262 = vld [vmem:[%s186 + $0x10] sm:$0xff]
        %v263 = vld [vmem:[%s186 + $0x18] sm:$0xff]
        %v264 = vld [vmem:[%s186 + $0x20] sm:$0xff]
        %v265 = vld [vmem:[%s186 + $0x28] sm:$0xff]
        %v266 = vld [vmem:[%s186 + $0x30] sm:$0xff]
        %v267 = vld [vmem:[%s186 + $0x38] sm:$0xff]
        %v268 = vld [vmem:[%s186 + $0x40] sm:$0xff]
        %v269 = vld [vmem:[%s186 + $0x48] sm:$0xff]
        %v270 = vld [vmem:[%s186 + $0x50] sm:$0xff]
        %v271 = vld [vmem:[%s186 + $0x58] sm:$0xff]
        %v272 = vld [vmem:[%s186 + $0x60] sm:$0xff]
        %v273 = vld [vmem:[%s186 + $0x68] sm:$0xff]
        %v274 = vld [vmem:[%s186 + $0x70] sm:$0xff]
        %v275 = vld [vmem:[%s186 + $0x78] sm:$0xff]
        %v276 = vld [vmem:[%s186 + $0x80] sm:$0xff]
        %v277 = vld [vmem:[%s186 + $0x88] sm:$0xff]
        %v278 = vld [vmem:[%s186 + $0x90] sm:$0xff]
        %v279 = vld [vmem:[%s186 + $0x98] sm:$0xff]
        %v280 = vld [vmem:[%s186 + $0xa0] sm:$0xff]
        %v281 = vld [vmem:[%s186 + $0xa8] sm:$0xff]
        %v282 = vld [vmem:[%s186 + $0xb0] sm:$0xff]
        %v283 = vld [vmem:[%s186 + $0xb8] sm:$0xff]
        %v284 = vld [vmem:[%s186 + $0xc0] sm:$0xff]
        %v285 = vld [vmem:[%s186 + $0xc8] sm:$0xff]
        %v286 = vld [vmem:[%s186 + $0xd0] sm:$0xff]
        %v287 = vld [vmem:[%s186 + $0xd8] sm:$0xff]
        %v288 = vld [vmem:[%s186 + $0xe0] sm:$0xff]
        %v289 = vld [vmem:[%s186 + $0xe8] sm:$0xff]
        %v290 = vld [vmem:[%s186 + $0xf0] sm:$0xff]
        %v291 = vld [vmem:[%s186 + $0xf8] sm:$0xff]
        %v292 = vld [vmem:[%s186 + $0x100] sm:$0xff]
        %v293 = vld [vmem:[%s186 + $0x108] sm:$0xff]
        %v294 = vld [vmem:[%s186 + $0x110] sm:$0xff]
        %v295 = vld [vmem:[%s186 + $0x118] sm:$0xff]
        %v296 = vld [vmem:[%s186 + $0x120] sm:$0xff]
        %v297 = vld [vmem:[%s186 + $0x128] sm:$0xff]
        %v298 = vld [vmem:[%s186 + $0x130] sm:$0xff]
        %v299 = vld [vmem:[%s186 + $0x138] sm:$0xff]
        %v300 = vld [vmem:[%s186 + $0x140] sm:$0xff]
        %v301 = vld [vmem:[%s186 + $0x148] sm:$0xff]
        %v302 = vld [vmem:[%s186 + $0x150] sm:$0xff]
        %v303 = vld [vmem:[%s186 + $0x158] sm:$0xff]
        %v304 = vld [vmem:[%s186 + $0x160] sm:$0xff]
        %v305 = vld [vmem:[%s186 + $0x168] sm:$0xff]
        %v306 = vld [vmem:[%s186 + $0x170] sm:$0xff]
        %v307 = vld [vmem:[%s186 + $0x178] sm:$0xff]
        %v308 = vld [vmem:[%s186 + $0x180] sm:$0xff]
        %v309 = vld [vmem:[%s186 + $0x188] sm:$0xff]
        %v310 = vld [vmem:[%s186 + $0x190] sm:$0xff]
        %v311 = vld [vmem:[%s186 + $0x198] sm:$0xff]
        %v312 = vld [vmem:[%s186 + $0x1a0] sm:$0xff]
        %v313 = vld [vmem:[%s186 + $0x1a8] sm:$0xff]
        %v314 = vld [vmem:[%s186 + $0x1b0] sm:$0xff]
        %v315 = vld [vmem:[%s186 + $0x1b8] sm:$0xff]
        %v316 = vld [vmem:[%s186 + $0x1c0] sm:$0xff]
        %v317 = vld [vmem:[%s186 + $0x1c8] sm:$0xff]
        %v318 = vld [vmem:[%s186 + $0x1d0] sm:$0xff]
        %v319 = vld [vmem:[%s186 + $0x1d8] sm:$0xff]
        %v320 = vld [vmem:[%s186 + $0x1e0] sm:$0xff]
        %v321 = vld [vmem:[%s186 + $0x1e8] sm:$0xff]
        %v322 = vld [vmem:[%s186 + $0x1f0] sm:$0xff]
        %v323 = vld [vmem:[%s186 + $0x1f8] sm:$0xff]
        %vm324 = vcmask 130048
        %v326 = vsel %vm324, %v260, 0
        %v329 = vsel %vm324, %v261, 0
        %v332 = vsel %vm324, %v262, 0
        %v335 = vsel %vm324, %v263, 0
        %v338 = vsel %vm324, %v264, 0
        %v341 = vsel %vm324, %v265, 0
        %v344 = vsel %vm324, %v266, 0
        %v347 = vsel %vm324, %v267, 0
        %v350 = vsel %vm324, %v268, 0
        %v353 = vsel %vm324, %v269, 0
        %v356 = vsel %vm324, %v270, 0
        %v359 = vsel %vm324, %v271, 0
        %v362 = vsel %vm324, %v272, 0
        %v365 = vsel %vm324, %v273, 0
        %v368 = vsel %vm324, %v274, 0
        %v371 = vsel %vm324, %v275, 0
        %v374 = vsel %vm324, %v276, 0
        %v377 = vsel %vm324, %v277, 0
        %v380 = vsel %vm324, %v278, 0
        %v383 = vsel %vm324, %v279, 0
        %v386 = vsel %vm324, %v280, 0
        %v389 = vsel %vm324, %v281, 0
        %v392 = vsel %vm324, %v282, 0
        %v395 = vsel %vm324, %v283, 0
        %v398 = vsel %vm324, %v284, 0
        %v401 = vsel %vm324, %v285, 0
        %v404 = vsel %vm324, %v286, 0
        %v407 = vsel %vm324, %v287, 0
        %v410 = vsel %vm324, %v288, 0
        %v413 = vsel %vm324, %v289, 0
        %v416 = vsel %vm324, %v290, 0
        %v419 = vsel %vm324, %v291, 0
        %v422 = vsel %vm324, %v292, 0
        %v425 = vsel %vm324, %v293, 0
        %v428 = vsel %vm324, %v294, 0
        %v431 = vsel %vm324, %v295, 0
        %v434 = vsel %vm324, %v296, 0
        %v437 = vsel %vm324, %v297, 0
        %v440 = vsel %vm324, %v298, 0
        %v443 = vsel %vm324, %v299, 0
        %v446 = vsel %vm324, %v300, 0
        %v449 = vsel %vm324, %v301, 0
        %v452 = vsel %vm324, %v302, 0
        %v455 = vsel %vm324, %v303, 0
        %v458 = vsel %vm324, %v304, 0
        %v461 = vsel %vm324, %v305, 0
        %v464 = vsel %vm324, %v306, 0
        %v467 = vsel %vm324, %v307, 0
        %v470 = vsel %vm324, %v308, 0
        %v473 = vsel %vm324, %v309, 0
        %v476 = vsel %vm324, %v310, 0
        %v479 = vsel %vm324, %v311, 0
        %v482 = vsel %vm324, %v312, 0
        %v485 = vsel %vm324, %v313, 0
        %v488 = vsel %vm324, %v314, 0
        %v491 = vsel %vm324, %v315, 0
        %v494 = vsel %vm324, %v316, 0
        %v497 = vsel %vm324, %v317, 0
        %v500 = vsel %vm324, %v318, 0
        %v503 = vsel %vm324, %v319, 0
        %v506 = vsel %vm324, %v320, 0
        %v509 = vsel %vm324, %v321, 0
        %v512 = vsel %vm324, %v322, 0
        %v515 = vsel %vm324, %v323, 0
        %517 = vmatprep.subr.mxu0 0.0
        %518 = vmatpush1.msra.mxu0 %v232
        %519 = vmatprep.subr.mxu0 0.0
        %520 = vmatpush1.msra.mxu0 %v233
        %521 = vmatprep.subr.mxu0 0.0
        %522 = vmatpush1.msra.mxu0 0.0
        %523 = vmatprep.subr.mxu0 0.0
        %524 = vmatpush1.msra.mxu0 0.0
        %525 = vmatprep.subr.mxu0 0.0
        %526 = vmatpush1.msra.mxu0 0.0
        %527 = vmatprep.subr.mxu0 0.0
        %528 = vmatpush1.msra.mxu0 0.0
        %529 = vmatprep.subr.mxu0 0.0
        %530 = vmatpush1.msra.mxu0 0.0
        %531 = vmatprep.subr.mxu0 0.0
        %532 = vmatpush1.msra.mxu0 0.0
        %533 = vmatprep.subr.mxu0 0.0
        %534 = vmatpush1.msra.mxu0 0.0
        %535 = vmatprep.subr.mxu0 0.0
        %536 = vmatpush1.msra.mxu0 0.0
        %537 = vmatprep.subr.mxu0 0.0
        %538 = vmatpush1.msra.mxu0 0.0
        %539 = vmatprep.subr.mxu0 0.0
        %540 = vmatpush1.msra.mxu0 0.0
        %541 = vmatprep.subr.mxu0 0.0
        %542 = vmatpush1.msra.mxu0 0.0
        %543 = vmatprep.subr.mxu0 0.0
        %544 = vmatpush1.msra.mxu0 0.0
        %545 = vmatprep.subr.mxu0 0.0
        %546 = vmatpush1.msra.mxu0 0.0
        %547 = vmatprep.subr.mxu0 0.0
        %548 = vmatpush1.msra.mxu0 0.0
        %549 = vmatprep.subr.mxu0 0.0
        %550 = vmatpush1.msra.mxu0 0.0
        %551 = vmatprep.subr.mxu0 0.0
        %552 = vmatpush1.msra.mxu0 0.0
        %553 = vmatprep.subr.mxu0 0.0
        %554 = vmatpush1.msra.mxu0 0.0
        %555 = vmatprep.subr.mxu0 0.0
        %556 = vmatpush1.msra.mxu0 0.0
        %557 = vmatprep.subr.mxu0 0.0
        %558 = vmatpush1.msra.mxu0 0.0
        %559 = vmatprep.subr.mxu0 0.0
        %560 = vmatpush1.msra.mxu0 0.0
        %561 = vmatprep.subr.mxu0 0.0
        %562 = vmatpush1.msra.mxu0 0.0
        %563 = vmatprep.subr.mxu0 0.0
        %564 = vmatpush1.msra.mxu0 0.0
        %565 = vmatprep.subr.mxu0 0.0
        %566 = vmatpush1.msra.mxu0 0.0
        %567 = vmatprep.subr.mxu0 0.0
        %568 = vmatpush1.msra.mxu0 0.0
        %569 = vmatprep.subr.mxu0 0.0
        %570 = vmatpush1.msra.mxu0 0.0
        %571 = vmatprep.subr.mxu0 0.0
        %572 = vmatpush1.msra.mxu0 0.0
        %573 = vmatprep.subr.mxu0 0.0
        %574 = vmatpush1.msra.mxu0 0.0
        %575 = vmatprep.subr.mxu0 0.0
        %576 = vmatpush1.msra.mxu0 0.0
        %577 = vmatprep.subr.mxu0 0.0
        %578 = vmatpush1.msra.mxu0 0.0
        %579 = vmatprep.subr.mxu0 0.0
        %580 = vmatpush1.msra.mxu0 0.0
        %581 = vmatprep.mubr.f32.mxu0 0.0
        %582 = vmatmul.mubr.f32.gmra.mrb[0].mxu0 %v326
        %v583 = vpop.f32.mrb[0].mxu0
        %v584 = vadd.f32 0.0, %v583
        %v585 = vpop.f32.mrb[0].mxu0
        %586 = vmatprep.mubr.f32.mxu0 0.0
        %587 = vmatmul.mubr.f32.gmra.mrb[0].mxu0 %v329
        %v588 = vpop.f32.mrb[0].mxu0
        %v589 = vadd.f32 0.0, %v588
        %v590 = vpop.f32.mrb[0].mxu0
        %591 = vmatprep.mubr.f32.mxu0 0.0
        %592 = vmatmul.mubr.f32.gmra.mrb[0].mxu0 %v332
        %v593 = vpop.f32.mrb[0].mxu0
        %v594 = vadd.f32 0.0, %v593
        %v595 = vpop.f32.mrb[0].mxu0
        %596 = vmatprep.mubr.f32.mxu0 0.0
        %597 = vmatmul.mubr.f32.gmra.mrb[0].mxu0 %v335
        %v598 = vpop.f32.mrb[0].mxu0
        %v599 = vadd.f32 0.0, %v598
        %v600 = vpop.f32.mrb[0].mxu0
        %601 = vmatprep.mubr.f32.mxu0 0.0
        %602 = vmatmul.mubr.f32.gmra.mrb[0].mxu0 %v338
        %v603 = vpop.f32.mrb[0].mxu0
        %v604 = vadd.f32 0.0, %v603
        %v605 = vpop.f32.mrb[0].mxu0
        %606 = vmatprep.mubr.f32.mxu0 0.0
        %607 = vmatmul.mubr.f32.gmra.mrb[0].mxu0 %v341
        %v608 = vpop.f32.mrb[0].mxu0
        %v609 = vadd.f32 0.0, %v608
        %v610 = vpop.f32.mrb[0].mxu0
        %611 = vmatprep.mubr.f32.mxu0 0.0
        %612 = vmatmul.mubr.f32.gmra.mrb[0].mxu0 %v344
        %v613 = vpop.f32.mrb[0].mxu0
        %v614 = vadd.f32 0.0, %v613
        %v615 = vpop.f32.mrb[0].mxu0
        %616 = vmatprep.mubr.f32.mxu0 0.0
        %617 = vmatmul.mubr.f32.gmra.mrb[0].mxu0 %v347
        %v618 = vpop.f32.mrb[0].mxu0
        %v619 = vadd.f32 0.0, %v618
        %v620 = vpop.f32.mrb[0].mxu0
        %621 = vmatprep.mubr.f32.mxu0 0.0
        %622 = vmatmul.mubr.f32.gmra.mrb[0].mxu0 %v350
        %v623 = vpop.f32.mrb[0].mxu0
        %v624 = vadd.f32 0.0, %v623
        %v625 = vpop.f32.mrb[0].mxu0
        %626 = vmatprep.mubr.f32.mxu0 0.0
        %627 = vmatmul.mubr.f32.gmra.mrb[0].mxu0 %v353
        %v628 = vpop.f32.mrb[0].mxu0
        %v629 = vadd.f32 0.0, %v628
        %v630 = vpop.f32.mrb[0].mxu0
        %631 = vmatprep.mubr.f32.mxu0 0.0
        %632 = vmatmul.mubr.f32.gmra.mrb[0].mxu0 %v356
        %v633 = vpop.f32.mrb[0].mxu0
        %v634 = vadd.f32 0.0, %v633
        %v635 = vpop.f32.mrb[0].mxu0
        %636 = vmatprep.mubr.f32.mxu0 0.0
        %637 = vmatmul.mubr.f32.gmra.mrb[0].mxu0 %v359
        %v638 = vpop.f32.mrb[0].mxu0
        %v639 = vadd.f32 0.0, %v638
        %v640 = vpop.f32.mrb[0].mxu0
        %641 = vmatprep.mubr.f32.mxu0 0.0
        %642 = vmatmul.mubr.f32.gmra.mrb[0].mxu0 %v362
        %v643 = vpop.f32.mrb[0].mxu0
        %v644 = vadd.f32 0.0, %v643
        %v645 = vpop.f32.mrb[0].mxu0
        %646 = vmatprep.mubr.f32.mxu0 0.0
        %647 = vmatmul.mubr.f32.gmra.mrb[0].mxu0 %v365
        %v648 = vpop.f32.mrb[0].mxu0
        %v649 = vadd.f32 0.0, %v648
        %v650 = vpop.f32.mrb[0].mxu0
        %651 = vmatprep.mubr.f32.mxu0 0.0
        %652 = vmatmul.mubr.f32.gmra.mrb[0].mxu0 %v368
        %v653 = vpop.f32.mrb[0].mxu0
        %v654 = vadd.f32 0.0, %v653
        %v655 = vpop.f32.mrb[0].mxu0
        %656 = vmatprep.mubr.f32.mxu0 0.0
        %657 = vmatmul.mubr.f32.gmra.mrb[0].mxu0 %v371
        %v658 = vpop.f32.mrb[0].mxu0
        %v659 = vadd.f32 0.0, %v658
        %v660 = vpop.f32.mrb[0].mxu0
        %661 = vmatprep.mubr.f32.mxu0 0.0
        %662 = vmatmul.mubr.f32.gmra.mrb[0].mxu0 %v374
        %v663 = vpop.f32.mrb[0].mxu0
        %v664 = vadd.f32 0.0, %v663
        %v665 = vpop.f32.mrb[0].mxu0
        %666 = vmatprep.mubr.f32.mxu0 0.0
        %667 = vmatmul.mubr.f32.gmra.mrb[0].mxu0 %v377
        %v668 = vpop.f32.mrb[0].mxu0
        %v669 = vadd.f32 0.0, %v668
        %v670 = vpop.f32.mrb[0].mxu0
        %671 = vmatprep.mubr.f32.mxu0 0.0
        %672 = vmatmul.mubr.f32.gmra.mrb[0].mxu0 %v380
        %v673 = vpop.f32.mrb[0].mxu0
        %v674 = vadd.f32 0.0, %v673
        %v675 = vpop.f32.mrb[0].mxu0
        %676 = vmatprep.mubr.f32.mxu0 0.0
        %677 = vmatmul.mubr.f32.gmra.mrb[0].mxu0 %v383
        %v678 = vpop.f32.mrb[0].mxu0
        %v679 = vadd.f32 0.0, %v678
        %v680 = vpop.f32.mrb[0].mxu0
        %681 = vmatprep.mubr.f32.mxu0 0.0
        %682 = vmatmul.mubr.f32.gmra.mrb[0].mxu0 %v386
        %v683 = vpop.f32.mrb[0].mxu0
        %v684 = vadd.f32 0.0, %v683
        %v685 = vpop.f32.mrb[0].mxu0
        %686 = vmatprep.mubr.f32.mxu0 0.0
        %687 = vmatmul.mubr.f32.gmra.mrb[0].mxu0 %v389
        %v688 = vpop.f32.mrb[0].mxu0
        %v689 = vadd.f32 0.0, %v688
        %v690 = vpop.f32.mrb[0].mxu0
        %691 = vmatprep.mubr.f32.mxu0 0.0
        %692 = vmatmul.mubr.f32.gmra.mrb[0].mxu0 %v392
        %v693 = vpop.f32.mrb[0].mxu0
        %v694 = vadd.f32 0.0, %v693
        %v695 = vpop.f32.mrb[0].mxu0
        %696 = vmatprep.mubr.f32.mxu0 0.0
        %697 = vmatmul.mubr.f32.gmra.mrb[0].mxu0 %v395
        %v698 = vpop.f32.mrb[0].mxu0
        %v699 = vadd.f32 0.0, %v698
        %v700 = vpop.f32.mrb[0].mxu0
        %701 = vmatprep.mubr.f32.mxu0 0.0
        %702 = vmatmul.mubr.f32.gmra.mrb[0].mxu0 %v398
        %v703 = vpop.f32.mrb[0].mxu0
        %v704 = vadd.f32 0.0, %v703
        %v705 = vpop.f32.mrb[0].mxu0
        %706 = vmatprep.mubr.f32.mxu0 0.0
        %707 = vmatmul.mubr.f32.gmra.mrb[0].mxu0 %v401
        %v708 = vpop.f32.mrb[0].mxu0
        %v709 = vadd.f32 0.0, %v708
        %v710 = vpop.f32.mrb[0].mxu0
        %711 = vmatprep.mubr.f32.mxu0 0.0
        %712 = vmatmul.mubr.f32.gmra.mrb[0].mxu0 %v404
        %v713 = vpop.f32.mrb[0].mxu0
        %v714 = vadd.f32 0.0, %v713
        %v715 = vpop.f32.mrb[0].mxu0
        %716 = vmatprep.mubr.f32.mxu0 0.0
        %717 = vmatmul.mubr.f32.gmra.mrb[0].mxu0 %v407
        %v718 = vpop.f32.mrb[0].mxu0
        %v719 = vadd.f32 0.0, %v718
        %v720 = vpop.f32.mrb[0].mxu0
        %721 = vmatprep.mubr.f32.mxu0 0.0
        %722 = vmatmul.mubr.f32.gmra.mrb[0].mxu0 %v410
        %v723 = vpop.f32.mrb[0].mxu0
        %v724 = vadd.f32 0.0, %v723
        %v725 = vpop.f32.mrb[0].mxu0
        %726 = vmatprep.mubr.f32.mxu0 0.0
        %727 = vmatmul.mubr.f32.gmra.mrb[0].mxu0 %v413
        %v728 = vpop.f32.mrb[0].mxu0
        %v729 = vadd.f32 0.0, %v728
        %v730 = vpop.f32.mrb[0].mxu0
        %731 = vmatprep.mubr.f32.mxu0 0.0
        %732 = vmatmul.mubr.f32.gmra.mrb[0].mxu0 %v416
        %v733 = vpop.f32.mrb[0].mxu0
        %v734 = vadd.f32 0.0, %v733
        %v735 = vpop.f32.mrb[0].mxu0
        %736 = vmatprep.mubr.f32.mxu0 0.0
        %737 = vmatmul.mubr.f32.gmra.mrb[0].mxu0 %v419
        %v738 = vpop.f32.mrb[0].mxu0
        %v739 = vadd.f32 0.0, %v738
        %v740 = vpop.f32.mrb[0].mxu0
        %741 = vmatprep.mubr.f32.mxu0 0.0
        %742 = vmatmul.mubr.f32.gmra.mrb[0].mxu0 %v422
        %v743 = vpop.f32.mrb[0].mxu0
        %v744 = vadd.f32 0.0, %v743
        %v745 = vpop.f32.mrb[0].mxu0
        %746 = vmatprep.mubr.f32.mxu0 0.0
        %747 = vmatmul.mubr.f32.gmra.mrb[0].mxu0 %v425
        %v748 = vpop.f32.mrb[0].mxu0
        %v749 = vadd.f32 0.0, %v748
        %v750 = vpop.f32.mrb[0].mxu0
        %751 = vmatprep.mubr.f32.mxu0 0.0
        %752 = vmatmul.mubr.f32.gmra.mrb[0].mxu0 %v428
        %v753 = vpop.f32.mrb[0].mxu0
        %v754 = vadd.f32 0.0, %v753
        %v755 = vpop.f32.mrb[0].mxu0
        %756 = vmatprep.mubr.f32.mxu0 0.0
        %757 = vmatmul.mubr.f32.gmra.mrb[0].mxu0 %v431
        %v758 = vpop.f32.mrb[0].mxu0
        %v759 = vadd.f32 0.0, %v758
        %v760 = vpop.f32.mrb[0].mxu0
        %761 = vmatprep.mubr.f32.mxu0 0.0
        %762 = vmatmul.mubr.f32.gmra.mrb[0].mxu0 %v434
        %v763 = vpop.f32.mrb[0].mxu0
        %v764 = vadd.f32 0.0, %v763
        %v765 = vpop.f32.mrb[0].mxu0
        %766 = vmatprep.mubr.f32.mxu0 0.0
        %767 = vmatmul.mubr.f32.gmra.mrb[0].mxu0 %v437
        %v768 = vpop.f32.mrb[0].mxu0
        %v769 = vadd.f32 0.0, %v768
        %v770 = vpop.f32.mrb[0].mxu0
        %771 = vmatprep.mubr.f32.mxu0 0.0
        %772 = vmatmul.mubr.f32.gmra.mrb[0].mxu0 %v440
        %v773 = vpop.f32.mrb[0].mxu0
        %v774 = vadd.f32 0.0, %v773
        %v775 = vpop.f32.mrb[0].mxu0
        %776 = vmatprep.mubr.f32.mxu0 0.0
        %777 = vmatmul.mubr.f32.gmra.mrb[0].mxu0 %v443
        %v778 = vpop.f32.mrb[0].mxu0
        %v779 = vadd.f32 0.0, %v778
        %v780 = vpop.f32.mrb[0].mxu0
        %781 = vmatprep.mubr.f32.mxu0 0.0
        %782 = vmatmul.mubr.f32.gmra.mrb[0].mxu0 %v446
        %v783 = vpop.f32.mrb[0].mxu0
        %v784 = vadd.f32 0.0, %v783
        %v785 = vpop.f32.mrb[0].mxu0
        %786 = vmatprep.mubr.f32.mxu0 0.0
        %787 = vmatmul.mubr.f32.gmra.mrb[0].mxu0 %v449
        %v788 = vpop.f32.mrb[0].mxu0
        %v789 = vadd.f32 0.0, %v788
        %v790 = vpop.f32.mrb[0].mxu0
        %791 = vmatprep.mubr.f32.mxu0 0.0
        %792 = vmatmul.mubr.f32.gmra.mrb[0].mxu0 %v452
        %v793 = vpop.f32.mrb[0].mxu0
        %v794 = vadd.f32 0.0, %v793
        %v795 = vpop.f32.mrb[0].mxu0
        %796 = vmatprep.mubr.f32.mxu0 0.0
        %797 = vmatmul.mubr.f32.gmra.mrb[0].mxu0 %v455
        %v798 = vpop.f32.mrb[0].mxu0
        %v799 = vadd.f32 0.0, %v798
        %v800 = vpop.f32.mrb[0].mxu0
        %801 = vmatprep.mubr.f32.mxu0 0.0
        %802 = vmatmul.mubr.f32.gmra.mrb[0].mxu0 %v458
        %v803 = vpop.f32.mrb[0].mxu0
        %v804 = vadd.f32 0.0, %v803
        %v805 = vpop.f32.mrb[0].mxu0
        %806 = vmatprep.mubr.f32.mxu0 0.0
        %807 = vmatmul.mubr.f32.gmra.mrb[0].mxu0 %v461
        %v808 = vpop.f32.mrb[0].mxu0
        %v809 = vadd.f32 0.0, %v808
        %v810 = vpop.f32.mrb[0].mxu0
        %811 = vmatprep.mubr.f32.mxu0 0.0
        %812 = vmatmul.mubr.f32.gmra.mrb[0].mxu0 %v464
        %v813 = vpop.f32.mrb[0].mxu0
        %v814 = vadd.f32 0.0, %v813
        %v815 = vpop.f32.mrb[0].mxu0
        %816 = vmatprep.mubr.f32.mxu0 0.0
        %817 = vmatmul.mubr.f32.gmra.mrb[0].mxu0 %v467
        %v818 = vpop.f32.mrb[0].mxu0
        %v819 = vadd.f32 0.0, %v818
        %v820 = vpop.f32.mrb[0].mxu0
        %821 = vmatprep.mubr.f32.mxu0 0.0
        %822 = vmatmul.mubr.f32.gmra.mrb[0].mxu0 %v470
        %v823 = vpop.f32.mrb[0].mxu0
        %v824 = vadd.f32 0.0, %v823
        %v825 = vpop.f32.mrb[0].mxu0
        %826 = vmatprep.mubr.f32.mxu0 0.0
        %827 = vmatmul.mubr.f32.gmra.mrb[0].mxu0 %v473
        %v828 = vpop.f32.mrb[0].mxu0
        %v829 = vadd.f32 0.0, %v828
        %v830 = vpop.f32.mrb[0].mxu0
        %831 = vmatprep.mubr.f32.mxu0 0.0
        %832 = vmatmul.mubr.f32.gmra.mrb[0].mxu0 %v476
        %v833 = vpop.f32.mrb[0].mxu0
        %v834 = vadd.f32 0.0, %v833
        %v835 = vpop.f32.mrb[0].mxu0
        %836 = vmatprep.mubr.f32.mxu0 0.0
        %837 = vmatmul.mubr.f32.gmra.mrb[0].mxu0 %v479
        %v838 = vpop.f32.mrb[0].mxu0
        %v839 = vadd.f32 0.0, %v838
        %v840 = vpop.f32.mrb[0].mxu0
        %841 = vmatprep.mubr.f32.mxu0 0.0
        %842 = vmatmul.mubr.f32.gmra.mrb[0].mxu0 %v482
        %v843 = vpop.f32.mrb[0].mxu0
        %v844 = vadd.f32 0.0, %v843
        %v845 = vpop.f32.mrb[0].mxu0
        %846 = vmatprep.mubr.f32.mxu0 0.0
        %847 = vmatmul.mubr.f32.gmra.mrb[0].mxu0 %v485
        %v848 = vpop.f32.mrb[0].mxu0
        %v849 = vadd.f32 0.0, %v848
        %v850 = vpop.f32.mrb[0].mxu0
        %851 = vmatprep.mubr.f32.mxu0 0.0
        %852 = vmatmul.mubr.f32.gmra.mrb[0].mxu0 %v488
        %v853 = vpop.f32.mrb[0].mxu0
        %v854 = vadd.f32 0.0, %v853
        %v855 = vpop.f32.mrb[0].mxu0
        %856 = vmatprep.mubr.f32.mxu0 0.0
        %857 = vmatmul.mubr.f32.gmra.mrb[0].mxu0 %v491
        %v858 = vpop.f32.mrb[0].mxu0
        %v859 = vadd.f32 0.0, %v858
        %v860 = vpop.f32.mrb[0].mxu0
        %861 = vmatprep.mubr.f32.mxu0 0.0
        %862 = vmatmul.mubr.f32.gmra.mrb[0].mxu0 %v494
        %v863 = vpop.f32.mrb[0].mxu0
        %v864 = vadd.f32 0.0, %v863
        %v865 = vpop.f32.mrb[0].mxu0
        %866 = vmatprep.mubr.f32.mxu0 0.0
        %867 = vmatmul.mubr.f32.gmra.mrb[0].mxu0 %v497
        %v868 = vpop.f32.mrb[0].mxu0
        %v869 = vadd.f32 0.0, %v868
        %v870 = vpop.f32.mrb[0].mxu0
        %871 = vmatprep.mubr.f32.mxu0 0.0
        %872 = vmatmul.mubr.f32.gmra.mrb[0].mxu0 %v500
        %v873 = vpop.f32.mrb[0].mxu0
        %v874 = vadd.f32 0.0, %v873
        %v875 = vpop.f32.mrb[0].mxu0
        %876 = vmatprep.mubr.f32.mxu0 0.0
        %877 = vmatmul.mubr.f32.gmra.mrb[0].mxu0 %v503
        %v878 = vpop.f32.mrb[0].mxu0
        %v879 = vadd.f32 0.0, %v878
        %v880 = vpop.f32.mrb[0].mxu0
        %881 = vmatprep.mubr.f32.mxu0 0.0
        %882 = vmatmul.mubr.f32.gmra.mrb[0].mxu0 %v506
        %v883 = vpop.f32.mrb[0].mxu0
        %v884 = vadd.f32 0.0, %v883
        %v885 = vpop.f32.mrb[0].mxu0
        %886 = vmatprep.mubr.f32.mxu0 0.0
        %887 = vmatmul.mubr.f32.gmra.mrb[0].mxu0 %v509
        %v888 = vpop.f32.mrb[0].mxu0
        %v889 = vadd.f32 0.0, %v888
        %v890 = vpop.f32.mrb[0].mxu0
        %891 = vmatprep.mubr.f32.mxu0 0.0
        %892 = vmatmul.mubr.f32.gmra.mrb[0].mxu0 %v512
        %v893 = vpop.f32.mrb[0].mxu0
        %v894 = vadd.f32 0.0, %v893
        %v895 = vpop.f32.mrb[0].mxu0
        %896 = vmatprep.mubr.f32.mxu0 0.0
        %897 = vmatmul.mubr.f32.gmra.mrb[0].mxu0 %v515
        %v898 = vpop.f32.mrb[0].mxu0
        %v899 = vadd.f32 0.0, %v898
        %v900 = vpop.f32.mrb[0].mxu0
        %901 = vdwg.mxu0
        %v902 = vmul.f32 %v584, %v258
        %v903 = vmul.f32 %v589, %v259
        %v904 = vmul.f32 %v594, %v258
        %v905 = vmul.f32 %v599, %v259
        %v906 = vmul.f32 %v604, %v258
        %v907 = vmul.f32 %v609, %v259
        %v908 = vmul.f32 %v614, %v258
        %v909 = vmul.f32 %v619, %v259
        %v910 = vmul.f32 %v624, %v258
        %v911 = vmul.f32 %v629, %v259
        %v912 = vmul.f32 %v634, %v258
        %v913 = vmul.f32 %v639, %v259
        %v914 = vmul.f32 %v644, %v258
        %v915 = vmul.f32 %v649, %v259
        %v916 = vmul.f32 %v654, %v258
        %v917 = vmul.f32 %v659, %v259
        %v918 = vmul.f32 %v664, %v258
        %v919 = vmul.f32 %v669, %v259
        %v920 = vmul.f32 %v674, %v258
        %v921 = vmul.f32 %v679, %v259
        %v922 = vmul.f32 %v684, %v258
        %v923 = vmul.f32 %v689, %v259
        %v924 = vmul.f32 %v694, %v258
        %v925 = vmul.f32 %v699, %v259
        %v926 = vmul.f32 %v704, %v258
        %v927 = vmul.f32 %v709, %v259
        %v928 = vmul.f32 %v714, %v258
        %v929 = vmul.f32 %v719, %v259
        %v930 = vmul.f32 %v724, %v258
        %v931 = vmul.f32 %v729, %v259
        %v932 = vmul.f32 %v734, %v258
        %v933 = vmul.f32 %v739, %v259
        %v934 = vmul.f32 %v744, %v258
        %v935 = vmul.f32 %v749, %v259
        %v936 = vmul.f32 %v754, %v258
        %v937 = vmul.f32 %v759, %v259
        %v938 = vmul.f32 %v764, %v258
        %v939 = vmul.f32 %v769, %v259
        %v940 = vmul.f32 %v774, %v258
        %v941 = vmul.f32 %v779, %v259
        %v942 = vmul.f32 %v784, %v258
        %v943 = vmul.f32 %v789, %v259
        %v944 = vmul.f32 %v794, %v258
        %v945 = vmul.f32 %v799, %v259
        %v946 = vmul.f32 %v804, %v258
        %v947 = vmul.f32 %v809, %v259
        %v948 = vmul.f32 %v814, %v258
        %v949 = vmul.f32 %v819, %v259
        %v950 = vmul.f32 %v824, %v258
        %v951 = vmul.f32 %v829, %v259
        %v952 = vmul.f32 %v834, %v258
        %v953 = vmul.f32 %v839, %v259
        %v954 = vmul.f32 %v844, %v258
        %v955 = vmul.f32 %v849, %v259
        %v956 = vmul.f32 %v854, %v258
        %v957 = vmul.f32 %v859, %v259
        %v958 = vmul.f32 %v864, %v258
        %v959 = vmul.f32 %v869, %v259
        %v960 = vmul.f32 %v874, %v258
        %v961 = vmul.f32 %v879, %v259
        %v962 = vmul.f32 %v884, %v258
        %v963 = vmul.f32 %v889, %v259
        %v964 = vmul.f32 %v894, %v258
        %v965 = vmul.f32 %v899, %v259
        %v966 = vadd.f32 %v902, %v903
        %v967 = vrot.slane %v966, 4
        %v968 = vadd.f32 %v966, %v967
        %v969 = vrot.slane %v968, 2
        %v970 = vadd.f32 %v968, %v969
        %v971 = vrot.slane %v970, 1
        %v972 = vadd.f32 %v970, %v971
        %v973 = vadd.f32 %v904, %v905
        %v974 = vrot.slane %v973, 4
        %v975 = vadd.f32 %v973, %v974
        %v976 = vrot.slane %v975, 2
        %v977 = vadd.f32 %v975, %v976
        %v978 = vrot.slane %v977, 1
        %v979 = vadd.f32 %v977, %v978
        %v980 = vadd.f32 %v906, %v907
        %v981 = vrot.slane %v980, 4
        %v982 = vadd.f32 %v980, %v981
        %v983 = vrot.slane %v982, 2
        %v984 = vadd.f32 %v982, %v983
        %v985 = vrot.slane %v984, 1
        %v986 = vadd.f32 %v984, %v985
        %v987 = vadd.f32 %v908, %v909
        %v988 = vrot.slane %v987, 4
        %v989 = vadd.f32 %v987, %v988
        %v990 = vrot.slane %v989, 2
        %v991 = vadd.f32 %v989, %v990
        %v992 = vrot.slane %v991, 1
        %v993 = vadd.f32 %v991, %v992
        %v994 = vadd.f32 %v910, %v911
        %v995 = vrot.slane %v994, 4
        %v996 = vadd.f32 %v994, %v995
        %v997 = vrot.slane %v996, 2
        %v998 = vadd.f32 %v996, %v997
        %v999 = vrot.slane %v998, 1
        %v1000 = vadd.f32 %v998, %v999
        %v1001 = vadd.f32 %v912, %v913
        %v1002 = vrot.slane %v1001, 4
        %v1003 = vadd.f32 %v1001, %v1002
        %v1004 = vrot.slane %v1003, 2
        %v1005 = vadd.f32 %v1003, %v1004
        %v1006 = vrot.slane %v1005, 1
        %v1007 = vadd.f32 %v1005, %v1006
        %v1008 = vadd.f32 %v914, %v915
        %v1009 = vrot.slane %v1008, 4
        %v1010 = vadd.f32 %v1008, %v1009
        %v1011 = vrot.slane %v1010, 2
        %v1012 = vadd.f32 %v1010, %v1011
        %v1013 = vrot.slane %v1012, 1
        %v1014 = vadd.f32 %v1012, %v1013
        %v1015 = vadd.f32 %v916, %v917
        %v1016 = vrot.slane %v1015, 4
        %v1017 = vadd.f32 %v1015, %v1016
        %v1018 = vrot.slane %v1017, 2
        %v1019 = vadd.f32 %v1017, %v1018
        %v1020 = vrot.slane %v1019, 1
        %v1021 = vadd.f32 %v1019, %v1020
        %v1022 = vadd.f32 %v918, %v919
        %v1023 = vrot.slane %v1022, 4
        %v1024 = vadd.f32 %v1022, %v1023
        %v1025 = vrot.slane %v1024, 2
        %v1026 = vadd.f32 %v1024, %v1025
        %v1027 = vrot.slane %v1026, 1
        %v1028 = vadd.f32 %v1026, %v1027
        %v1029 = vadd.f32 %v920, %v921
        %v1030 = vrot.slane %v1029, 4
        %v1031 = vadd.f32 %v1029, %v1030
        %v1032 = vrot.slane %v1031, 2
        %v1033 = vadd.f32 %v1031, %v1032
        %v1034 = vrot.slane %v1033, 1
        %v1035 = vadd.f32 %v1033, %v1034
        %v1036 = vadd.f32 %v922, %v923
        %v1037 = vrot.slane %v1036, 4
        %v1038 = vadd.f32 %v1036, %v1037
        %v1039 = vrot.slane %v1038, 2
        %v1040 = vadd.f32 %v1038, %v1039
        %v1041 = vrot.slane %v1040, 1
        %v1042 = vadd.f32 %v1040, %v1041
        %v1043 = vadd.f32 %v924, %v925
        %v1044 = vrot.slane %v1043, 4
        %v1045 = vadd.f32 %v1043, %v1044
        %v1046 = vrot.slane %v1045, 2
        %v1047 = vadd.f32 %v1045, %v1046
        %v1048 = vrot.slane %v1047, 1
        %v1049 = vadd.f32 %v1047, %v1048
        %v1050 = vadd.f32 %v926, %v927
        %v1051 = vrot.slane %v1050, 4
        %v1052 = vadd.f32 %v1050, %v1051
        %v1053 = vrot.slane %v1052, 2
        %v1054 = vadd.f32 %v1052, %v1053
        %v1055 = vrot.slane %v1054, 1
        %v1056 = vadd.f32 %v1054, %v1055
        %v1057 = vadd.f32 %v928, %v929
        %v1058 = vrot.slane %v1057, 4
        %v1059 = vadd.f32 %v1057, %v1058
        %v1060 = vrot.slane %v1059, 2
        %v1061 = vadd.f32 %v1059, %v1060
        %v1062 = vrot.slane %v1061, 1
        %v1063 = vadd.f32 %v1061, %v1062
        %v1064 = vadd.f32 %v930, %v931
        %v1065 = vrot.slane %v1064, 4
        %v1066 = vadd.f32 %v1064, %v1065
        %v1067 = vrot.slane %v1066, 2
        %v1068 = vadd.f32 %v1066, %v1067
        %v1069 = vrot.slane %v1068, 1
        %v1070 = vadd.f32 %v1068, %v1069
        %v1071 = vadd.f32 %v932, %v933
        %v1072 = vrot.slane %v1071, 4
        %v1073 = vadd.f32 %v1071, %v1072
        %v1074 = vrot.slane %v1073, 2
        %v1075 = vadd.f32 %v1073, %v1074
        %v1076 = vrot.slane %v1075, 1
        %v1077 = vadd.f32 %v1075, %v1076
        %v1078 = vadd.f32 %v934, %v935
        %v1079 = vrot.slane %v1078, 4
        %v1080 = vadd.f32 %v1078, %v1079
        %v1081 = vrot.slane %v1080, 2
        %v1082 = vadd.f32 %v1080, %v1081
        %v1083 = vrot.slane %v1082, 1
        %v1084 = vadd.f32 %v1082, %v1083
        %v1085 = vadd.f32 %v936, %v937
        %v1086 = vrot.slane %v1085, 4
        %v1087 = vadd.f32 %v1085, %v1086
        %v1088 = vrot.slane %v1087, 2
        %v1089 = vadd.f32 %v1087, %v1088
        %v1090 = vrot.slane %v1089, 1
        %v1091 = vadd.f32 %v1089, %v1090
        %v1092 = vadd.f32 %v938, %v939
        %v1093 = vrot.slane %v1092, 4
        %v1094 = vadd.f32 %v1092, %v1093
        %v1095 = vrot.slane %v1094, 2
        %v1096 = vadd.f32 %v1094, %v1095
        %v1097 = vrot.slane %v1096, 1
        %v1098 = vadd.f32 %v1096, %v1097
        %v1099 = vadd.f32 %v940, %v941
        %v1100 = vrot.slane %v1099, 4
        %v1101 = vadd.f32 %v1099, %v1100
        %v1102 = vrot.slane %v1101, 2
        %v1103 = vadd.f32 %v1101, %v1102
        %v1104 = vrot.slane %v1103, 1
        %v1105 = vadd.f32 %v1103, %v1104
        %v1106 = vadd.f32 %v942, %v943
        %v1107 = vrot.slane %v1106, 4
        %v1108 = vadd.f32 %v1106, %v1107
        %v1109 = vrot.slane %v1108, 2
        %v1110 = vadd.f32 %v1108, %v1109
        %v1111 = vrot.slane %v1110, 1
        %v1112 = vadd.f32 %v1110, %v1111
        %v1113 = vadd.f32 %v944, %v945
        %v1114 = vrot.slane %v1113, 4
        %v1115 = vadd.f32 %v1113, %v1114
        %v1116 = vrot.slane %v1115, 2
        %v1117 = vadd.f32 %v1115, %v1116
        %v1118 = vrot.slane %v1117, 1
        %v1119 = vadd.f32 %v1117, %v1118
        %v1120 = vadd.f32 %v946, %v947
        %v1121 = vrot.slane %v1120, 4
        %v1122 = vadd.f32 %v1120, %v1121
        %v1123 = vrot.slane %v1122, 2
        %v1124 = vadd.f32 %v1122, %v1123
        %v1125 = vrot.slane %v1124, 1
        %v1126 = vadd.f32 %v1124, %v1125
        %v1127 = vadd.f32 %v948, %v949
        %v1128 = vrot.slane %v1127, 4
        %v1129 = vadd.f32 %v1127, %v1128
        %v1130 = vrot.slane %v1129, 2
        %v1131 = vadd.f32 %v1129, %v1130
        %v1132 = vrot.slane %v1131, 1
        %v1133 = vadd.f32 %v1131, %v1132
        %v1134 = vadd.f32 %v950, %v951
        %v1135 = vrot.slane %v1134, 4
        %v1136 = vadd.f32 %v1134, %v1135
        %v1137 = vrot.slane %v1136, 2
        %v1138 = vadd.f32 %v1136, %v1137
        %v1139 = vrot.slane %v1138, 1
        %v1140 = vadd.f32 %v1138, %v1139
        %v1141 = vadd.f32 %v952, %v953
        %v1142 = vrot.slane %v1141, 4
        %v1143 = vadd.f32 %v1141, %v1142
        %v1144 = vrot.slane %v1143, 2
        %v1145 = vadd.f32 %v1143, %v1144
        %v1146 = vrot.slane %v1145, 1
        %v1147 = vadd.f32 %v1145, %v1146
        %v1148 = vadd.f32 %v954, %v955
        %v1149 = vrot.slane %v1148, 4
        %v1150 = vadd.f32 %v1148, %v1149
        %v1151 = vrot.slane %v1150, 2
        %v1152 = vadd.f32 %v1150, %v1151
        %v1153 = vrot.slane %v1152, 1
        %v1154 = vadd.f32 %v1152, %v1153
        %v1155 = vadd.f32 %v956, %v957
        %v1156 = vrot.slane %v1155, 4
        %v1157 = vadd.f32 %v1155, %v1156
        %v1158 = vrot.slane %v1157, 2
        %v1159 = vadd.f32 %v1157, %v1158
        %v1160 = vrot.slane %v1159, 1
        %v1161 = vadd.f32 %v1159, %v1160
        %v1162 = vadd.f32 %v958, %v959
        %v1163 = vrot.slane %v1162, 4
        %v1164 = vadd.f32 %v1162, %v1163
        %v1165 = vrot.slane %v1164, 2
        %v1166 = vadd.f32 %v1164, %v1165
        %v1167 = vrot.slane %v1166, 1
        %v1168 = vadd.f32 %v1166, %v1167
        %v1169 = vadd.f32 %v960, %v961
        %v1170 = vrot.slane %v1169, 4
        %v1171 = vadd.f32 %v1169, %v1170
        %v1172 = vrot.slane %v1171, 2
        %v1173 = vadd.f32 %v1171, %v1172
        %v1174 = vrot.slane %v1173, 1
        %v1175 = vadd.f32 %v1173, %v1174
        %v1176 = vadd.f32 %v962, %v963
        %v1177 = vrot.slane %v1176, 4
        %v1178 = vadd.f32 %v1176, %v1177
        %v1179 = vrot.slane %v1178, 2
        %v1180 = vadd.f32 %v1178, %v1179
        %v1181 = vrot.slane %v1180, 1
        %v1182 = vadd.f32 %v1180, %v1181
        %v1183 = vadd.f32 %v964, %v965
        %v1184 = vrot.slane %v1183, 4
        %v1185 = vadd.f32 %v1183, %v1184
        %v1186 = vrot.slane %v1185, 2
        %v1187 = vadd.f32 %v1185, %v1186
        %v1188 = vrot.slane %v1187, 1
        %v1189 = vadd.f32 %v1187, %v1188
        %vm1222 = vcmask 1041409
        %v1223 = vsel %vm1222, %v979, %v972
        %vm1224 = vcmask 1042434
        %v1225 = vsel %vm1224, %v986, %v1223
        %vm1226 = vcmask 1043459
        %v1227 = vsel %vm1226, %v993, %v1225
        %vm1228 = vcmask 1044484
        %v1229 = vsel %vm1228, %v1000, %v1227
        %vm1230 = vcmask 1045509
        %v1231 = vsel %vm1230, %v1007, %v1229
        %vm1232 = vcmask 1046534
        %v1233 = vsel %vm1232, %v1014, %v1231
        %vm1234 = vcmask 1047559
        %v1235 = vsel %vm1234, %v1021, %v1233
        %v1236 = vsel %vm1222, %v1035, %v1028
        %v1237 = vsel %vm1224, %v1042, %v1236
        %v1238 = vsel %vm1226, %v1049, %v1237
        %v1239 = vsel %vm1228, %v1056, %v1238
        %v1240 = vsel %vm1230, %v1063, %v1239
        %v1241 = vsel %vm1232, %v1070, %v1240
        %v1242 = vsel %vm1234, %v1077, %v1241
        %v1243 = vsel %vm1222, %v1091, %v1084
        %v1244 = vsel %vm1224, %v1098, %v1243
        %v1245 = vsel %vm1226, %v1105, %v1244
        %v1246 = vsel %vm1228, %v1112, %v1245
        %v1247 = vsel %vm1230, %v1119, %v1246
        %v1248 = vsel %vm1232, %v1126, %v1247
        %v1249 = vsel %vm1234, %v1133, %v1248
        %v1250 = vsel %vm1222, %v1147, %v1140
        %v1251 = vsel %vm1224, %v1154, %v1250
        %v1252 = vsel %vm1226, %v1161, %v1251
        %v1253 = vsel %vm1228, %v1168, %v1252
        %v1254 = vsel %vm1230, %v1175, %v1253
        %v1255 = vsel %vm1232, %v1182, %v1254
        %v1256 = vsel %vm1234, %v1189, %v1255
        %1261 = vst [vmem:[%s173] sm:$0xff] %v1235
        %1262 = vst [vmem:[%s173 + $0x8] sm:$0xff] %v1242
        %1263 = vst [vmem:[%s173 + $0x10] sm:$0xff] %v1249
        %1264 = vst [vmem:[%s173 + $0x18] sm:$0xff] %v1256
        %s1265 = scalar_lea.vmem %s181, 2
        %v1266 = vld [vmem:[%s1265] sm:$0x3]
        %v1267 = vmul.f32 %v1266, %v191
        %v1268 = vadd.f32 %v1267, 0.5
        %vm1269 = vcmp.ge.f32.partialorder %v1268, 1.0
        %v1270 = vsel %vm1269, 0.99999, %v1268
        %vm1271 = vcmp.lt.f32.partialorder %v1270, 0.0
        %v1272 = vsel %vm1271, 0.0, %v1270
        %v1273 = vmul.f32 %v1272, 15.0
        %v1274 = vmax.f32 %v1273, 0.0
        %v1275 = vmin.f32 %v1274, 15.0
        %v1276 = vfloor.f32 %v1275
        %v1277 = vsub.f32 %v1275, %v1276
        %v1278 = vcvt.f32.s32.to.zero.pseudo %v1276
        %v1279 = vadd.s32 %v1278, 1
        %vm1280 = vcmp.lt.s32.totalorder %v1279, 15
        %v1281 = vsel %vm1280, %v1279, 15
        %v1282 = vlaneseq
        %v1283 = vshrl.u32 %v1282, 7
        %v1284 = vsub.s32 0, %v1283
        %v1285 = vrot.slane %v1278, %v1284
        %vm1286 = vcmp.eq.s32.totalorder %v188, %v1285
        %vm1287 = vcmp.eq.s32.totalorder %v189, %v1285
        %v1288 = vsub.f32 1.0, %v1277
        %v1289 = vlaneseq
        %v1290 = vshrl.u32 %v1289, 7
        %v1291 = vsub.s32 0, %v1290
        %v1292 = vrot.slane %v1288, %v1291
        %v1293 = vsel %vm1286, %v1292, 0.0
        %v1294 = vsel %vm1287, %v1292, 0.0
        %v1295 = vlaneseq
        %v1296 = vshrl.u32 %v1295, 7
        %v1297 = vsub.s32 0, %v1296
        %v1298 = vrot.slane %v1281, %v1297
        %vm1299 = vcmp.eq.s32.totalorder %v188, %v1298
        %vm1300 = vcmp.eq.s32.totalorder %v189, %v1298
        %v1301 = vlaneseq
        %v1302 = vshrl.u32 %v1301, 7
        %v1303 = vsub.s32 0, %v1302
        %v1304 = vrot.slane %v1277, %v1303
        %v1305 = vsel %vm1299, %v1304, 0.0
        %v1306 = vsel %vm1300, %v1304, 0.0
        %v1307 = vadd.f32 %v1293, %v1305
        %v1308 = vadd.f32 %v1294, %v1306
        %v1309 = vlaneseq
        %v1310 = vshrl.u32 %v1309, 7
        %v1311 = vsub.s32 1, %v1310
        %v1312 = vrot.slane %v1278, %v1311
        %vm1313 = vcmp.eq.s32.totalorder %v188, %v1312
        %vm1314 = vcmp.eq.s32.totalorder %v189, %v1312
        %v1315 = vlaneseq
        %v1316 = vshrl.u32 %v1315, 7
        %v1317 = vsub.s32 1, %v1316
        %v1318 = vrot.slane %v1288, %v1317
        %v1319 = vsel %vm1313, %v1318, 0.0
        %v1320 = vsel %vm1314, %v1318, 0.0
        %v1321 = vlaneseq
        %v1322 = vshrl.u32 %v1321, 7
        %v1323 = vsub.s32 1, %v1322
        %v1324 = vrot.slane %v1281, %v1323
        %vm1325 = vcmp.eq.s32.totalorder %v188, %v1324
        %vm1326 = vcmp.eq.s32.totalorder %v189, %v1324
        %v1327 = vlaneseq
        %v1328 = vshrl.u32 %v1327, 7
        %v1329 = vsub.s32 1, %v1328
        %v1330 = vrot.slane %v1277, %v1329
        %v1331 = vsel %vm1325, %v1330, 0.0
        %v1332 = vsel %vm1326, %v1330, 0.0
        %v1333 = vadd.f32 %v1319, %v1331
        %v1334 = vadd.f32 %v1320, %v1332
        %s1335 = scalar_lea.vmem %s186, 512
        %v1336 = vld [vmem:[%s1335] sm:$0xff]
        %v1337 = vld [vmem:[%s1335 + $0x8] sm:$0xff]
        %v1338 = vld [vmem:[%s1335 + $0x10] sm:$0xff]
        %v1339 = vld [vmem:[%s1335 + $0x18] sm:$0xff]
        %v1340 = vld [vmem:[%s1335 + $0x20] sm:$0xff]
        %v1341 = vld [vmem:[%s1335 + $0x28] sm:$0xff]
        %v1342 = vld [vmem:[%s1335 + $0x30] sm:$0xff]
        %v1343 = vld [vmem:[%s1335 + $0x38] sm:$0xff]
        %v1344 = vld [vmem:[%s1335 + $0x40] sm:$0xff]
        %v1345 = vld [vmem:[%s1335 + $0x48] sm:$0xff]
        %v1346 = vld [vmem:[%s1335 + $0x50] sm:$0xff]
        %v1347 = vld [vmem:[%s1335 + $0x58] sm:$0xff]
        %v1348 = vld [vmem:[%s1335 + $0x60] sm:$0xff]
        %v1349 = vld [vmem:[%s1335 + $0x68] sm:$0xff]
        %v1350 = vld [vmem:[%s1335 + $0x70] sm:$0xff]
        %v1351 = vld [vmem:[%s1335 + $0x78] sm:$0xff]
        %v1352 = vld [vmem:[%s1335 + $0x80] sm:$0xff]
        %v1353 = vld [vmem:[%s1335 + $0x88] sm:$0xff]
        %v1354 = vld [vmem:[%s1335 + $0x90] sm:$0xff]
        %v1355 = vld [vmem:[%s1335 + $0x98] sm:$0xff]
        %v1356 = vld [vmem:[%s1335 + $0xa0] sm:$0xff]
        %v1357 = vld [vmem:[%s1335 + $0xa8] sm:$0xff]
        %v1358 = vld [vmem:[%s1335 + $0xb0] sm:$0xff]
        %v1359 = vld [vmem:[%s1335 + $0xb8] sm:$0xff]
        %v1360 = vld [vmem:[%s1335 + $0xc0] sm:$0xff]
        %v1361 = vld [vmem:[%s1335 + $0xc8] sm:$0xff]
        %v1362 = vld [vmem:[%s1335 + $0xd0] sm:$0xff]
        %v1363 = vld [vmem:[%s1335 + $0xd8] sm:$0xff]
        %v1364 = vld [vmem:[%s1335 + $0xe0] sm:$0xff]
        %v1365 = vld [vmem:[%s1335 + $0xe8] sm:$0xff]
        %v1366 = vld [vmem:[%s1335 + $0xf0] sm:$0xff]
        %v1367 = vld [vmem:[%s1335 + $0xf8] sm:$0xff]
        %v1368 = vld [vmem:[%s1335 + $0x100] sm:$0xff]
        %v1369 = vld [vmem:[%s1335 + $0x108] sm:$0xff]
        %v1370 = vld [vmem:[%s1335 + $0x110] sm:$0xff]
        %v1371 = vld [vmem:[%s1335 + $0x118] sm:$0xff]
        %v1372 = vld [vmem:[%s1335 + $0x120] sm:$0xff]
        %v1373 = vld [vmem:[%s1335 + $0x128] sm:$0xff]
        %v1374 = vld [vmem:[%s1335 + $0x130] sm:$0xff]
        %v1375 = vld [vmem:[%s1335 + $0x138] sm:$0xff]
        %v1376 = vld [vmem:[%s1335 + $0x140] sm:$0xff]
        %v1377 = vld [vmem:[%s1335 + $0x148] sm:$0xff]
        %v1378 = vld [vmem:[%s1335 + $0x150] sm:$0xff]
        %v1379 = vld [vmem:[%s1335 + $0x158] sm:$0xff]
        %v1380 = vld [vmem:[%s1335 + $0x160] sm:$0xff]
        %v1381 = vld [vmem:[%s1335 + $0x168] sm:$0xff]
        %v1382 = vld [vmem:[%s1335 + $0x170] sm:$0xff]
        %v1383 = vld [vmem:[%s1335 + $0x178] sm:$0xff]
        %v1384 = vld [vmem:[%s1335 + $0x180] sm:$0xff]
        %v1385 = vld [vmem:[%s1335 + $0x188] sm:$0xff]
        %v1386 = vld [vmem:[%s1335 + $0x190] sm:$0xff]
        %v1387 = vld [vmem:[%s1335 + $0x198] sm:$0xff]
        %v1388 = vld [vmem:[%s1335 + $0x1a0] sm:$0xff]
        %v1389 = vld [vmem:[%s1335 + $0x1a8] sm:$0xff]
        %v1390 = vld [vmem:[%s1335 + $0x1b0] sm:$0xff]
        %v1391 = vld [vmem:[%s1335 + $0x1b8] sm:$0xff]
        %v1392 = vld [vmem:[%s1335 + $0x1c0] sm:$0xff]
        %v1393 = vld [vmem:[%s1335 + $0x1c8] sm:$0xff]
        %v1394 = vld [vmem:[%s1335 + $0x1d0] sm:$0xff]
        %v1395 = vld [vmem:[%s1335 + $0x1d8] sm:$0xff]
        %v1396 = vld [vmem:[%s1335 + $0x1e0] sm:$0xff]
        %v1397 = vld [vmem:[%s1335 + $0x1e8] sm:$0xff]
        %v1398 = vld [vmem:[%s1335 + $0x1f0] sm:$0xff]
        %v1399 = vld [vmem:[%s1335 + $0x1f8] sm:$0xff]
        %v1401 = vsel %vm324, %v1336, 0
        %v1404 = vsel %vm324, %v1337, 0
        %v1407 = vsel %vm324, %v1338, 0
        %v1410 = vsel %vm324, %v1339, 0
        %v1413 = vsel %vm324, %v1340, 0
        %v1416 = vsel %vm324, %v1341, 0
        %v1419 = vsel %vm324, %v1342, 0
        %v1422 = vsel %vm324, %v1343, 0
        %v1425 = vsel %vm324, %v1344, 0
        %v1428 = vsel %vm324, %v1345, 0
        %v1431 = vsel %vm324, %v1346, 0
        %v1434 = vsel %vm324, %v1347, 0
        %v1437 = vsel %vm324, %v1348, 0
        %v1440 = vsel %vm324, %v1349, 0
        %v1443 = vsel %vm324, %v1350, 0
        %v1446 = vsel %vm324, %v1351, 0
        %v1449 = vsel %vm324, %v1352, 0
        %v1452 = vsel %vm324, %v1353, 0
        %v1455 = vsel %vm324, %v1354, 0
        %v1458 = vsel %vm324, %v1355, 0
        %v1461 = vsel %vm324, %v1356, 0
        %v1464 = vsel %vm324, %v1357, 0
        %v1467 = vsel %vm324, %v1358, 0
        %v1470 = vsel %vm324, %v1359, 0
        %v1473 = vsel %vm324, %v1360, 0
        %v1476 = vsel %vm324, %v1361, 0
        %v1479 = vsel %vm324, %v1362, 0
        %v1482 = vsel %vm324, %v1363, 0
        %v1485 = vsel %vm324, %v1364, 0
        %v1488 = vsel %vm324, %v1365, 0
        %v1491 = vsel %vm324, %v1366, 0
        %v1494 = vsel %vm324, %v1367, 0
        %v1497 = vsel %vm324, %v1368, 0
        %v1500 = vsel %vm324, %v1369, 0
        %v1503 = vsel %vm324, %v1370, 0
        %v1506 = vsel %vm324, %v1371, 0
        %v1509 = vsel %vm324, %v1372, 0
        %v1512 = vsel %vm324, %v1373, 0
        %v1515 = vsel %vm324, %v1374, 0
        %v1518 = vsel %vm324, %v1375, 0
        %v1521 = vsel %vm324, %v1376, 0
        %v1524 = vsel %vm324, %v1377, 0
        %v1527 = vsel %vm324, %v1378, 0
        %v1530 = vsel %vm324, %v1379, 0
        %v1533 = vsel %vm324, %v1380, 0
        %v1536 = vsel %vm324, %v1381, 0
        %v1539 = vsel %vm324, %v1382, 0
        %v1542 = vsel %vm324, %v1383, 0
        %v1545 = vsel %vm324, %v1384, 0
        %v1548 = vsel %vm324, %v1385, 0
        %v1551 = vsel %vm324, %v1386, 0
        %v1554 = vsel %vm324, %v1387, 0
        %v1557 = vsel %vm324, %v1388, 0
        %v1560 = vsel %vm324, %v1389, 0
        %v1563 = vsel %vm324, %v1390, 0
        %v1566 = vsel %vm324, %v1391, 0
        %v1569 = vsel %vm324, %v1392, 0
        %v1572 = vsel %vm324, %v1393, 0
        %v1575 = vsel %vm324, %v1394, 0
        %v1578 = vsel %vm324, %v1395, 0
        %v1581 = vsel %vm324, %v1396, 0
        %v1584 = vsel %vm324, %v1397, 0
        %v1587 = vsel %vm324, %v1398, 0
        %v1590 = vsel %vm324, %v1399, 0
        %1592 = vmatprep.subr.mxu0 0.0
        %1593 = vmatpush1.msra.mxu0 %v1307
        %1594 = vmatprep.subr.mxu0 0.0
        %1595 = vmatpush1.msra.mxu0 %v1308
        %1596 = vmatprep.subr.mxu0 0.0
        %1597 = vmatpush1.msra.mxu0 0.0
        %1598 = vmatprep.subr.mxu0 0.0
        %1599 = vmatpush1.msra.mxu0 0.0
        %1600 = vmatprep.subr.mxu0 0.0
        %1601 = vmatpush1.msra.mxu0 0.0
        %1602 = vmatprep.subr.mxu0 0.0
        %1603 = vmatpush1.msra.mxu0 0.0
        %1604 = vmatprep.subr.mxu0 0.0
        %1605 = vmatpush1.msra.mxu0 0.0
        %1606 = vmatprep.subr.mxu0 0.0
        %1607 = vmatpush1.msra.mxu0 0.0
        %1608 = vmatprep.subr.mxu0 0.0
        %1609 = vmatpush1.msra.mxu0 0.0
        %1610 = vmatprep.subr.mxu0 0.0
        %1611 = vmatpush1.msra.mxu0 0.0
        %1612 = vmatprep.subr.mxu0 0.0
        %1613 = vmatpush1.msra.mxu0 0.0
        %1614 = vmatprep.subr.mxu0 0.0
        %1615 = vmatpush1.msra.mxu0 0.0
        %1616 = vmatprep.subr.mxu0 0.0
        %1617 = vmatpush1.msra.mxu0 0.0
        %1618 = vmatprep.subr.mxu0 0.0
        %1619 = vmatpush1.msra.mxu0 0.0
        %1620 = vmatprep.subr.mxu0 0.0
        %1621 = vmatpush1.msra.mxu0 0.0
        %1622 = vmatprep.subr.mxu0 0.0
        %1623 = vmatpush1.msra.mxu0 0.0
        %1624 = vmatprep.subr.mxu0 0.0
        %1625 = vmatpush1.msra.mxu0 0.0
        %1626 = vmatprep.subr.mxu0 0.0
        %1627 = vmatpush1.msra.mxu0 0.0
        %1628 = vmatprep.subr.mxu0 0.0
        %1629 = vmatpush1.msra.mxu0 0.0
        %1630 = vmatprep.subr.mxu0 0.0
        %1631 = vmatpush1.msra.mxu0 0.0
        %1632 = vmatprep.subr.mxu0 0.0
        %1633 = vmatpush1.msra.mxu0 0.0
        %1634 = vmatprep.subr.mxu0 0.0
        %1635 = vmatpush1.msra.mxu0 0.0
        %1636 = vmatprep.subr.mxu0 0.0
        %1637 = vmatpush1.msra.mxu0 0.0
        %1638 = vmatprep.subr.mxu0 0.0
        %1639 = vmatpush1.msra.mxu0 0.0
        %1640 = vmatprep.subr.mxu0 0.0
        %1641 = vmatpush1.msra.mxu0 0.0
        %1642 = vmatprep.subr.mxu0 0.0
        %1643 = vmatpush1.msra.mxu0 0.0
        %1644 = vmatprep.subr.mxu0 0.0
        %1645 = vmatpush1.msra.mxu0 0.0
        %1646 = vmatprep.subr.mxu0 0.0
        %1647 = vmatpush1.msra.mxu0 0.0
        %1648 = vmatprep.subr.mxu0 0.0
        %1649 = vmatpush1.msra.mxu0 0.0
        %1650 = vmatprep.subr.mxu0 0.0
        %1651 = vmatpush1.msra.mxu0 0.0
        %1652 = vmatprep.subr.mxu0 0.0
        %1653 = vmatpush1.msra.mxu0 0.0
        %1654 = vmatprep.subr.mxu0 0.0
        %1655 = vmatpush1.msra.mxu0 0.0
        %1656 = vmatprep.mubr.f32.mxu0 0.0
        %1657 = vmatmul.mubr.f32.gmra.mrb[0].mxu0 %v1401
        %v1658 = vpop.f32.mrb[0].mxu0
        %v1659 = vadd.f32 0.0, %v1658
        %v1660 = vpop.f32.mrb[0].mxu0
        %1661 = vmatprep.mubr.f32.mxu0 0.0
        %1662 = vmatmul.mubr.f32.gmra.mrb[0].mxu0 %v1404
        %v1663 = vpop.f32.mrb[0].mxu0
        %v1664 = vadd.f32 0.0, %v1663
        %v1665 = vpop.f32.mrb[0].mxu0
        %1666 = vmatprep.mubr.f32.mxu0 0.0
        %1667 = vmatmul.mubr.f32.gmra.mrb[0].mxu0 %v1407
        %v1668 = vpop.f32.mrb[0].mxu0
        %v1669 = vadd.f32 0.0, %v1668
        %v1670 = vpop.f32.mrb[0].mxu0
        %1671 = vmatprep.mubr.f32.mxu0 0.0
        %1672 = vmatmul.mubr.f32.gmra.mrb[0].mxu0 %v1410
        %v1673 = vpop.f32.mrb[0].mxu0
        %v1674 = vadd.f32 0.0, %v1673
        %v1675 = vpop.f32.mrb[0].mxu0
        %1676 = vmatprep.mubr.f32.mxu0 0.0
        %1677 = vmatmul.mubr.f32.gmra.mrb[0].mxu0 %v1413
        %v1678 = vpop.f32.mrb[0].mxu0
        %v1679 = vadd.f32 0.0, %v1678
        %v1680 = vpop.f32.mrb[0].mxu0
        %1681 = vmatprep.mubr.f32.mxu0 0.0
        %1682 = vmatmul.mubr.f32.gmra.mrb[0].mxu0 %v1416
        %v1683 = vpop.f32.mrb[0].mxu0
        %v1684 = vadd.f32 0.0, %v1683
        %v1685 = vpop.f32.mrb[0].mxu0
        %1686 = vmatprep.mubr.f32.mxu0 0.0
        %1687 = vmatmul.mubr.f32.gmra.mrb[0].mxu0 %v1419
        %v1688 = vpop.f32.mrb[0].mxu0
        %v1689 = vadd.f32 0.0, %v1688
        %v1690 = vpop.f32.mrb[0].mxu0
        %1691 = vmatprep.mubr.f32.mxu0 0.0
        %1692 = vmatmul.mubr.f32.gmra.mrb[0].mxu0 %v1422
        %v1693 = vpop.f32.mrb[0].mxu0
        %v1694 = vadd.f32 0.0, %v1693
        %v1695 = vpop.f32.mrb[0].mxu0
        %1696 = vmatprep.mubr.f32.mxu0 0.0
        %1697 = vmatmul.mubr.f32.gmra.mrb[0].mxu0 %v1425
        %v1698 = vpop.f32.mrb[0].mxu0
        %v1699 = vadd.f32 0.0, %v1698
        %v1700 = vpop.f32.mrb[0].mxu0
        %1701 = vmatprep.mubr.f32.mxu0 0.0
        %1702 = vmatmul.mubr.f32.gmra.mrb[0].mxu0 %v1428
        %v1703 = vpop.f32.mrb[0].mxu0
        %v1704 = vadd.f32 0.0, %v1703
        %v1705 = vpop.f32.mrb[0].mxu0
        %1706 = vmatprep.mubr.f32.mxu0 0.0
        %1707 = vmatmul.mubr.f32.gmra.mrb[0].mxu0 %v1431
        %v1708 = vpop.f32.mrb[0].mxu0
        %v1709 = vadd.f32 0.0, %v1708
        %v1710 = vpop.f32.mrb[0].mxu0
        %1711 = vmatprep.mubr.f32.mxu0 0.0
        %1712 = vmatmul.mubr.f32.gmra.mrb[0].mxu0 %v1434
        %v1713 = vpop.f32.mrb[0].mxu0
        %v1714 = vadd.f32 0.0, %v1713
        %v1715 = vpop.f32.mrb[0].mxu0
        %1716 = vmatprep.mubr.f32.mxu0 0.0
        %1717 = vmatmul.mubr.f32.gmra.mrb[0].mxu0 %v1437
        %v1718 = vpop.f32.mrb[0].mxu0
        %v1719 = vadd.f32 0.0, %v1718
        %v1720 = vpop.f32.mrb[0].mxu0
        %1721 = vmatprep.mubr.f32.mxu0 0.0
        %1722 = vmatmul.mubr.f32.gmra.mrb[0].mxu0 %v1440
        %v1723 = vpop.f32.mrb[0].mxu0
        %v1724 = vadd.f32 0.0, %v1723
        %v1725 = vpop.f32.mrb[0].mxu0
        %1726 = vmatprep.mubr.f32.mxu0 0.0
        %1727 = vmatmul.mubr.f32.gmra.mrb[0].mxu0 %v1443
        %v1728 = vpop.f32.mrb[0].mxu0
        %v1729 = vadd.f32 0.0, %v1728
        %v1730 = vpop.f32.mrb[0].mxu0
        %1731 = vmatprep.mubr.f32.mxu0 0.0
        %1732 = vmatmul.mubr.f32.gmra.mrb[0].mxu0 %v1446
        %v1733 = vpop.f32.mrb[0].mxu0
        %v1734 = vadd.f32 0.0, %v1733
        %v1735 = vpop.f32.mrb[0].mxu0
        %1736 = vmatprep.mubr.f32.mxu0 0.0
        %1737 = vmatmul.mubr.f32.gmra.mrb[0].mxu0 %v1449
        %v1738 = vpop.f32.mrb[0].mxu0
        %v1739 = vadd.f32 0.0, %v1738
        %v1740 = vpop.f32.mrb[0].mxu0
        %1741 = vmatprep.mubr.f32.mxu0 0.0
        %1742 = vmatmul.mubr.f32.gmra.mrb[0].mxu0 %v1452
        %v1743 = vpop.f32.mrb[0].mxu0
        %v1744 = vadd.f32 0.0, %v1743
        %v1745 = vpop.f32.mrb[0].mxu0
        %1746 = vmatprep.mubr.f32.mxu0 0.0
        %1747 = vmatmul.mubr.f32.gmra.mrb[0].mxu0 %v1455
        %v1748 = vpop.f32.mrb[0].mxu0
        %v1749 = vadd.f32 0.0, %v1748
        %v1750 = vpop.f32.mrb[0].mxu0
        %1751 = vmatprep.mubr.f32.mxu0 0.0
        %1752 = vmatmul.mubr.f32.gmra.mrb[0].mxu0 %v1458
        %v1753 = vpop.f32.mrb[0].mxu0
        %v1754 = vadd.f32 0.0, %v1753
        %v1755 = vpop.f32.mrb[0].mxu0
        %1756 = vmatprep.mubr.f32.mxu0 0.0
        %1757 = vmatmul.mubr.f32.gmra.mrb[0].mxu0 %v1461
        %v1758 = vpop.f32.mrb[0].mxu0
        %v1759 = vadd.f32 0.0, %v1758
        %v1760 = vpop.f32.mrb[0].mxu0
        %1761 = vmatprep.mubr.f32.mxu0 0.0
        %1762 = vmatmul.mubr.f32.gmra.mrb[0].mxu0 %v1464
        %v1763 = vpop.f32.mrb[0].mxu0
        %v1764 = vadd.f32 0.0, %v1763
        %v1765 = vpop.f32.mrb[0].mxu0
        %1766 = vmatprep.mubr.f32.mxu0 0.0
        %1767 = vmatmul.mubr.f32.gmra.mrb[0].mxu0 %v1467
        %v1768 = vpop.f32.mrb[0].mxu0
        %v1769 = vadd.f32 0.0, %v1768
        %v1770 = vpop.f32.mrb[0].mxu0
        %1771 = vmatprep.mubr.f32.mxu0 0.0
        %1772 = vmatmul.mubr.f32.gmra.mrb[0].mxu0 %v1470
        %v1773 = vpop.f32.mrb[0].mxu0
        %v1774 = vadd.f32 0.0, %v1773
        %v1775 = vpop.f32.mrb[0].mxu0
        %1776 = vmatprep.mubr.f32.mxu0 0.0
        %1777 = vmatmul.mubr.f32.gmra.mrb[0].mxu0 %v1473
        %v1778 = vpop.f32.mrb[0].mxu0
        %v1779 = vadd.f32 0.0, %v1778
        %v1780 = vpop.f32.mrb[0].mxu0
        %1781 = vmatprep.mubr.f32.mxu0 0.0
        %1782 = vmatmul.mubr.f32.gmra.mrb[0].mxu0 %v1476
        %v1783 = vpop.f32.mrb[0].mxu0
        %v1784 = vadd.f32 0.0, %v1783
        %v1785 = vpop.f32.mrb[0].mxu0
        %1786 = vmatprep.mubr.f32.mxu0 0.0
        %1787 = vmatmul.mubr.f32.gmra.mrb[0].mxu0 %v1479
        %v1788 = vpop.f32.mrb[0].mxu0
        %v1789 = vadd.f32 0.0, %v1788
        %v1790 = vpop.f32.mrb[0].mxu0
        %1791 = vmatprep.mubr.f32.mxu0 0.0
        %1792 = vmatmul.mubr.f32.gmra.mrb[0].mxu0 %v1482
        %v1793 = vpop.f32.mrb[0].mxu0
        %v1794 = vadd.f32 0.0, %v1793
        %v1795 = vpop.f32.mrb[0].mxu0
        %1796 = vmatprep.mubr.f32.mxu0 0.0
        %1797 = vmatmul.mubr.f32.gmra.mrb[0].mxu0 %v1485
        %v1798 = vpop.f32.mrb[0].mxu0
        %v1799 = vadd.f32 0.0, %v1798
        %v1800 = vpop.f32.mrb[0].mxu0
        %1801 = vmatprep.mubr.f32.mxu0 0.0
        %1802 = vmatmul.mubr.f32.gmra.mrb[0].mxu0 %v1488
        %v1803 = vpop.f32.mrb[0].mxu0
        %v1804 = vadd.f32 0.0, %v1803
        %v1805 = vpop.f32.mrb[0].mxu0
        %1806 = vmatprep.mubr.f32.mxu0 0.0
        %1807 = vmatmul.mubr.f32.gmra.mrb[0].mxu0 %v1491
        %v1808 = vpop.f32.mrb[0].mxu0
        %v1809 = vadd.f32 0.0, %v1808
        %v1810 = vpop.f32.mrb[0].mxu0
        %1811 = vmatprep.mubr.f32.mxu0 0.0
        %1812 = vmatmul.mubr.f32.gmra.mrb[0].mxu0 %v1494
        %v1813 = vpop.f32.mrb[0].mxu0
        %v1814 = vadd.f32 0.0, %v1813
        %v1815 = vpop.f32.mrb[0].mxu0
        %1816 = vmatprep.mubr.f32.mxu0 0.0
        %1817 = vmatmul.mubr.f32.gmra.mrb[0].mxu0 %v1497
        %v1818 = vpop.f32.mrb[0].mxu0
        %v1819 = vadd.f32 0.0, %v1818
        %v1820 = vpop.f32.mrb[0].mxu0
        %1821 = vmatprep.mubr.f32.mxu0 0.0
        %1822 = vmatmul.mubr.f32.gmra.mrb[0].mxu0 %v1500
        %v1823 = vpop.f32.mrb[0].mxu0
        %v1824 = vadd.f32 0.0, %v1823
        %v1825 = vpop.f32.mrb[0].mxu0
        %1826 = vmatprep.mubr.f32.mxu0 0.0
        %1827 = vmatmul.mubr.f32.gmra.mrb[0].mxu0 %v1503
        %v1828 = vpop.f32.mrb[0].mxu0
        %v1829 = vadd.f32 0.0, %v1828
        %v1830 = vpop.f32.mrb[0].mxu0
        %1831 = vmatprep.mubr.f32.mxu0 0.0
        %1832 = vmatmul.mubr.f32.gmra.mrb[0].mxu0 %v1506
        %v1833 = vpop.f32.mrb[0].mxu0
        %v1834 = vadd.f32 0.0, %v1833
        %v1835 = vpop.f32.mrb[0].mxu0
        %1836 = vmatprep.mubr.f32.mxu0 0.0
        %1837 = vmatmul.mubr.f32.gmra.mrb[0].mxu0 %v1509
        %v1838 = vpop.f32.mrb[0].mxu0
        %v1839 = vadd.f32 0.0, %v1838
        %v1840 = vpop.f32.mrb[0].mxu0
        %1841 = vmatprep.mubr.f32.mxu0 0.0
        %1842 = vmatmul.mubr.f32.gmra.mrb[0].mxu0 %v1512
        %v1843 = vpop.f32.mrb[0].mxu0
        %v1844 = vadd.f32 0.0, %v1843
        %v1845 = vpop.f32.mrb[0].mxu0
        %1846 = vmatprep.mubr.f32.mxu0 0.0
        %1847 = vmatmul.mubr.f32.gmra.mrb[0].mxu0 %v1515
        %v1848 = vpop.f32.mrb[0].mxu0
        %v1849 = vadd.f32 0.0, %v1848
        %v1850 = vpop.f32.mrb[0].mxu0
        %1851 = vmatprep.mubr.f32.mxu0 0.0
        %1852 = vmatmul.mubr.f32.gmra.mrb[0].mxu0 %v1518
        %v1853 = vpop.f32.mrb[0].mxu0
        %v1854 = vadd.f32 0.0, %v1853
        %v1855 = vpop.f32.mrb[0].mxu0
        %1856 = vmatprep.mubr.f32.mxu0 0.0
        %1857 = vmatmul.mubr.f32.gmra.mrb[0].mxu0 %v1521
        %v1858 = vpop.f32.mrb[0].mxu0
        %v1859 = vadd.f32 0.0, %v1858
        %v1860 = vpop.f32.mrb[0].mxu0
        %1861 = vmatprep.mubr.f32.mxu0 0.0
        %1862 = vmatmul.mubr.f32.gmra.mrb[0].mxu0 %v1524
        %v1863 = vpop.f32.mrb[0].mxu0
        %v1864 = vadd.f32 0.0, %v1863
        %v1865 = vpop.f32.mrb[0].mxu0
        %1866 = vmatprep.mubr.f32.mxu0 0.0
        %1867 = vmatmul.mubr.f32.gmra.mrb[0].mxu0 %v1527
        %v1868 = vpop.f32.mrb[0].mxu0
        %v1869 = vadd.f32 0.0, %v1868
        %v1870 = vpop.f32.mrb[0].mxu0
        %1871 = vmatprep.mubr.f32.mxu0 0.0
        %1872 = vmatmul.mubr.f32.gmra.mrb[0].mxu0 %v1530
        %v1873 = vpop.f32.mrb[0].mxu0
        %v1874 = vadd.f32 0.0, %v1873
        %v1875 = vpop.f32.mrb[0].mxu0
        %1876 = vmatprep.mubr.f32.mxu0 0.0
        %1877 = vmatmul.mubr.f32.gmra.mrb[0].mxu0 %v1533
        %v1878 = vpop.f32.mrb[0].mxu0
        %v1879 = vadd.f32 0.0, %v1878
        %v1880 = vpop.f32.mrb[0].mxu0
        %1881 = vmatprep.mubr.f32.mxu0 0.0
        %1882 = vmatmul.mubr.f32.gmra.mrb[0].mxu0 %v1536
        %v1883 = vpop.f32.mrb[0].mxu0
        %v1884 = vadd.f32 0.0, %v1883
        %v1885 = vpop.f32.mrb[0].mxu0
        %1886 = vmatprep.mubr.f32.mxu0 0.0
        %1887 = vmatmul.mubr.f32.gmra.mrb[0].mxu0 %v1539
        %v1888 = vpop.f32.mrb[0].mxu0
        %v1889 = vadd.f32 0.0, %v1888
        %v1890 = vpop.f32.mrb[0].mxu0
        %1891 = vmatprep.mubr.f32.mxu0 0.0
        %1892 = vmatmul.mubr.f32.gmra.mrb[0].mxu0 %v1542
        %v1893 = vpop.f32.mrb[0].mxu0
        %v1894 = vadd.f32 0.0, %v1893
        %v1895 = vpop.f32.mrb[0].mxu0
        %1896 = vmatprep.mubr.f32.mxu0 0.0
        %1897 = vmatmul.mubr.f32.gmra.mrb[0].mxu0 %v1545
        %v1898 = vpop.f32.mrb[0].mxu0
        %v1899 = vadd.f32 0.0, %v1898
        %v1900 = vpop.f32.mrb[0].mxu0
        %1901 = vmatprep.mubr.f32.mxu0 0.0
        %1902 = vmatmul.mubr.f32.gmra.mrb[0].mxu0 %v1548
        %v1903 = vpop.f32.mrb[0].mxu0
        %v1904 = vadd.f32 0.0, %v1903
        %v1905 = vpop.f32.mrb[0].mxu0
        %1906 = vmatprep.mubr.f32.mxu0 0.0
        %1907 = vmatmul.mubr.f32.gmra.mrb[0].mxu0 %v1551
        %v1908 = vpop.f32.mrb[0].mxu0
        %v1909 = vadd.f32 0.0, %v1908
        %v1910 = vpop.f32.mrb[0].mxu0
        %1911 = vmatprep.mubr.f32.mxu0 0.0
        %1912 = vmatmul.mubr.f32.gmra.mrb[0].mxu0 %v1554
        %v1913 = vpop.f32.mrb[0].mxu0
        %v1914 = vadd.f32 0.0, %v1913
        %v1915 = vpop.f32.mrb[0].mxu0
        %1916 = vmatprep.mubr.f32.mxu0 0.0
        %1917 = vmatmul.mubr.f32.gmra.mrb[0].mxu0 %v1557
        %v1918 = vpop.f32.mrb[0].mxu0
        %v1919 = vadd.f32 0.0, %v1918
        %v1920 = vpop.f32.mrb[0].mxu0
        %1921 = vmatprep.mubr.f32.mxu0 0.0
        %1922 = vmatmul.mubr.f32.gmra.mrb[0].mxu0 %v1560
        %v1923 = vpop.f32.mrb[0].mxu0
        %v1924 = vadd.f32 0.0, %v1923
        %v1925 = vpop.f32.mrb[0].mxu0
        %1926 = vmatprep.mubr.f32.mxu0 0.0
        %1927 = vmatmul.mubr.f32.gmra.mrb[0].mxu0 %v1563
        %v1928 = vpop.f32.mrb[0].mxu0
        %v1929 = vadd.f32 0.0, %v1928
        %v1930 = vpop.f32.mrb[0].mxu0
        %1931 = vmatprep.mubr.f32.mxu0 0.0
        %1932 = vmatmul.mubr.f32.gmra.mrb[0].mxu0 %v1566
        %v1933 = vpop.f32.mrb[0].mxu0
        %v1934 = vadd.f32 0.0, %v1933
        %v1935 = vpop.f32.mrb[0].mxu0
        %1936 = vmatprep.mubr.f32.mxu0 0.0
        %1937 = vmatmul.mubr.f32.gmra.mrb[0].mxu0 %v1569
        %v1938 = vpop.f32.mrb[0].mxu0
        %v1939 = vadd.f32 0.0, %v1938
        %v1940 = vpop.f32.mrb[0].mxu0
        %1941 = vmatprep.mubr.f32.mxu0 0.0
        %1942 = vmatmul.mubr.f32.gmra.mrb[0].mxu0 %v1572
        %v1943 = vpop.f32.mrb[0].mxu0
        %v1944 = vadd.f32 0.0, %v1943
        %v1945 = vpop.f32.mrb[0].mxu0
        %1946 = vmatprep.mubr.f32.mxu0 0.0
        %1947 = vmatmul.mubr.f32.gmra.mrb[0].mxu0 %v1575
        %v1948 = vpop.f32.mrb[0].mxu0
        %v1949 = vadd.f32 0.0, %v1948
        %v1950 = vpop.f32.mrb[0].mxu0
        %1951 = vmatprep.mubr.f32.mxu0 0.0
        %1952 = vmatmul.mubr.f32.gmra.mrb[0].mxu0 %v1578
        %v1953 = vpop.f32.mrb[0].mxu0
        %v1954 = vadd.f32 0.0, %v1953
        %v1955 = vpop.f32.mrb[0].mxu0
        %1956 = vmatprep.mubr.f32.mxu0 0.0
        %1957 = vmatmul.mubr.f32.gmra.mrb[0].mxu0 %v1581
        %v1958 = vpop.f32.mrb[0].mxu0
        %v1959 = vadd.f32 0.0, %v1958
        %v1960 = vpop.f32.mrb[0].mxu0
        %1961 = vmatprep.mubr.f32.mxu0 0.0
        %1962 = vmatmul.mubr.f32.gmra.mrb[0].mxu0 %v1584
        %v1963 = vpop.f32.mrb[0].mxu0
        %v1964 = vadd.f32 0.0, %v1963
        %v1965 = vpop.f32.mrb[0].mxu0
        %1966 = vmatprep.mubr.f32.mxu0 0.0
        %1967 = vmatmul.mubr.f32.gmra.mrb[0].mxu0 %v1587
        %v1968 = vpop.f32.mrb[0].mxu0
        %v1969 = vadd.f32 0.0, %v1968
        %v1970 = vpop.f32.mrb[0].mxu0
        %1971 = vmatprep.mubr.f32.mxu0 0.0
        %1972 = vmatmul.mubr.f32.gmra.mrb[0].mxu0 %v1590
        %v1973 = vpop.f32.mrb[0].mxu0
        %v1974 = vadd.f32 0.0, %v1973
        %v1975 = vpop.f32.mrb[0].mxu0
        %1976 = vdwg.mxu0
        %v1977 = vmul.f32 %v1659, %v1333
        %v1978 = vmul.f32 %v1664, %v1334
        %v1979 = vmul.f32 %v1669, %v1333
        %v1980 = vmul.f32 %v1674, %v1334
        %v1981 = vmul.f32 %v1679, %v1333
        %v1982 = vmul.f32 %v1684, %v1334
        %v1983 = vmul.f32 %v1689, %v1333
        %v1984 = vmul.f32 %v1694, %v1334
        %v1985 = vmul.f32 %v1699, %v1333
        %v1986 = vmul.f32 %v1704, %v1334
        %v1987 = vmul.f32 %v1709, %v1333
        %v1988 = vmul.f32 %v1714, %v1334
        %v1989 = vmul.f32 %v1719, %v1333
        %v1990 = vmul.f32 %v1724, %v1334
        %v1991 = vmul.f32 %v1729, %v1333
        %v1992 = vmul.f32 %v1734, %v1334
        %v1993 = vmul.f32 %v1739, %v1333
        %v1994 = vmul.f32 %v1744, %v1334
        %v1995 = vmul.f32 %v1749, %v1333
        %v1996 = vmul.f32 %v1754, %v1334
        %v1997 = vmul.f32 %v1759, %v1333
        %v1998 = vmul.f32 %v1764, %v1334
        %v1999 = vmul.f32 %v1769, %v1333
        %v2000 = vmul.f32 %v1774, %v1334
        %v2001 = vmul.f32 %v1779, %v1333
        %v2002 = vmul.f32 %v1784, %v1334
        %v2003 = vmul.f32 %v1789, %v1333
        %v2004 = vmul.f32 %v1794, %v1334
        %v2005 = vmul.f32 %v1799, %v1333
        %v2006 = vmul.f32 %v1804, %v1334
        %v2007 = vmul.f32 %v1809, %v1333
        %v2008 = vmul.f32 %v1814, %v1334
        %v2009 = vmul.f32 %v1819, %v1333
        %v2010 = vmul.f32 %v1824, %v1334
        %v2011 = vmul.f32 %v1829, %v1333
        %v2012 = vmul.f32 %v1834, %v1334
        %v2013 = vmul.f32 %v1839, %v1333
        %v2014 = vmul.f32 %v1844, %v1334
        %v2015 = vmul.f32 %v1849, %v1333
        %v2016 = vmul.f32 %v1854, %v1334
        %v2017 = vmul.f32 %v1859, %v1333
        %v2018 = vmul.f32 %v1864, %v1334
        %v2019 = vmul.f32 %v1869, %v1333
        %v2020 = vmul.f32 %v1874, %v1334
        %v2021 = vmul.f32 %v1879, %v1333
        %v2022 = vmul.f32 %v1884, %v1334
        %v2023 = vmul.f32 %v1889, %v1333
        %v2024 = vmul.f32 %v1894, %v1334
        %v2025 = vmul.f32 %v1899, %v1333
        %v2026 = vmul.f32 %v1904, %v1334
        %v2027 = vmul.f32 %v1909, %v1333
        %v2028 = vmul.f32 %v1914, %v1334
        %v2029 = vmul.f32 %v1919, %v1333
        %v2030 = vmul.f32 %v1924, %v1334
        %v2031 = vmul.f32 %v1929, %v1333
        %v2032 = vmul.f32 %v1934, %v1334
        %v2033 = vmul.f32 %v1939, %v1333
        %v2034 = vmul.f32 %v1944, %v1334
        %v2035 = vmul.f32 %v1949, %v1333
        %v2036 = vmul.f32 %v1954, %v1334
        %v2037 = vmul.f32 %v1959, %v1333
        %v2038 = vmul.f32 %v1964, %v1334
        %v2039 = vmul.f32 %v1969, %v1333
        %v2040 = vmul.f32 %v1974, %v1334
        %v2041 = vadd.f32 %v1977, %v1978
        %v2042 = vrot.slane %v2041, 4
        %v2043 = vadd.f32 %v2041, %v2042
        %v2044 = vrot.slane %v2043, 2
        %v2045 = vadd.f32 %v2043, %v2044
        %v2046 = vrot.slane %v2045, 1
        %v2047 = vadd.f32 %v2045, %v2046
        %v2048 = vadd.f32 %v1979, %v1980
        %v2049 = vrot.slane %v2048, 4
        %v2050 = vadd.f32 %v2048, %v2049
        %v2051 = vrot.slane %v2050, 2
        %v2052 = vadd.f32 %v2050, %v2051
        %v2053 = vrot.slane %v2052, 1
        %v2054 = vadd.f32 %v2052, %v2053
        %v2055 = vadd.f32 %v1981, %v1982
        %v2056 = vrot.slane %v2055, 4
        %v2057 = vadd.f32 %v2055, %v2056
        %v2058 = vrot.slane %v2057, 2
        %v2059 = vadd.f32 %v2057, %v2058
        %v2060 = vrot.slane %v2059, 1
        %v2061 = vadd.f32 %v2059, %v2060
        %v2062 = vadd.f32 %v1983, %v1984
        %v2063 = vrot.slane %v2062, 4
        %v2064 = vadd.f32 %v2062, %v2063
        %v2065 = vrot.slane %v2064, 2
        %v2066 = vadd.f32 %v2064, %v2065
        %v2067 = vrot.slane %v2066, 1
        %v2068 = vadd.f32 %v2066, %v2067
        %v2069 = vadd.f32 %v1985, %v1986
        %v2070 = vrot.slane %v2069, 4
        %v2071 = vadd.f32 %v2069, %v2070
        %v2072 = vrot.slane %v2071, 2
        %v2073 = vadd.f32 %v2071, %v2072
        %v2074 = vrot.slane %v2073, 1
        %v2075 = vadd.f32 %v2073, %v2074
        %v2076 = vadd.f32 %v1987, %v1988
        %v2077 = vrot.slane %v2076, 4
        %v2078 = vadd.f32 %v2076, %v2077
        %v2079 = vrot.slane %v2078, 2
        %v2080 = vadd.f32 %v2078, %v2079
        %v2081 = vrot.slane %v2080, 1
        %v2082 = vadd.f32 %v2080, %v2081
        %v2083 = vadd.f32 %v1989, %v1990
        %v2084 = vrot.slane %v2083, 4
        %v2085 = vadd.f32 %v2083, %v2084
        %v2086 = vrot.slane %v2085, 2
        %v2087 = vadd.f32 %v2085, %v2086
        %v2088 = vrot.slane %v2087, 1
        %v2089 = vadd.f32 %v2087, %v2088
        %v2090 = vadd.f32 %v1991, %v1992
        %v2091 = vrot.slane %v2090, 4
        %v2092 = vadd.f32 %v2090, %v2091
        %v2093 = vrot.slane %v2092, 2
        %v2094 = vadd.f32 %v2092, %v2093
        %v2095 = vrot.slane %v2094, 1
        %v2096 = vadd.f32 %v2094, %v2095
        %v2097 = vadd.f32 %v1993, %v1994
        %v2098 = vrot.slane %v2097, 4
        %v2099 = vadd.f32 %v2097, %v2098
        %v2100 = vrot.slane %v2099, 2
        %v2101 = vadd.f32 %v2099, %v2100
        %v2102 = vrot.slane %v2101, 1
        %v2103 = vadd.f32 %v2101, %v2102
        %v2104 = vadd.f32 %v1995, %v1996
        %v2105 = vrot.slane %v2104, 4
        %v2106 = vadd.f32 %v2104, %v2105
        %v2107 = vrot.slane %v2106, 2
        %v2108 = vadd.f32 %v2106, %v2107
        %v2109 = vrot.slane %v2108, 1
        %v2110 = vadd.f32 %v2108, %v2109
        %v2111 = vadd.f32 %v1997, %v1998
        %v2112 = vrot.slane %v2111, 4
        %v2113 = vadd.f32 %v2111, %v2112
        %v2114 = vrot.slane %v2113, 2
        %v2115 = vadd.f32 %v2113, %v2114
        %v2116 = vrot.slane %v2115, 1
        %v2117 = vadd.f32 %v2115, %v2116
        %v2118 = vadd.f32 %v1999, %v2000
        %v2119 = vrot.slane %v2118, 4
        %v2120 = vadd.f32 %v2118, %v2119
        %v2121 = vrot.slane %v2120, 2
        %v2122 = vadd.f32 %v2120, %v2121
        %v2123 = vrot.slane %v2122, 1
        %v2124 = vadd.f32 %v2122, %v2123
        %v2125 = vadd.f32 %v2001, %v2002
        %v2126 = vrot.slane %v2125, 4
        %v2127 = vadd.f32 %v2125, %v2126
        %v2128 = vrot.slane %v2127, 2
        %v2129 = vadd.f32 %v2127, %v2128
        %v2130 = vrot.slane %v2129, 1
        %v2131 = vadd.f32 %v2129, %v2130
        %v2132 = vadd.f32 %v2003, %v2004
        %v2133 = vrot.slane %v2132, 4
        %v2134 = vadd.f32 %v2132, %v2133
        %v2135 = vrot.slane %v2134, 2
        %v2136 = vadd.f32 %v2134, %v2135
        %v2137 = vrot.slane %v2136, 1
        %v2138 = vadd.f32 %v2136, %v2137
        %v2139 = vadd.f32 %v2005, %v2006
        %v2140 = vrot.slane %v2139, 4
        %v2141 = vadd.f32 %v2139, %v2140
        %v2142 = vrot.slane %v2141, 2
        %v2143 = vadd.f32 %v2141, %v2142
        %v2144 = vrot.slane %v2143, 1
        %v2145 = vadd.f32 %v2143, %v2144
        %v2146 = vadd.f32 %v2007, %v2008
        %v2147 = vrot.slane %v2146, 4
        %v2148 = vadd.f32 %v2146, %v2147
        %v2149 = vrot.slane %v2148, 2
        %v2150 = vadd.f32 %v2148, %v2149
        %v2151 = vrot.slane %v2150, 1
        %v2152 = vadd.f32 %v2150, %v2151
        %v2153 = vadd.f32 %v2009, %v2010
        %v2154 = vrot.slane %v2153, 4
        %v2155 = vadd.f32 %v2153, %v2154
        %v2156 = vrot.slane %v2155, 2
        %v2157 = vadd.f32 %v2155, %v2156
        %v2158 = vrot.slane %v2157, 1
        %v2159 = vadd.f32 %v2157, %v2158
        %v2160 = vadd.f32 %v2011, %v2012
        %v2161 = vrot.slane %v2160, 4
        %v2162 = vadd.f32 %v2160, %v2161
        %v2163 = vrot.slane %v2162, 2
        %v2164 = vadd.f32 %v2162, %v2163
        %v2165 = vrot.slane %v2164, 1
        %v2166 = vadd.f32 %v2164, %v2165
        %v2167 = vadd.f32 %v2013, %v2014
        %v2168 = vrot.slane %v2167, 4
        %v2169 = vadd.f32 %v2167, %v2168
        %v2170 = vrot.slane %v2169, 2
        %v2171 = vadd.f32 %v2169, %v2170
        %v2172 = vrot.slane %v2171, 1
        %v2173 = vadd.f32 %v2171, %v2172
        %v2174 = vadd.f32 %v2015, %v2016
        %v2175 = vrot.slane %v2174, 4
        %v2176 = vadd.f32 %v2174, %v2175
        %v2177 = vrot.slane %v2176, 2
        %v2178 = vadd.f32 %v2176, %v2177
        %v2179 = vrot.slane %v2178, 1
        %v2180 = vadd.f32 %v2178, %v2179
        %v2181 = vadd.f32 %v2017, %v2018
        %v2182 = vrot.slane %v2181, 4
        %v2183 = vadd.f32 %v2181, %v2182
        %v2184 = vrot.slane %v2183, 2
        %v2185 = vadd.f32 %v2183, %v2184
        %v2186 = vrot.slane %v2185, 1
        %v2187 = vadd.f32 %v2185, %v2186
        %v2188 = vadd.f32 %v2019, %v2020
        %v2189 = vrot.slane %v2188, 4
        %v2190 = vadd.f32 %v2188, %v2189
        %v2191 = vrot.slane %v2190, 2
        %v2192 = vadd.f32 %v2190, %v2191
        %v2193 = vrot.slane %v2192, 1
        %v2194 = vadd.f32 %v2192, %v2193
        %v2195 = vadd.f32 %v2021, %v2022
        %v2196 = vrot.slane %v2195, 4
        %v2197 = vadd.f32 %v2195, %v2196
        %v2198 = vrot.slane %v2197, 2
        %v2199 = vadd.f32 %v2197, %v2198
        %v2200 = vrot.slane %v2199, 1
        %v2201 = vadd.f32 %v2199, %v2200
        %v2202 = vadd.f32 %v2023, %v2024
        %v2203 = vrot.slane %v2202, 4
        %v2204 = vadd.f32 %v2202, %v2203
        %v2205 = vrot.slane %v2204, 2
        %v2206 = vadd.f32 %v2204, %v2205
        %v2207 = vrot.slane %v2206, 1
        %v2208 = vadd.f32 %v2206, %v2207
        %v2209 = vadd.f32 %v2025, %v2026
        %v2210 = vrot.slane %v2209, 4
        %v2211 = vadd.f32 %v2209, %v2210
        %v2212 = vrot.slane %v2211, 2
        %v2213 = vadd.f32 %v2211, %v2212
        %v2214 = vrot.slane %v2213, 1
        %v2215 = vadd.f32 %v2213, %v2214
        %v2216 = vadd.f32 %v2027, %v2028
        %v2217 = vrot.slane %v2216, 4
        %v2218 = vadd.f32 %v2216, %v2217
        %v2219 = vrot.slane %v2218, 2
        %v2220 = vadd.f32 %v2218, %v2219
        %v2221 = vrot.slane %v2220, 1
        %v2222 = vadd.f32 %v2220, %v2221
        %v2223 = vadd.f32 %v2029, %v2030
        %v2224 = vrot.slane %v2223, 4
        %v2225 = vadd.f32 %v2223, %v2224
        %v2226 = vrot.slane %v2225, 2
        %v2227 = vadd.f32 %v2225, %v2226
        %v2228 = vrot.slane %v2227, 1
        %v2229 = vadd.f32 %v2227, %v2228
        %v2230 = vadd.f32 %v2031, %v2032
        %v2231 = vrot.slane %v2230, 4
        %v2232 = vadd.f32 %v2230, %v2231
        %v2233 = vrot.slane %v2232, 2
        %v2234 = vadd.f32 %v2232, %v2233
        %v2235 = vrot.slane %v2234, 1
        %v2236 = vadd.f32 %v2234, %v2235
        %v2237 = vadd.f32 %v2033, %v2034
        %v2238 = vrot.slane %v2237, 4
        %v2239 = vadd.f32 %v2237, %v2238
        %v2240 = vrot.slane %v2239, 2
        %v2241 = vadd.f32 %v2239, %v2240
        %v2242 = vrot.slane %v2241, 1
        %v2243 = vadd.f32 %v2241, %v2242
        %v2244 = vadd.f32 %v2035, %v2036
        %v2245 = vrot.slane %v2244, 4
        %v2246 = vadd.f32 %v2244, %v2245
        %v2247 = vrot.slane %v2246, 2
        %v2248 = vadd.f32 %v2246, %v2247
        %v2249 = vrot.slane %v2248, 1
        %v2250 = vadd.f32 %v2248, %v2249
        %v2251 = vadd.f32 %v2037, %v2038
        %v2252 = vrot.slane %v2251, 4
        %v2253 = vadd.f32 %v2251, %v2252
        %v2254 = vrot.slane %v2253, 2
        %v2255 = vadd.f32 %v2253, %v2254
        %v2256 = vrot.slane %v2255, 1
        %v2257 = vadd.f32 %v2255, %v2256
        %v2258 = vadd.f32 %v2039, %v2040
        %v2259 = vrot.slane %v2258, 4
        %v2260 = vadd.f32 %v2258, %v2259
        %v2261 = vrot.slane %v2260, 2
        %v2262 = vadd.f32 %v2260, %v2261
        %v2263 = vrot.slane %v2262, 1
        %v2264 = vadd.f32 %v2262, %v2263
        %v2297 = vsel %vm1222, %v2054, %v2047
        %v2298 = vsel %vm1224, %v2061, %v2297
        %v2299 = vsel %vm1226, %v2068, %v2298
        %v2300 = vsel %vm1228, %v2075, %v2299
        %v2301 = vsel %vm1230, %v2082, %v2300
        %v2302 = vsel %vm1232, %v2089, %v2301
        %v2303 = vsel %vm1234, %v2096, %v2302
        %v2304 = vsel %vm1222, %v2110, %v2103
        %v2305 = vsel %vm1224, %v2117, %v2304
        %v2306 = vsel %vm1226, %v2124, %v2305
        %v2307 = vsel %vm1228, %v2131, %v2306
        %v2308 = vsel %vm1230, %v2138, %v2307
        %v2309 = vsel %vm1232, %v2145, %v2308
        %v2310 = vsel %vm1234, %v2152, %v2309
        %v2311 = vsel %vm1222, %v2166, %v2159
        %v2312 = vsel %vm1224, %v2173, %v2311
        %v2313 = vsel %vm1226, %v2180, %v2312
        %v2314 = vsel %vm1228, %v2187, %v2313
        %v2315 = vsel %vm1230, %v2194, %v2314
        %v2316 = vsel %vm1232, %v2201, %v2315
        %v2317 = vsel %vm1234, %v2208, %v2316
        %v2318 = vsel %vm1222, %v2222, %v2215
        %v2319 = vsel %vm1224, %v2229, %v2318
        %v2320 = vsel %vm1226, %v2236, %v2319
        %v2321 = vsel %vm1228, %v2243, %v2320
        %v2322 = vsel %vm1230, %v2250, %v2321
        %v2323 = vsel %vm1232, %v2257, %v2322
        %v2324 = vsel %vm1234, %v2264, %v2323
        %2329 = vst [vmem:[%s173 + $0x20] sm:$0xff] %v2303
        %2330 = vst [vmem:[%s173 + $0x28] sm:$0xff] %v2310
        %2331 = vst [vmem:[%s173 + $0x30] sm:$0xff] %v2317
        %2332 = vst [vmem:[%s173 + $0x38] sm:$0xff] %v2324
        %s2333 = scalar_lea.vmem %s181, 4
        %v2334 = vld [vmem:[%s2333] sm:$0x3]
        %v2335 = vmul.f32 %v2334, %v191
        %v2336 = vadd.f32 %v2335, 0.5
        %vm2337 = vcmp.ge.f32.partialorder %v2336, 1.0
        %v2338 = vsel %vm2337, 0.99999, %v2336
        %vm2339 = vcmp.lt.f32.partialorder %v2338, 0.0
        %v2340 = vsel %vm2339, 0.0, %v2338
        %v2341 = vmul.f32 %v2340, 15.0
        %v2342 = vmax.f32 %v2341, 0.0
        %v2343 = vmin.f32 %v2342, 15.0
        %v2344 = vfloor.f32 %v2343
        %v2345 = vsub.f32 %v2343, %v2344
        %v2346 = vcvt.f32.s32.to.zero.pseudo %v2344
        %v2347 = vadd.s32 %v2346, 1
        %vm2348 = vcmp.lt.s32.totalorder %v2347, 15
        %v2349 = vsel %vm2348, %v2347, 15
        %v2350 = vlaneseq
        %v2351 = vshrl.u32 %v2350, 7
        %v2352 = vsub.s32 0, %v2351
        %v2353 = vrot.slane %v2346, %v2352
        %vm2354 = vcmp.eq.s32.totalorder %v188, %v2353
        %vm2355 = vcmp.eq.s32.totalorder %v189, %v2353
        %v2356 = vsub.f32 1.0, %v2345
        %v2357 = vlaneseq
        %v2358 = vshrl.u32 %v2357, 7
        %v2359 = vsub.s32 0, %v2358
        %v2360 = vrot.slane %v2356, %v2359
        %v2361 = vsel %vm2354, %v2360, 0.0
        %v2362 = vsel %vm2355, %v2360, 0.0
        %v2363 = vlaneseq
        %v2364 = vshrl.u32 %v2363, 7
        %v2365 = vsub.s32 0, %v2364
        %v2366 = vrot.slane %v2349, %v2365
        %vm2367 = vcmp.eq.s32.totalorder %v188, %v2366
        %vm2368 = vcmp.eq.s32.totalorder %v189, %v2366
        %v2369 = vlaneseq
        %v2370 = vshrl.u32 %v2369, 7
        %v2371 = vsub.s32 0, %v2370
        %v2372 = vrot.slane %v2345, %v2371
        %v2373 = vsel %vm2367, %v2372, 0.0
        %v2374 = vsel %vm2368, %v2372, 0.0
        %v2375 = vadd.f32 %v2361, %v2373
        %v2376 = vadd.f32 %v2362, %v2374
        %v2377 = vlaneseq
        %v2378 = vshrl.u32 %v2377, 7
        %v2379 = vsub.s32 1, %v2378
        %v2380 = vrot.slane %v2346, %v2379
        %vm2381 = vcmp.eq.s32.totalorder %v188, %v2380
        %vm2382 = vcmp.eq.s32.totalorder %v189, %v2380
        %v2383 = vlaneseq
        %v2384 = vshrl.u32 %v2383, 7
        %v2385 = vsub.s32 1, %v2384
        %v2386 = vrot.slane %v2356, %v2385
        %v2387 = vsel %vm2381, %v2386, 0.0
        %v2388 = vsel %vm2382, %v2386, 0.0
        %v2389 = vlaneseq
        %v2390 = vshrl.u32 %v2389, 7
        %v2391 = vsub.s32 1, %v2390
        %v2392 = vrot.slane %v2349, %v2391
        %vm2393 = vcmp.eq.s32.totalorder %v188, %v2392
        %vm2394 = vcmp.eq.s32.totalorder %v189, %v2392
        %v2395 = vlaneseq
        %v2396 = vshrl.u32 %v2395, 7
        %v2397 = vsub.s32 1, %v2396
        %v2398 = vrot.slane %v2345, %v2397
        %v2399 = vsel %vm2393, %v2398, 0.0
        %v2400 = vsel %vm2394, %v2398, 0.0
        %v2401 = vadd.f32 %v2387, %v2399
        %v2402 = vadd.f32 %v2388, %v2400
        %s2403 = scalar_lea.vmem %s186, 1024
        %v2404 = vld [vmem:[%s2403] sm:$0xff]
        %v2405 = vld [vmem:[%s2403 + $0x8] sm:$0xff]
        %v2406 = vld [vmem:[%s2403 + $0x10] sm:$0xff]
        %v2407 = vld [vmem:[%s2403 + $0x18] sm:$0xff]
        %v2408 = vld [vmem:[%s2403 + $0x20] sm:$0xff]
        %v2409 = vld [vmem:[%s2403 + $0x28] sm:$0xff]
        %v2410 = vld [vmem:[%s2403 + $0x30] sm:$0xff]
        %v2411 = vld [vmem:[%s2403 + $0x38] sm:$0xff]
        %v2412 = vld [vmem:[%s2403 + $0x40] sm:$0xff]
        %v2413 = vld [vmem:[%s2403 + $0x48] sm:$0xff]
        %v2414 = vld [vmem:[%s2403 + $0x50] sm:$0xff]
        %v2415 = vld [vmem:[%s2403 + $0x58] sm:$0xff]
        %v2416 = vld [vmem:[%s2403 + $0x60] sm:$0xff]
        %v2417 = vld [vmem:[%s2403 + $0x68] sm:$0xff]
        %v2418 = vld [vmem:[%s2403 + $0x70] sm:$0xff]
        %v2419 = vld [vmem:[%s2403 + $0x78] sm:$0xff]
        %v2420 = vld [vmem:[%s2403 + $0x80] sm:$0xff]
        %v2421 = vld [vmem:[%s2403 + $0x88] sm:$0xff]
        %v2422 = vld [vmem:[%s2403 + $0x90] sm:$0xff]
        %v2423 = vld [vmem:[%s2403 + $0x98] sm:$0xff]
        %v2424 = vld [vmem:[%s2403 + $0xa0] sm:$0xff]
        %v2425 = vld [vmem:[%s2403 + $0xa8] sm:$0xff]
        %v2426 = vld [vmem:[%s2403 + $0xb0] sm:$0xff]
        %v2427 = vld [vmem:[%s2403 + $0xb8] sm:$0xff]
        %v2428 = vld [vmem:[%s2403 + $0xc0] sm:$0xff]
        %v2429 = vld [vmem:[%s2403 + $0xc8] sm:$0xff]
        %v2430 = vld [vmem:[%s2403 + $0xd0] sm:$0xff]
        %v2431 = vld [vmem:[%s2403 + $0xd8] sm:$0xff]
        %v2432 = vld [vmem:[%s2403 + $0xe0] sm:$0xff]
        %v2433 = vld [vmem:[%s2403 + $0xe8] sm:$0xff]
        %v2434 = vld [vmem:[%s2403 + $0xf0] sm:$0xff]
        %v2435 = vld [vmem:[%s2403 + $0xf8] sm:$0xff]
        %v2436 = vld [vmem:[%s2403 + $0x100] sm:$0xff]
        %v2437 = vld [vmem:[%s2403 + $0x108] sm:$0xff]
        %v2438 = vld [vmem:[%s2403 + $0x110] sm:$0xff]
        %v2439 = vld [vmem:[%s2403 + $0x118] sm:$0xff]
        %v2440 = vld [vmem:[%s2403 + $0x120] sm:$0xff]
        %v2441 = vld [vmem:[%s2403 + $0x128] sm:$0xff]
        %v2442 = vld [vmem:[%s2403 + $0x130] sm:$0xff]
        %v2443 = vld [vmem:[%s2403 + $0x138] sm:$0xff]
        %v2444 = vld [vmem:[%s2403 + $0x140] sm:$0xff]
        %v2445 = vld [vmem:[%s2403 + $0x148] sm:$0xff]
        %v2446 = vld [vmem:[%s2403 + $0x150] sm:$0xff]
        %v2447 = vld [vmem:[%s2403 + $0x158] sm:$0xff]
        %v2448 = vld [vmem:[%s2403 + $0x160] sm:$0xff]
        %v2449 = vld [vmem:[%s2403 + $0x168] sm:$0xff]
        %v2450 = vld [vmem:[%s2403 + $0x170] sm:$0xff]
        %v2451 = vld [vmem:[%s2403 + $0x178] sm:$0xff]
        %v2452 = vld [vmem:[%s2403 + $0x180] sm:$0xff]
        %v2453 = vld [vmem:[%s2403 + $0x188] sm:$0xff]
        %v2454 = vld [vmem:[%s2403 + $0x190] sm:$0xff]
        %v2455 = vld [vmem:[%s2403 + $0x198] sm:$0xff]
        %v2456 = vld [vmem:[%s2403 + $0x1a0] sm:$0xff]
        %v2457 = vld [vmem:[%s2403 + $0x1a8] sm:$0xff]
        %v2458 = vld [vmem:[%s2403 + $0x1b0] sm:$0xff]
        %v2459 = vld [vmem:[%s2403 + $0x1b8] sm:$0xff]
        %v2460 = vld [vmem:[%s2403 + $0x1c0] sm:$0xff]
        %v2461 = vld [vmem:[%s2403 + $0x1c8] sm:$0xff]
        %v2462 = vld [vmem:[%s2403 + $0x1d0] sm:$0xff]
        %v2463 = vld [vmem:[%s2403 + $0x1d8] sm:$0xff]
        %v2464 = vld [vmem:[%s2403 + $0x1e0] sm:$0xff]
        %v2465 = vld [vmem:[%s2403 + $0x1e8] sm:$0xff]
        %v2466 = vld [vmem:[%s2403 + $0x1f0] sm:$0xff]
        %v2467 = vld [vmem:[%s2403 + $0x1f8] sm:$0xff]
        %v2469 = vsel %vm324, %v2404, 0
        %v2472 = vsel %vm324, %v2405, 0
        %v2475 = vsel %vm324, %v2406, 0
        %v2478 = vsel %vm324, %v2407, 0
        %v2481 = vsel %vm324, %v2408, 0
        %v2484 = vsel %vm324, %v2409, 0
        %v2487 = vsel %vm324, %v2410, 0
        %v2490 = vsel %vm324, %v2411, 0
        %v2493 = vsel %vm324, %v2412, 0
        %v2496 = vsel %vm324, %v2413, 0
        %v2499 = vsel %vm324, %v2414, 0
        %v2502 = vsel %vm324, %v2415, 0
        %v2505 = vsel %vm324, %v2416, 0
        %v2508 = vsel %vm324, %v2417, 0
        %v2511 = vsel %vm324, %v2418, 0
        %v2514 = vsel %vm324, %v2419, 0
        %v2517 = vsel %vm324, %v2420, 0
        %v2520 = vsel %vm324, %v2421, 0
        %v2523 = vsel %vm324, %v2422, 0
        %v2526 = vsel %vm324, %v2423, 0
        %v2529 = vsel %vm324, %v2424, 0
        %v2532 = vsel %vm324, %v2425, 0
        %v2535 = vsel %vm324, %v2426, 0
        %v2538 = vsel %vm324, %v2427, 0
        %v2541 = vsel %vm324, %v2428, 0
        %v2544 = vsel %vm324, %v2429, 0
        %v2547 = vsel %vm324, %v2430, 0
        %v2550 = vsel %vm324, %v2431, 0
        %v2553 = vsel %vm324, %v2432, 0
        %v2556 = vsel %vm324, %v2433, 0
        %v2559 = vsel %vm324, %v2434, 0
        %v2562 = vsel %vm324, %v2435, 0
        %v2565 = vsel %vm324, %v2436, 0
        %v2568 = vsel %vm324, %v2437, 0
        %v2571 = vsel %vm324, %v2438, 0
        %v2574 = vsel %vm324, %v2439, 0
        %v2577 = vsel %vm324, %v2440, 0
        %v2580 = vsel %vm324, %v2441, 0
        %v2583 = vsel %vm324, %v2442, 0
        %v2586 = vsel %vm324, %v2443, 0
        %v2589 = vsel %vm324, %v2444, 0
        %v2592 = vsel %vm324, %v2445, 0
        %v2595 = vsel %vm324, %v2446, 0
        %v2598 = vsel %vm324, %v2447, 0
        %v2601 = vsel %vm324, %v2448, 0
        %v2604 = vsel %vm324, %v2449, 0
        %v2607 = vsel %vm324, %v2450, 0
        %v2610 = vsel %vm324, %v2451, 0
        %v2613 = vsel %vm324, %v2452, 0
        %v2616 = vsel %vm324, %v2453, 0
        %v2619 = vsel %vm324, %v2454, 0
        %v2622 = vsel %vm324, %v2455, 0
        %v2625 = vsel %vm324, %v2456, 0
        %v2628 = vsel %vm324, %v2457, 0
        %v2631 = vsel %vm324, %v2458, 0
        %v2634 = vsel %vm324, %v2459, 0
        %v2637 = vsel %vm324, %v2460, 0
        %v2640 = vsel %vm324, %v2461, 0
        %v2643 = vsel %vm324, %v2462, 0
        %v2646 = vsel %vm324, %v2463, 0
        %v2649 = vsel %vm324, %v2464, 0
        %v2652 = vsel %vm324, %v2465, 0
        %v2655 = vsel %vm324, %v2466, 0
        %v2658 = vsel %vm324, %v2467, 0
        %2660 = vmatprep.subr.mxu0 0.0
        %2661 = vmatpush1.msra.mxu0 %v2375
        %2662 = vmatprep.subr.mxu0 0.0
        %2663 = vmatpush1.msra.mxu0 %v2376
        %2664 = vmatprep.subr.mxu0 0.0
        %2665 = vmatpush1.msra.mxu0 0.0
        %2666 = vmatprep.subr.mxu0 0.0
        %2667 = vmatpush1.msra.mxu0 0.0
        %2668 = vmatprep.subr.mxu0 0.0
        %2669 = vmatpush1.msra.mxu0 0.0
        %2670 = vmatprep.subr.mxu0 0.0
        %2671 = vmatpush1.msra.mxu0 0.0
        %2672 = vmatprep.subr.mxu0 0.0
        %2673 = vmatpush1.msra.mxu0 0.0
        %2674 = vmatprep.subr.mxu0 0.0
        %2675 = vmatpush1.msra.mxu0 0.0
        %2676 = vmatprep.subr.mxu0 0.0
        %2677 = vmatpush1.msra.mxu0 0.0
        %2678 = vmatprep.subr.mxu0 0.0
        %2679 = vmatpush1.msra.mxu0 0.0
        %2680 = vmatprep.subr.mxu0 0.0
        %2681 = vmatpush1.msra.mxu0 0.0
        %2682 = vmatprep.subr.mxu0 0.0
        %2683 = vmatpush1.msra.mxu0 0.0
        %2684 = vmatprep.subr.mxu0 0.0
        %2685 = vmatpush1.msra.mxu0 0.0
        %2686 = vmatprep.subr.mxu0 0.0
        %2687 = vmatpush1.msra.mxu0 0.0
        %2688 = vmatprep.subr.mxu0 0.0
        %2689 = vmatpush1.msra.mxu0 0.0
        %2690 = vmatprep.subr.mxu0 0.0
        %2691 = vmatpush1.msra.mxu0 0.0
        %2692 = vmatprep.subr.mxu0 0.0
        %2693 = vmatpush1.msra.mxu0 0.0
        %2694 = vmatprep.subr.mxu0 0.0
        %2695 = vmatpush1.msra.mxu0 0.0
        %2696 = vmatprep.subr.mxu0 0.0
        %2697 = vmatpush1.msra.mxu0 0.0
        %2698 = vmatprep.subr.mxu0 0.0
        %2699 = vmatpush1.msra.mxu0 0.0
        %2700 = vmatprep.subr.mxu0 0.0
        %2701 = vmatpush1.msra.mxu0 0.0
        %2702 = vmatprep.subr.mxu0 0.0
        %2703 = vmatpush1.msra.mxu0 0.0
        %2704 = vmatprep.subr.mxu0 0.0
        %2705 = vmatpush1.msra.mxu0 0.0
        %2706 = vmatprep.subr.mxu0 0.0
        %2707 = vmatpush1.msra.mxu0 0.0
        %2708 = vmatprep.subr.mxu0 0.0
        %2709 = vmatpush1.msra.mxu0 0.0
        %2710 = vmatprep.subr.mxu0 0.0
        %2711 = vmatpush1.msra.mxu0 0.0
        %2712 = vmatprep.subr.mxu0 0.0
        %2713 = vmatpush1.msra.mxu0 0.0
        %2714 = vmatprep.subr.mxu0 0.0
        %2715 = vmatpush1.msra.mxu0 0.0
        %2716 = vmatprep.subr.mxu0 0.0
        %2717 = vmatpush1.msra.mxu0 0.0
        %2718 = vmatprep.subr.mxu0 0.0
        %2719 = vmatpush1.msra.mxu0 0.0
        %2720 = vmatprep.subr.mxu0 0.0
        %2721 = vmatpush1.msra.mxu0 0.0
        %2722 = vmatprep.subr.mxu0 0.0
        %2723 = vmatpush1.msra.mxu0 0.0
        %2724 = vmatprep.mubr.f32.mxu0 0.0
        %2725 = vmatmul.mubr.f32.gmra.mrb[0].mxu0 %v2469
        %v2726 = vpop.f32.mrb[0].mxu0
        %v2727 = vadd.f32 0.0, %v2726
        %v2728 = vpop.f32.mrb[0].mxu0
        %2729 = vmatprep.mubr.f32.mxu0 0.0
        %2730 = vmatmul.mubr.f32.gmra.mrb[0].mxu0 %v2472
        %v2731 = vpop.f32.mrb[0].mxu0
        %v2732 = vadd.f32 0.0, %v2731
        %v2733 = vpop.f32.mrb[0].mxu0
        %2734 = vmatprep.mubr.f32.mxu0 0.0
        %2735 = vmatmul.mubr.f32.gmra.mrb[0].mxu0 %v2475
        %v2736 = vpop.f32.mrb[0].mxu0
        %v2737 = vadd.f32 0.0, %v2736
        %v2738 = vpop.f32.mrb[0].mxu0
        %2739 = vmatprep.mubr.f32.mxu0 0.0
        %2740 = vmatmul.mubr.f32.gmra.mrb[0].mxu0 %v2478
        %v2741 = vpop.f32.mrb[0].mxu0
        %v2742 = vadd.f32 0.0, %v2741
        %v2743 = vpop.f32.mrb[0].mxu0
        %2744 = vmatprep.mubr.f32.mxu0 0.0
        %2745 = vmatmul.mubr.f32.gmra.mrb[0].mxu0 %v2481
        %v2746 = vpop.f32.mrb[0].mxu0
        %v2747 = vadd.f32 0.0, %v2746
        %v2748 = vpop.f32.mrb[0].mxu0
        %2749 = vmatprep.mubr.f32.mxu0 0.0
        %2750 = vmatmul.mubr.f32.gmra.mrb[0].mxu0 %v2484
        %v2751 = vpop.f32.mrb[0].mxu0
        %v2752 = vadd.f32 0.0, %v2751
        %v2753 = vpop.f32.mrb[0].mxu0
        %2754 = vmatprep.mubr.f32.mxu0 0.0
        %2755 = vmatmul.mubr.f32.gmra.mrb[0].mxu0 %v2487
        %v2756 = vpop.f32.mrb[0].mxu0
        %v2757 = vadd.f32 0.0, %v2756
        %v2758 = vpop.f32.mrb[0].mxu0
        %2759 = vmatprep.mubr.f32.mxu0 0.0
        %2760 = vmatmul.mubr.f32.gmra.mrb[0].mxu0 %v2490
        %v2761 = vpop.f32.mrb[0].mxu0
        %v2762 = vadd.f32 0.0, %v2761
        %v2763 = vpop.f32.mrb[0].mxu0
        %2764 = vmatprep.mubr.f32.mxu0 0.0
        %2765 = vmatmul.mubr.f32.gmra.mrb[0].mxu0 %v2493
        %v2766 = vpop.f32.mrb[0].mxu0
        %v2767 = vadd.f32 0.0, %v2766
        %v2768 = vpop.f32.mrb[0].mxu0
        %2769 = vmatprep.mubr.f32.mxu0 0.0
        %2770 = vmatmul.mubr.f32.gmra.mrb[0].mxu0 %v2496
        %v2771 = vpop.f32.mrb[0].mxu0
        %v2772 = vadd.f32 0.0, %v2771
        %v2773 = vpop.f32.mrb[0].mxu0
        %2774 = vmatprep.mubr.f32.mxu0 0.0
        %2775 = vmatmul.mubr.f32.gmra.mrb[0].mxu0 %v2499
        %v2776 = vpop.f32.mrb[0].mxu0
        %v2777 = vadd.f32 0.0, %v2776
        %v2778 = vpop.f32.mrb[0].mxu0
        %2779 = vmatprep.mubr.f32.mxu0 0.0
        %2780 = vmatmul.mubr.f32.gmra.mrb[0].mxu0 %v2502
        %v2781 = vpop.f32.mrb[0].mxu0
        %v2782 = vadd.f32 0.0, %v2781
        %v2783 = vpop.f32.mrb[0].mxu0
        %2784 = vmatprep.mubr.f32.mxu0 0.0
        %2785 = vmatmul.mubr.f32.gmra.mrb[0].mxu0 %v2505
        %v2786 = vpop.f32.mrb[0].mxu0
        %v2787 = vadd.f32 0.0, %v2786
        %v2788 = vpop.f32.mrb[0].mxu0
        %2789 = vmatprep.mubr.f32.mxu0 0.0
        %2790 = vmatmul.mubr.f32.gmra.mrb[0].mxu0 %v2508
        %v2791 = vpop.f32.mrb[0].mxu0
        %v2792 = vadd.f32 0.0, %v2791
        %v2793 = vpop.f32.mrb[0].mxu0
        %2794 = vmatprep.mubr.f32.mxu0 0.0
        %2795 = vmatmul.mubr.f32.gmra.mrb[0].mxu0 %v2511
        %v2796 = vpop.f32.mrb[0].mxu0
        %v2797 = vadd.f32 0.0, %v2796
        %v2798 = vpop.f32.mrb[0].mxu0
        %2799 = vmatprep.mubr.f32.mxu0 0.0
        %2800 = vmatmul.mubr.f32.gmra.mrb[0].mxu0 %v2514
        %v2801 = vpop.f32.mrb[0].mxu0
        %v2802 = vadd.f32 0.0, %v2801
        %v2803 = vpop.f32.mrb[0].mxu0
        %2804 = vmatprep.mubr.f32.mxu0 0.0
        %2805 = vmatmul.mubr.f32.gmra.mrb[0].mxu0 %v2517
        %v2806 = vpop.f32.mrb[0].mxu0
        %v2807 = vadd.f32 0.0, %v2806
        %v2808 = vpop.f32.mrb[0].mxu0
        %2809 = vmatprep.mubr.f32.mxu0 0.0
        %2810 = vmatmul.mubr.f32.gmra.mrb[0].mxu0 %v2520
        %v2811 = vpop.f32.mrb[0].mxu0
        %v2812 = vadd.f32 0.0, %v2811
        %v2813 = vpop.f32.mrb[0].mxu0
        %2814 = vmatprep.mubr.f32.mxu0 0.0
        %2815 = vmatmul.mubr.f32.gmra.mrb[0].mxu0 %v2523
        %v2816 = vpop.f32.mrb[0].mxu0
        %v2817 = vadd.f32 0.0, %v2816
        %v2818 = vpop.f32.mrb[0].mxu0
        %2819 = vmatprep.mubr.f32.mxu0 0.0
        %2820 = vmatmul.mubr.f32.gmra.mrb[0].mxu0 %v2526
        %v2821 = vpop.f32.mrb[0].mxu0
        %v2822 = vadd.f32 0.0, %v2821
        %v2823 = vpop.f32.mrb[0].mxu0
        %2824 = vmatprep.mubr.f32.mxu0 0.0
        %2825 = vmatmul.mubr.f32.gmra.mrb[0].mxu0 %v2529
        %v2826 = vpop.f32.mrb[0].mxu0
        %v2827 = vadd.f32 0.0, %v2826
        %v2828 = vpop.f32.mrb[0].mxu0
        %2829 = vmatprep.mubr.f32.mxu0 0.0
        %2830 = vmatmul.mubr.f32.gmra.mrb[0].mxu0 %v2532
        %v2831 = vpop.f32.mrb[0].mxu0
        %v2832 = vadd.f32 0.0, %v2831
        %v2833 = vpop.f32.mrb[0].mxu0
        %2834 = vmatprep.mubr.f32.mxu0 0.0
        %2835 = vmatmul.mubr.f32.gmra.mrb[0].mxu0 %v2535
        %v2836 = vpop.f32.mrb[0].mxu0
        %v2837 = vadd.f32 0.0, %v2836
        %v2838 = vpop.f32.mrb[0].mxu0
        %2839 = vmatprep.mubr.f32.mxu0 0.0
        %2840 = vmatmul.mubr.f32.gmra.mrb[0].mxu0 %v2538
        %v2841 = vpop.f32.mrb[0].mxu0
        %v2842 = vadd.f32 0.0, %v2841
        %v2843 = vpop.f32.mrb[0].mxu0
        %2844 = vmatprep.mubr.f32.mxu0 0.0
        %2845 = vmatmul.mubr.f32.gmra.mrb[0].mxu0 %v2541
        %v2846 = vpop.f32.mrb[0].mxu0
        %v2847 = vadd.f32 0.0, %v2846
        %v2848 = vpop.f32.mrb[0].mxu0
        %2849 = vmatprep.mubr.f32.mxu0 0.0
        %2850 = vmatmul.mubr.f32.gmra.mrb[0].mxu0 %v2544
        %v2851 = vpop.f32.mrb[0].mxu0
        %v2852 = vadd.f32 0.0, %v2851
        %v2853 = vpop.f32.mrb[0].mxu0
        %2854 = vmatprep.mubr.f32.mxu0 0.0
        %2855 = vmatmul.mubr.f32.gmra.mrb[0].mxu0 %v2547
        %v2856 = vpop.f32.mrb[0].mxu0
        %v2857 = vadd.f32 0.0, %v2856
        %v2858 = vpop.f32.mrb[0].mxu0
        %2859 = vmatprep.mubr.f32.mxu0 0.0
        %2860 = vmatmul.mubr.f32.gmra.mrb[0].mxu0 %v2550
        %v2861 = vpop.f32.mrb[0].mxu0
        %v2862 = vadd.f32 0.0, %v2861
        %v2863 = vpop.f32.mrb[0].mxu0
        %2864 = vmatprep.mubr.f32.mxu0 0.0
        %2865 = vmatmul.mubr.f32.gmra.mrb[0].mxu0 %v2553
        %v2866 = vpop.f32.mrb[0].mxu0
        %v2867 = vadd.f32 0.0, %v2866
        %v2868 = vpop.f32.mrb[0].mxu0
        %2869 = vmatprep.mubr.f32.mxu0 0.0
        %2870 = vmatmul.mubr.f32.gmra.mrb[0].mxu0 %v2556
        %v2871 = vpop.f32.mrb[0].mxu0
        %v2872 = vadd.f32 0.0, %v2871
        %v2873 = vpop.f32.mrb[0].mxu0
        %2874 = vmatprep.mubr.f32.mxu0 0.0
        %2875 = vmatmul.mubr.f32.gmra.mrb[0].mxu0 %v2559
        %v2876 = vpop.f32.mrb[0].mxu0
        %v2877 = vadd.f32 0.0, %v2876
        %v2878 = vpop.f32.mrb[0].mxu0
        %2879 = vmatprep.mubr.f32.mxu0 0.0
        %2880 = vmatmul.mubr.f32.gmra.mrb[0].mxu0 %v2562
        %v2881 = vpop.f32.mrb[0].mxu0
        %v2882 = vadd.f32 0.0, %v2881
        %v2883 = vpop.f32.mrb[0].mxu0
        %2884 = vmatprep.mubr.f32.mxu0 0.0
        %2885 = vmatmul.mubr.f32.gmra.mrb[0].mxu0 %v2565
        %v2886 = vpop.f32.mrb[0].mxu0
        %v2887 = vadd.f32 0.0, %v2886
        %v2888 = vpop.f32.mrb[0].mxu0
        %2889 = vmatprep.mubr.f32.mxu0 0.0
        %2890 = vmatmul.mubr.f32.gmra.mrb[0].mxu0 %v2568
        %v2891 = vpop.f32.mrb[0].mxu0
        %v2892 = vadd.f32 0.0, %v2891
        %v2893 = vpop.f32.mrb[0].mxu0
        %2894 = vmatprep.mubr.f32.mxu0 0.0
        %2895 = vmatmul.mubr.f32.gmra.mrb[0].mxu0 %v2571
        %v2896 = vpop.f32.mrb[0].mxu0
        %v2897 = vadd.f32 0.0, %v2896
        %v2898 = vpop.f32.mrb[0].mxu0
        %2899 = vmatprep.mubr.f32.mxu0 0.0
        %2900 = vmatmul.mubr.f32.gmra.mrb[0].mxu0 %v2574
        %v2901 = vpop.f32.mrb[0].mxu0
        %v2902 = vadd.f32 0.0, %v2901
        %v2903 = vpop.f32.mrb[0].mxu0
        %2904 = vmatprep.mubr.f32.mxu0 0.0
        %2905 = vmatmul.mubr.f32.gmra.mrb[0].mxu0 %v2577
        %v2906 = vpop.f32.mrb[0].mxu0
        %v2907 = vadd.f32 0.0, %v2906
        %v2908 = vpop.f32.mrb[0].mxu0
        %2909 = vmatprep.mubr.f32.mxu0 0.0
        %2910 = vmatmul.mubr.f32.gmra.mrb[0].mxu0 %v2580
        %v2911 = vpop.f32.mrb[0].mxu0
        %v2912 = vadd.f32 0.0, %v2911
        %v2913 = vpop.f32.mrb[0].mxu0
        %2914 = vmatprep.mubr.f32.mxu0 0.0
        %2915 = vmatmul.mubr.f32.gmra.mrb[0].mxu0 %v2583
        %v2916 = vpop.f32.mrb[0].mxu0
        %v2917 = vadd.f32 0.0, %v2916
        %v2918 = vpop.f32.mrb[0].mxu0
        %2919 = vmatprep.mubr.f32.mxu0 0.0
        %2920 = vmatmul.mubr.f32.gmra.mrb[0].mxu0 %v2586
        %v2921 = vpop.f32.mrb[0].mxu0
        %v2922 = vadd.f32 0.0, %v2921
        %v2923 = vpop.f32.mrb[0].mxu0
        %2924 = vmatprep.mubr.f32.mxu0 0.0
        %2925 = vmatmul.mubr.f32.gmra.mrb[0].mxu0 %v2589
        %v2926 = vpop.f32.mrb[0].mxu0
        %v2927 = vadd.f32 0.0, %v2926
        %v2928 = vpop.f32.mrb[0].mxu0
        %2929 = vmatprep.mubr.f32.mxu0 0.0
        %2930 = vmatmul.mubr.f32.gmra.mrb[0].mxu0 %v2592
        %v2931 = vpop.f32.mrb[0].mxu0
        %v2932 = vadd.f32 0.0, %v2931
        %v2933 = vpop.f32.mrb[0].mxu0
        %2934 = vmatprep.mubr.f32.mxu0 0.0
        %2935 = vmatmul.mubr.f32.gmra.mrb[0].mxu0 %v2595
        %v2936 = vpop.f32.mrb[0].mxu0
        %v2937 = vadd.f32 0.0, %v2936
        %v2938 = vpop.f32.mrb[0].mxu0
        %2939 = vmatprep.mubr.f32.mxu0 0.0
        %2940 = vmatmul.mubr.f32.gmra.mrb[0].mxu0 %v2598
        %v2941 = vpop.f32.mrb[0].mxu0
        %v2942 = vadd.f32 0.0, %v2941
        %v2943 = vpop.f32.mrb[0].mxu0
        %2944 = vmatprep.mubr.f32.mxu0 0.0
        %2945 = vmatmul.mubr.f32.gmra.mrb[0].mxu0 %v2601
        %v2946 = vpop.f32.mrb[0].mxu0
        %v2947 = vadd.f32 0.0, %v2946
        %v2948 = vpop.f32.mrb[0].mxu0
        %2949 = vmatprep.mubr.f32.mxu0 0.0
        %2950 = vmatmul.mubr.f32.gmra.mrb[0].mxu0 %v2604
        %v2951 = vpop.f32.mrb[0].mxu0
        %v2952 = vadd.f32 0.0, %v2951
        %v2953 = vpop.f32.mrb[0].mxu0
        %2954 = vmatprep.mubr.f32.mxu0 0.0
        %2955 = vmatmul.mubr.f32.gmra.mrb[0].mxu0 %v2607
        %v2956 = vpop.f32.mrb[0].mxu0
        %v2957 = vadd.f32 0.0, %v2956
        %v2958 = vpop.f32.mrb[0].mxu0
        %2959 = vmatprep.mubr.f32.mxu0 0.0
        %2960 = vmatmul.mubr.f32.gmra.mrb[0].mxu0 %v2610
        %v2961 = vpop.f32.mrb[0].mxu0
        %v2962 = vadd.f32 0.0, %v2961
        %v2963 = vpop.f32.mrb[0].mxu0
        %2964 = vmatprep.mubr.f32.mxu0 0.0
        %2965 = vmatmul.mubr.f32.gmra.mrb[0].mxu0 %v2613
        %v2966 = vpop.f32.mrb[0].mxu0
        %v2967 = vadd.f32 0.0, %v2966
        %v2968 = vpop.f32.mrb[0].mxu0
        %2969 = vmatprep.mubr.f32.mxu0 0.0
        %2970 = vmatmul.mubr.f32.gmra.mrb[0].mxu0 %v2616
        %v2971 = vpop.f32.mrb[0].mxu0
        %v2972 = vadd.f32 0.0, %v2971
        %v2973 = vpop.f32.mrb[0].mxu0
        %2974 = vmatprep.mubr.f32.mxu0 0.0
        %2975 = vmatmul.mubr.f32.gmra.mrb[0].mxu0 %v2619
        %v2976 = vpop.f32.mrb[0].mxu0
        %v2977 = vadd.f32 0.0, %v2976
        %v2978 = vpop.f32.mrb[0].mxu0
        %2979 = vmatprep.mubr.f32.mxu0 0.0
        %2980 = vmatmul.mubr.f32.gmra.mrb[0].mxu0 %v2622
        %v2981 = vpop.f32.mrb[0].mxu0
        %v2982 = vadd.f32 0.0, %v2981
        %v2983 = vpop.f32.mrb[0].mxu0
        %2984 = vmatprep.mubr.f32.mxu0 0.0
        %2985 = vmatmul.mubr.f32.gmra.mrb[0].mxu0 %v2625
        %v2986 = vpop.f32.mrb[0].mxu0
        %v2987 = vadd.f32 0.0, %v2986
        %v2988 = vpop.f32.mrb[0].mxu0
        %2989 = vmatprep.mubr.f32.mxu0 0.0
        %2990 = vmatmul.mubr.f32.gmra.mrb[0].mxu0 %v2628
        %v2991 = vpop.f32.mrb[0].mxu0
        %v2992 = vadd.f32 0.0, %v2991
        %v2993 = vpop.f32.mrb[0].mxu0
        %2994 = vmatprep.mubr.f32.mxu0 0.0
        %2995 = vmatmul.mubr.f32.gmra.mrb[0].mxu0 %v2631
        %v2996 = vpop.f32.mrb[0].mxu0
        %v2997 = vadd.f32 0.0, %v2996
        %v2998 = vpop.f32.mrb[0].mxu0
        %2999 = vmatprep.mubr.f32.mxu0 0.0
        %3000 = vmatmul.mubr.f32.gmra.mrb[0].mxu0 %v2634
        %v3001 = vpop.f32.mrb[0].mxu0
        %v3002 = vadd.f32 0.0, %v3001
        %v3003 = vpop.f32.mrb[0].mxu0
        %3004 = vmatprep.mubr.f32.mxu0 0.0
        %3005 = vmatmul.mubr.f32.gmra.mrb[0].mxu0 %v2637
        %v3006 = vpop.f32.mrb[0].mxu0
        %v3007 = vadd.f32 0.0, %v3006
        %v3008 = vpop.f32.mrb[0].mxu0
        %3009 = vmatprep.mubr.f32.mxu0 0.0
        %3010 = vmatmul.mubr.f32.gmra.mrb[0].mxu0 %v2640
        %v3011 = vpop.f32.mrb[0].mxu0
        %v3012 = vadd.f32 0.0, %v3011
        %v3013 = vpop.f32.mrb[0].mxu0
        %3014 = vmatprep.mubr.f32.mxu0 0.0
        %3015 = vmatmul.mubr.f32.gmra.mrb[0].mxu0 %v2643
        %v3016 = vpop.f32.mrb[0].mxu0
        %v3017 = vadd.f32 0.0, %v3016
        %v3018 = vpop.f32.mrb[0].mxu0
        %3019 = vmatprep.mubr.f32.mxu0 0.0
        %3020 = vmatmul.mubr.f32.gmra.mrb[0].mxu0 %v2646
        %v3021 = vpop.f32.mrb[0].mxu0
        %v3022 = vadd.f32 0.0, %v3021
        %v3023 = vpop.f32.mrb[0].mxu0
        %3024 = vmatprep.mubr.f32.mxu0 0.0
        %3025 = vmatmul.mubr.f32.gmra.mrb[0].mxu0 %v2649
        %v3026 = vpop.f32.mrb[0].mxu0
        %v3027 = vadd.f32 0.0, %v3026
        %v3028 = vpop.f32.mrb[0].mxu0
        %3029 = vmatprep.mubr.f32.mxu0 0.0
        %3030 = vmatmul.mubr.f32.gmra.mrb[0].mxu0 %v2652
        %v3031 = vpop.f32.mrb[0].mxu0
        %v3032 = vadd.f32 0.0, %v3031
        %v3033 = vpop.f32.mrb[0].mxu0
        %3034 = vmatprep.mubr.f32.mxu0 0.0
        %3035 = vmatmul.mubr.f32.gmra.mrb[0].mxu0 %v2655
        %v3036 = vpop.f32.mrb[0].mxu0
        %v3037 = vadd.f32 0.0, %v3036
        %v3038 = vpop.f32.mrb[0].mxu0
        %3039 = vmatprep.mubr.f32.mxu0 0.0
        %3040 = vmatmul.mubr.f32.gmra.mrb[0].mxu0 %v2658
        %v3041 = vpop.f32.mrb[0].mxu0
        %v3042 = vadd.f32 0.0, %v3041
        %v3043 = vpop.f32.mrb[0].mxu0
        %3044 = vdwg.mxu0
        %v3045 = vmul.f32 %v2727, %v2401
        %v3046 = vmul.f32 %v2732, %v2402
        %v3047 = vmul.f32 %v2737, %v2401
        %v3048 = vmul.f32 %v2742, %v2402
        %v3049 = vmul.f32 %v2747, %v2401
        %v3050 = vmul.f32 %v2752, %v2402
        %v3051 = vmul.f32 %v2757, %v2401
        %v3052 = vmul.f32 %v2762, %v2402
        %v3053 = vmul.f32 %v2767, %v2401
        %v3054 = vmul.f32 %v2772, %v2402
        %v3055 = vmul.f32 %v2777, %v2401
        %v3056 = vmul.f32 %v2782, %v2402
        %v3057 = vmul.f32 %v2787, %v2401
        %v3058 = vmul.f32 %v2792, %v2402
        %v3059 = vmul.f32 %v2797, %v2401
        %v3060 = vmul.f32 %v2802, %v2402
        %v3061 = vmul.f32 %v2807, %v2401
        %v3062 = vmul.f32 %v2812, %v2402
        %v3063 = vmul.f32 %v2817, %v2401
        %v3064 = vmul.f32 %v2822, %v2402
        %v3065 = vmul.f32 %v2827, %v2401
        %v3066 = vmul.f32 %v2832, %v2402
        %v3067 = vmul.f32 %v2837, %v2401
        %v3068 = vmul.f32 %v2842, %v2402
        %v3069 = vmul.f32 %v2847, %v2401
        %v3070 = vmul.f32 %v2852, %v2402
        %v3071 = vmul.f32 %v2857, %v2401
        %v3072 = vmul.f32 %v2862, %v2402
        %v3073 = vmul.f32 %v2867, %v2401
        %v3074 = vmul.f32 %v2872, %v2402
        %v3075 = vmul.f32 %v2877, %v2401
        %v3076 = vmul.f32 %v2882, %v2402
        %v3077 = vmul.f32 %v2887, %v2401
        %v3078 = vmul.f32 %v2892, %v2402
        %v3079 = vmul.f32 %v2897, %v2401
        %v3080 = vmul.f32 %v2902, %v2402
        %v3081 = vmul.f32 %v2907, %v2401
        %v3082 = vmul.f32 %v2912, %v2402
        %v3083 = vmul.f32 %v2917, %v2401
        %v3084 = vmul.f32 %v2922, %v2402
        %v3085 = vmul.f32 %v2927, %v2401
        %v3086 = vmul.f32 %v2932, %v2402
        %v3087 = vmul.f32 %v2937, %v2401
        %v3088 = vmul.f32 %v2942, %v2402
        %v3089 = vmul.f32 %v2947, %v2401
        %v3090 = vmul.f32 %v2952, %v2402
        %v3091 = vmul.f32 %v2957, %v2401
        %v3092 = vmul.f32 %v2962, %v2402
        %v3093 = vmul.f32 %v2967, %v2401
        %v3094 = vmul.f32 %v2972, %v2402
        %v3095 = vmul.f32 %v2977, %v2401
        %v3096 = vmul.f32 %v2982, %v2402
        %v3097 = vmul.f32 %v2987, %v2401
        %v3098 = vmul.f32 %v2992, %v2402
        %v3099 = vmul.f32 %v2997, %v2401
        %v3100 = vmul.f32 %v3002, %v2402
        %v3101 = vmul.f32 %v3007, %v2401
        %v3102 = vmul.f32 %v3012, %v2402
        %v3103 = vmul.f32 %v3017, %v2401
        %v3104 = vmul.f32 %v3022, %v2402
        %v3105 = vmul.f32 %v3027, %v2401
        %v3106 = vmul.f32 %v3032, %v2402
        %v3107 = vmul.f32 %v3037, %v2401
        %v3108 = vmul.f32 %v3042, %v2402
        %v3109 = vadd.f32 %v3045, %v3046
        %v3110 = vrot.slane %v3109, 4
        %v3111 = vadd.f32 %v3109, %v3110
        %v3112 = vrot.slane %v3111, 2
        %v3113 = vadd.f32 %v3111, %v3112
        %v3114 = vrot.slane %v3113, 1
        %v3115 = vadd.f32 %v3113, %v3114
        %v3116 = vadd.f32 %v3047, %v3048
        %v3117 = vrot.slane %v3116, 4
        %v3118 = vadd.f32 %v3116, %v3117
        %v3119 = vrot.slane %v3118, 2
        %v3120 = vadd.f32 %v3118, %v3119
        %v3121 = vrot.slane %v3120, 1
        %v3122 = vadd.f32 %v3120, %v3121
        %v3123 = vadd.f32 %v3049, %v3050
        %v3124 = vrot.slane %v3123, 4
        %v3125 = vadd.f32 %v3123, %v3124
        %v3126 = vrot.slane %v3125, 2
        %v3127 = vadd.f32 %v3125, %v3126
        %v3128 = vrot.slane %v3127, 1
        %v3129 = vadd.f32 %v3127, %v3128
        %v3130 = vadd.f32 %v3051, %v3052
        %v3131 = vrot.slane %v3130, 4
        %v3132 = vadd.f32 %v3130, %v3131
        %v3133 = vrot.slane %v3132, 2
        %v3134 = vadd.f32 %v3132, %v3133
        %v3135 = vrot.slane %v3134, 1
        %v3136 = vadd.f32 %v3134, %v3135
        %v3137 = vadd.f32 %v3053, %v3054
        %v3138 = vrot.slane %v3137, 4
        %v3139 = vadd.f32 %v3137, %v3138
        %v3140 = vrot.slane %v3139, 2
        %v3141 = vadd.f32 %v3139, %v3140
        %v3142 = vrot.slane %v3141, 1
        %v3143 = vadd.f32 %v3141, %v3142
        %v3144 = vadd.f32 %v3055, %v3056
        %v3145 = vrot.slane %v3144, 4
        %v3146 = vadd.f32 %v3144, %v3145
        %v3147 = vrot.slane %v3146, 2
        %v3148 = vadd.f32 %v3146, %v3147
        %v3149 = vrot.slane %v3148, 1
        %v3150 = vadd.f32 %v3148, %v3149
        %v3151 = vadd.f32 %v3057, %v3058
        %v3152 = vrot.slane %v3151, 4
        %v3153 = vadd.f32 %v3151, %v3152
        %v3154 = vrot.slane %v3153, 2
        %v3155 = vadd.f32 %v3153, %v3154
        %v3156 = vrot.slane %v3155, 1
        %v3157 = vadd.f32 %v3155, %v3156
        %v3158 = vadd.f32 %v3059, %v3060
        %v3159 = vrot.slane %v3158, 4
        %v3160 = vadd.f32 %v3158, %v3159
        %v3161 = vrot.slane %v3160, 2
        %v3162 = vadd.f32 %v3160, %v3161
        %v3163 = vrot.slane %v3162, 1
        %v3164 = vadd.f32 %v3162, %v3163
        %v3165 = vadd.f32 %v3061, %v3062
        %v3166 = vrot.slane %v3165, 4
        %v3167 = vadd.f32 %v3165, %v3166
        %v3168 = vrot.slane %v3167, 2
        %v3169 = vadd.f32 %v3167, %v3168
        %v3170 = vrot.slane %v3169, 1
        %v3171 = vadd.f32 %v3169, %v3170
        %v3172 = vadd.f32 %v3063, %v3064
        %v3173 = vrot.slane %v3172, 4
        %v3174 = vadd.f32 %v3172, %v3173
        %v3175 = vrot.slane %v3174, 2
        %v3176 = vadd.f32 %v3174, %v3175
        %v3177 = vrot.slane %v3176, 1
        %v3178 = vadd.f32 %v3176, %v3177
        %v3179 = vadd.f32 %v3065, %v3066
        %v3180 = vrot.slane %v3179, 4
        %v3181 = vadd.f32 %v3179, %v3180
        %v3182 = vrot.slane %v3181, 2
        %v3183 = vadd.f32 %v3181, %v3182
        %v3184 = vrot.slane %v3183, 1
        %v3185 = vadd.f32 %v3183, %v3184
        %v3186 = vadd.f32 %v3067, %v3068
        %v3187 = vrot.slane %v3186, 4
        %v3188 = vadd.f32 %v3186, %v3187
        %v3189 = vrot.slane %v3188, 2
        %v3190 = vadd.f32 %v3188, %v3189
        %v3191 = vrot.slane %v3190, 1
        %v3192 = vadd.f32 %v3190, %v3191
        %v3193 = vadd.f32 %v3069, %v3070
        %v3194 = vrot.slane %v3193, 4
        %v3195 = vadd.f32 %v3193, %v3194
        %v3196 = vrot.slane %v3195, 2
        %v3197 = vadd.f32 %v3195, %v3196
        %v3198 = vrot.slane %v3197, 1
        %v3199 = vadd.f32 %v3197, %v3198
        %v3200 = vadd.f32 %v3071, %v3072
        %v3201 = vrot.slane %v3200, 4
        %v3202 = vadd.f32 %v3200, %v3201
        %v3203 = vrot.slane %v3202, 2
        %v3204 = vadd.f32 %v3202, %v3203
        %v3205 = vrot.slane %v3204, 1
        %v3206 = vadd.f32 %v3204, %v3205
        %v3207 = vadd.f32 %v3073, %v3074
        %v3208 = vrot.slane %v3207, 4
        %v3209 = vadd.f32 %v3207, %v3208
        %v3210 = vrot.slane %v3209, 2
        %v3211 = vadd.f32 %v3209, %v3210
        %v3212 = vrot.slane %v3211, 1
        %v3213 = vadd.f32 %v3211, %v3212
        %v3214 = vadd.f32 %v3075, %v3076
        %v3215 = vrot.slane %v3214, 4
        %v3216 = vadd.f32 %v3214, %v3215
        %v3217 = vrot.slane %v3216, 2
        %v3218 = vadd.f32 %v3216, %v3217
        %v3219 = vrot.slane %v3218, 1
        %v3220 = vadd.f32 %v3218, %v3219
        %v3221 = vadd.f32 %v3077, %v3078
        %v3222 = vrot.slane %v3221, 4
        %v3223 = vadd.f32 %v3221, %v3222
        %v3224 = vrot.slane %v3223, 2
        %v3225 = vadd.f32 %v3223, %v3224
        %v3226 = vrot.slane %v3225, 1
        %v3227 = vadd.f32 %v3225, %v3226
        %v3228 = vadd.f32 %v3079, %v3080
        %v3229 = vrot.slane %v3228, 4
        %v3230 = vadd.f32 %v3228, %v3229
        %v3231 = vrot.slane %v3230, 2
        %v3232 = vadd.f32 %v3230, %v3231
        %v3233 = vrot.slane %v3232, 1
        %v3234 = vadd.f32 %v3232, %v3233
        %v3235 = vadd.f32 %v3081, %v3082
        %v3236 = vrot.slane %v3235, 4
        %v3237 = vadd.f32 %v3235, %v3236
        %v3238 = vrot.slane %v3237, 2
        %v3239 = vadd.f32 %v3237, %v3238
        %v3240 = vrot.slane %v3239, 1
        %v3241 = vadd.f32 %v3239, %v3240
        %v3242 = vadd.f32 %v3083, %v3084
        %v3243 = vrot.slane %v3242, 4
        %v3244 = vadd.f32 %v3242, %v3243
        %v3245 = vrot.slane %v3244, 2
        %v3246 = vadd.f32 %v3244, %v3245
        %v3247 = vrot.slane %v3246, 1
        %v3248 = vadd.f32 %v3246, %v3247
        %v3249 = vadd.f32 %v3085, %v3086
        %v3250 = vrot.slane %v3249, 4
        %v3251 = vadd.f32 %v3249, %v3250
        %v3252 = vrot.slane %v3251, 2
        %v3253 = vadd.f32 %v3251, %v3252
        %v3254 = vrot.slane %v3253, 1
        %v3255 = vadd.f32 %v3253, %v3254
        %v3256 = vadd.f32 %v3087, %v3088
        %v3257 = vrot.slane %v3256, 4
        %v3258 = vadd.f32 %v3256, %v3257
        %v3259 = vrot.slane %v3258, 2
        %v3260 = vadd.f32 %v3258, %v3259
        %v3261 = vrot.slane %v3260, 1
        %v3262 = vadd.f32 %v3260, %v3261
        %v3263 = vadd.f32 %v3089, %v3090
        %v3264 = vrot.slane %v3263, 4
        %v3265 = vadd.f32 %v3263, %v3264
        %v3266 = vrot.slane %v3265, 2
        %v3267 = vadd.f32 %v3265, %v3266
        %v3268 = vrot.slane %v3267, 1
        %v3269 = vadd.f32 %v3267, %v3268
        %v3270 = vadd.f32 %v3091, %v3092
        %v3271 = vrot.slane %v3270, 4
        %v3272 = vadd.f32 %v3270, %v3271
        %v3273 = vrot.slane %v3272, 2
        %v3274 = vadd.f32 %v3272, %v3273
        %v3275 = vrot.slane %v3274, 1
        %v3276 = vadd.f32 %v3274, %v3275
        %v3277 = vadd.f32 %v3093, %v3094
        %v3278 = vrot.slane %v3277, 4
        %v3279 = vadd.f32 %v3277, %v3278
        %v3280 = vrot.slane %v3279, 2
        %v3281 = vadd.f32 %v3279, %v3280
        %v3282 = vrot.slane %v3281, 1
        %v3283 = vadd.f32 %v3281, %v3282
        %v3284 = vadd.f32 %v3095, %v3096
        %v3285 = vrot.slane %v3284, 4
        %v3286 = vadd.f32 %v3284, %v3285
        %v3287 = vrot.slane %v3286, 2
        %v3288 = vadd.f32 %v3286, %v3287
        %v3289 = vrot.slane %v3288, 1
        %v3290 = vadd.f32 %v3288, %v3289
        %v3291 = vadd.f32 %v3097, %v3098
        %v3292 = vrot.slane %v3291, 4
        %v3293 = vadd.f32 %v3291, %v3292
        %v3294 = vrot.slane %v3293, 2
        %v3295 = vadd.f32 %v3293, %v3294
        %v3296 = vrot.slane %v3295, 1
        %v3297 = vadd.f32 %v3295, %v3296
        %v3298 = vadd.f32 %v3099, %v3100
        %v3299 = vrot.slane %v3298, 4
        %v3300 = vadd.f32 %v3298, %v3299
        %v3301 = vrot.slane %v3300, 2
        %v3302 = vadd.f32 %v3300, %v3301
        %v3303 = vrot.slane %v3302, 1
        %v3304 = vadd.f32 %v3302, %v3303
        %v3305 = vadd.f32 %v3101, %v3102
        %v3306 = vrot.slane %v3305, 4
        %v3307 = vadd.f32 %v3305, %v3306
        %v3308 = vrot.slane %v3307, 2
        %v3309 = vadd.f32 %v3307, %v3308
        %v3310 = vrot.slane %v3309, 1
        %v3311 = vadd.f32 %v3309, %v3310
        %v3312 = vadd.f32 %v3103, %v3104
        %v3313 = vrot.slane %v3312, 4
        %v3314 = vadd.f32 %v3312, %v3313
        %v3315 = vrot.slane %v3314, 2
        %v3316 = vadd.f32 %v3314, %v3315
        %v3317 = vrot.slane %v3316, 1
        %v3318 = vadd.f32 %v3316, %v3317
        %v3319 = vadd.f32 %v3105, %v3106
        %v3320 = vrot.slane %v3319, 4
        %v3321 = vadd.f32 %v3319, %v3320
        %v3322 = vrot.slane %v3321, 2
        %v3323 = vadd.f32 %v3321, %v3322
        %v3324 = vrot.slane %v3323, 1
        %v3325 = vadd.f32 %v3323, %v3324
        %v3326 = vadd.f32 %v3107, %v3108
        %v3327 = vrot.slane %v3326, 4
        %v3328 = vadd.f32 %v3326, %v3327
        %v3329 = vrot.slane %v3328, 2
        %v3330 = vadd.f32 %v3328, %v3329
        %v3331 = vrot.slane %v3330, 1
        %v3332 = vadd.f32 %v3330, %v3331
        %v3365 = vsel %vm1222, %v3122, %v3115
        %v3366 = vsel %vm1224, %v3129, %v3365
        %v3367 = vsel %vm1226, %v3136, %v3366
        %v3368 = vsel %vm1228, %v3143, %v3367
        %v3369 = vsel %vm1230, %v3150, %v3368
        %v3370 = vsel %vm1232, %v3157, %v3369
        %v3371 = vsel %vm1234, %v3164, %v3370
        %v3372 = vsel %vm1222, %v3178, %v3171
        %v3373 = vsel %vm1224, %v3185, %v3372
        %v3374 = vsel %vm1226, %v3192, %v3373
        %v3375 = vsel %vm1228, %v3199, %v3374
        %v3376 = vsel %vm1230, %v3206, %v3375
        %v3377 = vsel %vm1232, %v3213, %v3376
        %v3378 = vsel %vm1234, %v3220, %v3377
        %v3379 = vsel %vm1222, %v3234, %v3227
        %v3380 = vsel %vm1224, %v3241, %v3379
        %v3381 = vsel %vm1226, %v3248, %v3380
        %v3382 = vsel %vm1228, %v3255, %v3381
        %v3383 = vsel %vm1230, %v3262, %v3382
        %v3384 = vsel %vm1232, %v3269, %v3383
        %v3385 = vsel %vm1234, %v3276, %v3384
        %v3386 = vsel %vm1222, %v3290, %v3283
        %v3387 = vsel %vm1224, %v3297, %v3386
        %v3388 = vsel %vm1226, %v3304, %v3387
        %v3389 = vsel %vm1228, %v3311, %v3388
        %v3390 = vsel %vm1230, %v3318, %v3389
        %v3391 = vsel %vm1232, %v3325, %v3390
        %v3392 = vsel %vm1234, %v3332, %v3391
        %3397 = vst [vmem:[%s173 + $0x40] sm:$0xff] %v3371
        %3398 = vst [vmem:[%s173 + $0x48] sm:$0xff] %v3378
        %3399 = vst [vmem:[%s173 + $0x50] sm:$0xff] %v3385
        %3400 = vst [vmem:[%s173 + $0x58] sm:$0xff] %v3392
        %s3401 = sand.u32 %s92, 1
        %s3402 = scalar_lea.sflag [#allocation3], %s3401
        %s3403 = sand.u32 %s92, 1
        %s3404 = smul.addr %s3403, 96
        %s3405 = scalar_lea.vmem [#allocation2], %s3404
        // Predicated region
        $region29: #{tpu_custom_call.1} parent=27 // pred_check
          %p3406 = pneg %p102
        $region30: #{tpu_custom_call.1} parent=27 // pred_check_branch
          %3408 = sbr.rel (%p3406) target = $region32
        $region31: #{tpu_custom_call.1} parent=27 // pred_region
          %s3410 = ssub.s32 1536, 1536
          %3411 = vsyncadd %s3402, %s3410
          %s3412 = smul.addr %s20, 12
          %s3413 = sadd.s32 %s21, %s3412
          %s3414 = smul.addr %s3413, 128
          %s3415 = scalar_lea.hbm %s2, %s3414
          %s3416 = sshll.u32 %s3405, 4
          %s3417 = int_to_ptr.vmem [resolvable:$true] %s3416
          %3422 = dma.vmem_to_hbm [thread:$0]  %s3417, 1536, %s3415, %s3402, 128, 128, 8
        $region32: #{tpu_custom_call.1} parent=27 // pred_fallthru
          _
      $region28: #{tpu_custom_call.1} parent=5 // pred_fallthru
        _
      %p3423 = scmp.le.s32.totalorder 2, %s11
      // Predicated region
      $region33: #{tpu_custom_call.1} parent=5 // pred_check
        %p3424 = pneg %p3423
      $region34: #{tpu_custom_call.1} parent=5 // pred_check_branch
        %3426 = sbr.rel (%p3424) target = $region36
      $region35: #{tpu_custom_call.1} parent=5 // pred_region
        %s3427 = ssub.s32 %s11, 2
        // Predicated region
        $region37: #{tpu_custom_call.1} parent=35 // pred_check
          %p3428 = pneg %p108
        $region38: #{tpu_custom_call.1} parent=35 // pred_check_branch
          %3430 = sbr.rel (%p3428) target = $region40
        $region39: #{tpu_custom_call.1} parent=35 // pred_region
          %s3431 = sand.u32 %s93, 1
          %s3432 = scalar_lea.sflag [#allocation3], %s3431
          %s3433 = sand.u32 %s93, 1
          %s3434 = smul.addr %s3433, 96
          %s3435 = scalar_lea.vmem [#allocation2], %s3434
          %3436 = dma.done %s3432, 1536
        $region40: #{tpu_custom_call.1} parent=35 // pred_fallthru
          _
      $region36: #{tpu_custom_call.1} parent=5 // pred_fallthru
        _
    $region6: #{tpu_custom_call.1} parent=1 // loop_footer
      %s15 = sadd.s32 1, %s11
    $region7: #{tpu_custom_call.1} parent=1 // loop_footer_branch
      %10 = sbr.rel target = $region3
    $region8: #{tpu_custom_call.1} parent=1 // loop_exit
      _
    %3437 = vsyncpa [#allocation3], 1
    %s3438 = scalar_lea.sflag [#allocation3], 1
    %3439 = vsyncpa %s3438, 1

</llo_original>
